<compile_context>
chip_gen: v7x
topology: tpu7x:2x2x1
jax: 0.10.0
libtpu: 0.0.40
codegen_flags: <defaults>
</compile_context>

<pallas_src>
import math
from functools import partial

import jax
import jax.numpy as jnp
from jax.experimental import pallas as pl
from jax.experimental.pallas import tpu as pltpu

N_NODES = 8          # number of graph nodes
DIM = 32             # input_dim == hidden_dim (required by the residual hidden + last)
NUM_LAYERS = 2       # GraphConvolution stack depth
BN_EPS = 1e-5        # BatchNorm1d default eps (norm2 / norm4, eval mode)
LN_EPS = 1e-3        # LayerNorm(16, eps=0.001) -> norm3
BATCH = 32           # graphs per call
GB = 32              # graphs per grid step -> M = GB*N = 256 MXU rows, grid = BATCH//GB

# Fused-weight slab (W_slab[NUM_LAYERS]) column layout:
#   col 0       : atten1 weight              (D,)
#   col 1       : atten2 weight              (D,)
#   cols 2..17  : final_layer weight * bn2s  (D,16)
#   col 18      : atten_layer weight * bn4s  (D,)
_COL_F0, _COL_F1, _COL_AT = 2, 18, 18


def _risk_gcn_kernel(x_ref, w_ref, p_ref, out_ref, *, gb, n):
    f32 = jnp.float32
    m = gb * n                                             # packed row count (256)
    d = x_ref.shape[1] - m

    feat = x_ref[:, :d]                                    # (M, D)
    bd0 = x_ref[:, d:]                                     # (M, M) unweighted block-diag adj

    misc = p_ref[NUM_LAYERS + 1:NUM_LAYERS + 2, :]         # (1, D)
    a1b = misc[:, 0:1]
    a2b = misc[:, 1:2]
    pb = misc[:, 2:3]

    # Fused atten1 / atten2 linears: one packed (M, D) @ (D, D) matmul.
    w_fused = w_ref[NUM_LAYERS]                            # (D, D)
    atts = jnp.dot(feat, w_fused, preferred_element_type=f32)      # (M, D)
    node_atten = atts[:, 0:1] + a1b                        # (M, 1)
    edge_atten = atts[:, 1:2] + a2b                        # (M, 1)

    # node_atten1 = softmax over the node axis within each graph (exact reciprocal).
    na = node_atten.reshape(gb, n)                         # (GB, N)
    na_max = jnp.max(na, axis=1, keepdims=True)
    e = jnp.exp(na - na_max)
    natt = e / jnp.sum(e, axis=1, keepdims=True)           # (GB, N)

    # Feature re-weighting and block-diagonal adjacency row-scaling.
    hidden = node_atten * feat                             # (M, D)
    bd = edge_atten * bd0                                  # (M, M)

    # GCN stack with residual connections: each per-graph adjacency multiply is now a
    # single block-diagonal (M,M)@(M,D) matmul instead of GB tiny batched einsums.
    # TODO(synk): Dropout(0.3) treated as identity (eval mode); stochastic masking not implemented.
    for l in range(NUM_LAYERS):
        last = hidden
        support = jnp.dot(hidden, w_ref[l], preferred_element_type=f32)     # (M, D)
        lb = p_ref[l:l + 1, :]                                              # (1, D)
        out = jnp.dot(bd, support, preferred_element_type=f32) + lb         # (M, D)
        hidden = jnp.tanh(out) + last

    # Fused final_layer + atten_layer head (BN eval-scale folded into weights/bias).
    heads = jnp.dot(hidden, w_fused, preferred_element_type=f32)            # (M, D)
    hb = p_ref[NUM_LAYERS:NUM_LAYERS + 1, :]                                # (1, D)
    head_out = jnp.dot(bd, heads, preferred_element_type=f32) + hb          # (M, D)
    agg = head_out[:, _COL_F0:_COL_F1]                     # (M, 16)  norm2 folded
    att = jnp.tanh(head_out[:, _COL_AT:_COL_AT + 1])       # (M, 1)   norm4 folded + tanh

    # pool_feature = att^T @ agg per graph -> (GB, 16); LayerNorm(16, eps=1e-3); tanh.
    pf = jnp.sum((att * agg).reshape(gb, n, 16), axis=1)   # (GB, 16)
    mu = jnp.mean(pf, axis=-1, keepdims=True)
    var = jnp.mean((pf - mu) ** 2, axis=-1, keepdims=True)
    pf = jnp.tanh((pf - mu) * jax.lax.rsqrt(var + LN_EPS))

    # pool_matrix = tanh(att^T @ adj_w @ att) per graph -> (GB, 1).
    adj_att = jnp.dot(bd, att, preferred_element_type=f32)                  # (M, 1)
    pm = jnp.tanh(jnp.sum((att * adj_att).reshape(gb, n), axis=1, keepdims=True))

    # pred = pool_matrix * (pool_feature @ W_pred) + b_pred (VPU dot, 1-column).
    pw_row = p_ref[NUM_LAYERS + 2:NUM_LAYERS + 3, 0:16]    # (1, 16)
    support_pred = jnp.sum(pf * pw_row, axis=-1, keepdims=True)             # (GB, 1)
    pred = pm * support_pred + pb                                           # (GB, 1)

    # Single output slab: col 0 = pred, cols 1..N = softmax attention.
    out_ref[:, 0:1] = pred
    out_ref[:, 1:1 + n] = natt


def pack_params(params):
    """Pack the 14 parameter tensors into one weight slab and one small-param slab."""
    d = DIM
    scale = 1.0 / math.sqrt(1.0 + BN_EPS)       # BatchNorm1d eval-mode scale, folded in

    w_fused = jnp.zeros((d, d), jnp.float32)
    w_fused = w_fused.at[:, 0].set(params["a1w"][:, 0])
    w_fused = w_fused.at[:, 1].set(params["a2w"][:, 0])
    w_fused = w_fused.at[:, _COL_F0:_COL_F1].set(params["fw"] * scale)
    w_fused = w_fused.at[:, _COL_AT].set(params["aw"][:, 0] * scale)
    w_slab = jnp.concatenate([params["lw"], w_fused[None]], axis=0)   # (NUM_LAYERS+1, D, D)

    p_slab = jnp.zeros((NUM_LAYERS + 3, d), jnp.float32)
    p_slab = p_slab.at[:NUM_LAYERS, :].set(params["lb"][:, 0, :])
    p_slab = p_slab.at[NUM_LAYERS, _COL_F0:_COL_F1].set(params["fb"][0] * scale)
    p_slab = p_slab.at[NUM_LAYERS, _COL_AT].set(params["ab"][0, 0] * scale)
    p_slab = p_slab.at[NUM_LAYERS + 1, 0].set(params["a1b"][0, 0])
    p_slab = p_slab.at[NUM_LAYERS + 1, 1].set(params["a2b"][0, 0])
    p_slab = p_slab.at[NUM_LAYERS + 1, 2].set(params["pb"][0, 0])
    p_slab = p_slab.at[NUM_LAYERS + 2, :16].set(params["pw"][:, 0])
    return w_slab, p_slab


def pack_inputs(adj, feat, graphs_per_step):
    """Fuse feat + per-step block-diagonal adjacency into one lane-dense slab (B*N, D+M)."""
    b, n, _ = adj.shape
    d = feat.shape[-1]
    nsteps = b // graphs_per_step
    m = graphs_per_step * n
    eye = jnp.eye(graphs_per_step, dtype=adj.dtype)
    adj_steps = adj.reshape(nsteps, graphs_per_step, n, n)
    # bd[s, g*n+i, h*n+j] = adj[s, g, i, j] * (g == h)
    bd = jnp.einsum('gh,sgij->sgihj', eye, adj_steps).reshape(b * n, m)
    feat_flat = feat.reshape(b * n, d)
    return jnp.concatenate([feat_flat, bd], axis=1)        # (B*N, D + M)


def risk_gcn_forward(adj, feat, params, *, graphs_per_step=GB):
    """adj: (B, N, N), feat: (B, N, D) -> (pred (B,1), node_atten1 (B,N))."""
    b, n, _ = adj.shape
    d = feat.shape[-1]
    assert b % graphs_per_step == 0
    m = graphs_per_step * n
    w_slab, p_slab = pack_params(params)
    x_slab = pack_inputs(adj, feat, graphs_per_step)

    out = pl.pallas_call(
        partial(_risk_gcn_kernel, gb=graphs_per_step, n=n),
        out_shape=jax.ShapeDtypeStruct((b, 1 + n), jnp.float32),
        grid=(b // graphs_per_step,),
        in_specs=[
            pl.BlockSpec((m, d + m), lambda i: (i, 0)),                   # fused feat+adj slab
            pl.BlockSpec((NUM_LAYERS + 1, d, d), lambda i: (0, 0, 0)),    # VMEM-resident weights
            pl.BlockSpec((NUM_LAYERS + 3, d), lambda i: (0, 0)),          # VMEM-resident biases
        ],
        out_specs=pl.BlockSpec((graphs_per_step, 1 + n), lambda i: (i, 0)),
        compiler_params=pltpu.CompilerParams(dimension_semantics=("arbitrary",)),
    )(x_slab, w_slab, p_slab)

    return out[:, 0:1], out[:, 1:]


def init_params(key):
    """Deterministic synthetic parameter init (shapes from risk_GCN.__init__)."""
    ks = jax.random.split(key, 8)
    d = DIM

    def uni(k, shape, bound):
        return jax.random.uniform(k, shape, jnp.float32, -bound, bound)

    lin_b = 1.0 / (d ** 0.5)          # Linear default-style bound
    gcn_b = (6.0 / d) ** 0.5          # kaiming-uniform-style bound
    return dict(
        a1w=uni(ks[0], (d, 1), lin_b),            # atten1: Linear(D, 1) (weight pre-transposed)
        a1b=uni(ks[1], (1, 1), lin_b),
        a2w=uni(ks[2], (d, 1), lin_b),            # atten2: Linear(D, 1)
        a2b=uni(ks[3], (1, 1), lin_b),
        lw=uni(ks[4], (NUM_LAYERS, d, d), gcn_b),  # GraphConvolution(D, D) x num_layers
        lb=jnp.zeros((NUM_LAYERS, 1, d), jnp.float32),
        fw=uni(ks[5], (d, 16), gcn_b),             # final_layer: GraphConvolution(D, 16)
        fb=jnp.zeros((1, 16), jnp.float32),
        aw=uni(ks[6], (d, 1), gcn_b),              # atten_layer: GraphConvolution(D, 1)
        ab=jnp.zeros((1, 1), jnp.float32),
        pw=uni(ks[7], (16, 1), (6.0 / 16.0) ** 0.5),  # pred: GraphConvolution(16, 1)
        pb=jnp.zeros((1, 1), jnp.float32),
    )


def risk_gcn_reference(adj, feat, p):
    """Pure-JAX single-graph reference for correctness checking."""
    dot = partial(jnp.dot, precision=jax.lax.Precision.HIGHEST)
    node_atten = dot(feat, p["a1w"]) + p["a1b"]
    edge_atten = dot(feat, p["a2w"]) + p["a2b"]
    natt = jax.nn.softmax(node_atten, axis=0)
    feat = node_atten * feat
    adj = edge_atten * adj
    hidden = feat
    for l in range(NUM_LAYERS):
        last = hidden
        hidden = jnp.tanh(dot(adj, dot(hidden, p["lw"][l])) + p["lb"][l]) + last
    agg = (dot(adj, dot(hidden, p["fw"])) + p["fb"]) / jnp.sqrt(1.0 + BN_EPS)
    att = jnp.tanh((dot(adj, dot(hidden, p["aw"])) + p["ab"]) / jnp.sqrt(1.0 + BN_EPS))
    pf = dot(att.T, agg)
    mu = jnp.mean(pf, axis=-1, keepdims=True)
    var = jnp.mean((pf - mu) ** 2, axis=-1, keepdims=True)
    pf = jnp.tanh((pf - mu) / jnp.sqrt(var + LN_EPS))
    pm = jnp.tanh(dot(dot(att.T, adj), att))
    pred = pm * dot(pf, p["pw"]) + p["pb"]
    return pred, natt


if __name__ == "__main__":
    key = jax.random.PRNGKey(0)
    k_adj, k_feat, k_par = jax.random.split(key, 3)
    adj = jax.random.normal(k_adj, (BATCH, N_NODES, N_NODES), jnp.float32)
    feat = jax.random.normal(k_feat, (BATCH, N_NODES, DIM), jnp.float32)
    params = init_params(k_par)

    pred, natt = risk_gcn_forward(adj, feat, params)
    jax.block_until_ready((pred, natt))

    pred_ref, natt_ref = jax.vmap(lambda a, f: risk_gcn_reference(a, f, params))(adj, feat)
    pred_ref = pred_ref.reshape(BATCH, 1)
    natt_ref = natt_ref.reshape(BATCH, N_NODES)

    assert pred.shape == (BATCH, 1) and natt.shape == (BATCH, N_NODES)
    assert jnp.allclose(pred, pred_ref, rtol=1e-3, atol=1e-3), (pred, pred_ref)
    assert jnp.allclose(natt, natt_ref, rtol=1e-3, atol=1e-3)
    print("KERNEL_OK")
</pallas_src>

<mosaic_0001>
module attributes {stable_mosaic.version = 11 : i64} {
  func.func @_risk_gcn_kernel(%arg0: i32, %arg1: memref<256x288xf32, #tpu.memory_space<vmem>>, %arg2: memref<3x32x32xf32, #tpu.memory_space<vmem>>, %arg3: memref<5x32xf32, #tpu.memory_space<vmem>>, %arg4: memref<32x9xf32, #tpu.memory_space<vmem>>) attributes {dimension_semantics = [#tpu.dimension_semantics<arbitrary>], iteration_bounds = array<i64: 1>, scalar_prefetch = 0 : i64, scratch_operands = 0 : i64, tpu.core_type = #tpu.core_type<tc>, window_params = [{transform_indices = @transform_0, window_bounds = array<i64: 256, 288>}, {pipeline_mode = #tpu.pipeline_mode<synchronous>, transform_indices = @transform_1, window_bounds = array<i64: 3, 32, 32>}, {pipeline_mode = #tpu.pipeline_mode<synchronous>, transform_indices = @transform_2, window_bounds = array<i64: 5, 32>}, {transform_indices = @transform_3, window_bounds = array<i64: 32, 9>}]} {
    %c0 = arith.constant 0 : index
    %c0_0 = arith.constant 0 : index
    %0 = vector.load %arg1[%c0, %c0_0] : memref<256x288xf32, #tpu.memory_space<vmem>>, vector<256x32xf32>
    %c0_1 = arith.constant 0 : index
    %c32 = arith.constant 32 : index
    %1 = vector.load %arg1[%c0_1, %c32] : memref<256x288xf32, #tpu.memory_space<vmem>>, vector<256x256xf32>
    %c3 = arith.constant 3 : index
    %c0_2 = arith.constant 0 : index
    %2 = vector.load %arg3[%c3, %c0_2] : memref<5x32xf32, #tpu.memory_space<vmem>>, vector<1x32xf32>
    %3 = vector.extract_strided_slice %2 {offsets = [0, 0], sizes = [1, 1], strides = [1, 1]} : vector<1x32xf32> to vector<1x1xf32>
    %4 = vector.extract_strided_slice %2 {offsets = [0, 1], sizes = [1, 1], strides = [1, 1]} : vector<1x32xf32> to vector<1x1xf32>
    %5 = vector.extract_strided_slice %2 {offsets = [0, 2], sizes = [1, 1], strides = [1, 1]} : vector<1x32xf32> to vector<1x1xf32>
    %c2 = arith.constant 2 : index
    %c0_3 = arith.constant 0 : index
    %c0_4 = arith.constant 0 : index
    %6 = vector.load %arg2[%c2, %c0_3, %c0_4] : memref<3x32x32xf32, #tpu.memory_space<vmem>>, vector<1x32x32xf32>
    %7 = vector.shape_cast %6 : vector<1x32x32xf32> to vector<32x32xf32>
    %cst = arith.constant dense<0.000000e+00> : vector<256x32xf32>
    %8 = tpu.matmul %0, %7, %cst {dimension_numbers = #tpu.dot_dimension_numbers<[1], [0], [0], [1], [0, 0, 1, 1], [], []>} : vector<256x32xf32>, vector<32x32xf32>, vector<256x32xf32> -> vector<256x32xf32>
    %9 = vector.extract_strided_slice %8 {offsets = [0, 0], sizes = [256, 1], strides = [1, 1]} : vector<256x32xf32> to vector<256x1xf32>
    %10 = vector.broadcast %3 : vector<1x1xf32> to vector<256x1xf32>
    %11 = arith.addf %9, %10 : vector<256x1xf32>
    %12 = vector.extract_strided_slice %8 {offsets = [0, 1], sizes = [256, 1], strides = [1, 1]} : vector<256x32xf32> to vector<256x1xf32>
    %13 = vector.broadcast %4 : vector<1x1xf32> to vector<256x1xf32>
    %14 = arith.addf %12, %13 : vector<256x1xf32>
    %15 = vector.shape_cast %11 : vector<256x1xf32> to vector<32x8xf32>
    %cst_5 = arith.constant dense<0xFF800000> : vector<32xf32>
    %16 = vector.multi_reduction <maximumf>, %15, %cst_5 [1] : vector<32x8xf32> to vector<32xf32>
    %17 = vector.shape_cast %16 : vector<32xf32> to vector<32x1xf32>
    %18 = vector.broadcast %17 : vector<32x1xf32> to vector<32x8xf32>
    %19 = arith.subf %15, %18 : vector<32x8xf32>
    %20 = math.exp %19 : vector<32x8xf32>
    %cst_6 = arith.constant dense<0.000000e+00> : vector<32xf32>
    %21 = vector.multi_reduction <add>, %20, %cst_6 [1] : vector<32x8xf32> to vector<32xf32>
    %22 = vector.shape_cast %21 : vector<32xf32> to vector<32x1xf32>
    %23 = vector.broadcast %22 : vector<32x1xf32> to vector<32x8xf32>
    %24 = arith.divf %20, %23 : vector<32x8xf32>
    %25 = vector.broadcast %11 : vector<256x1xf32> to vector<256x32xf32>
    %26 = arith.mulf %25, %0 : vector<256x32xf32>
    %27 = vector.broadcast %14 : vector<256x1xf32> to vector<256x256xf32>
    %28 = arith.mulf %27, %1 : vector<256x256xf32>
    %c0_7 = arith.constant 0 : index
    %c0_8 = arith.constant 0 : index
    %c0_9 = arith.constant 0 : index
    %29 = vector.load %arg2[%c0_7, %c0_8, %c0_9] : memref<3x32x32xf32, #tpu.memory_space<vmem>>, vector<1x32x32xf32>
    %30 = vector.shape_cast %29 : vector<1x32x32xf32> to vector<32x32xf32>
    %cst_10 = arith.constant dense<0.000000e+00> : vector<256x32xf32>
    %31 = tpu.matmul %26, %30, %cst_10 {dimension_numbers = #tpu.dot_dimension_numbers<[1], [0], [0], [1], [0, 0, 1, 1], [], []>} : vector<256x32xf32>, vector<32x32xf32>, vector<256x32xf32> -> vector<256x32xf32>
    %c0_11 = arith.constant 0 : index
    %c0_12 = arith.constant 0 : index
    %32 = vector.load %arg3[%c0_11, %c0_12] : memref<5x32xf32, #tpu.memory_space<vmem>>, vector<1x32xf32>
    %cst_13 = arith.constant dense<0.000000e+00> : vector<256x32xf32>
    %33 = tpu.matmul %28, %31, %cst_13 {dimension_numbers = #tpu.dot_dimension_numbers<[1], [0], [0], [1], [0, 0, 1, 1], [], []>} : vector<256x256xf32>, vector<256x32xf32>, vector<256x32xf32> -> vector<256x32xf32>
    %34 = vector.broadcast %32 : vector<1x32xf32> to vector<256x32xf32>
    %35 = arith.addf %33, %34 : vector<256x32xf32>
    %36 = math.tanh %35 : vector<256x32xf32>
    %37 = arith.addf %36, %26 : vector<256x32xf32>
    %c1 = arith.constant 1 : index
    %c0_14 = arith.constant 0 : index
    %c0_15 = arith.constant 0 : index
    %38 = vector.load %arg2[%c1, %c0_14, %c0_15] : memref<3x32x32xf32, #tpu.memory_space<vmem>>, vector<1x32x32xf32>
    %39 = vector.shape_cast %38 : vector<1x32x32xf32> to vector<32x32xf32>
    %cst_16 = arith.constant dense<0.000000e+00> : vector<256x32xf32>
    %40 = tpu.matmul %37, %39, %cst_16 {dimension_numbers = #tpu.dot_dimension_numbers<[1], [0], [0], [1], [0, 0, 1, 1], [], []>} : vector<256x32xf32>, vector<32x32xf32>, vector<256x32xf32> -> vector<256x32xf32>
    %c1_17 = arith.constant 1 : index
    %c0_18 = arith.constant 0 : index
    %41 = vector.load %arg3[%c1_17, %c0_18] : memref<5x32xf32, #tpu.memory_space<vmem>>, vector<1x32xf32>
    %cst_19 = arith.constant dense<0.000000e+00> : vector<256x32xf32>
    %42 = tpu.matmul %28, %40, %cst_19 {dimension_numbers = #tpu.dot_dimension_numbers<[1], [0], [0], [1], [0, 0, 1, 1], [], []>} : vector<256x256xf32>, vector<256x32xf32>, vector<256x32xf32> -> vector<256x32xf32>
    %43 = vector.broadcast %41 : vector<1x32xf32> to vector<256x32xf32>
    %44 = arith.addf %42, %43 : vector<256x32xf32>
    %45 = math.tanh %44 : vector<256x32xf32>
    %46 = arith.addf %45, %37 : vector<256x32xf32>
    %cst_20 = arith.constant dense<0.000000e+00> : vector<256x32xf32>
    %47 = tpu.matmul %46, %7, %cst_20 {dimension_numbers = #tpu.dot_dimension_numbers<[1], [0], [0], [1], [0, 0, 1, 1], [], []>} : vector<256x32xf32>, vector<32x32xf32>, vector<256x32xf32> -> vector<256x32xf32>
    %c2_21 = arith.constant 2 : index
    %c0_22 = arith.constant 0 : index
    %48 = vector.load %arg3[%c2_21, %c0_22] : memref<5x32xf32, #tpu.memory_space<vmem>>, vector<1x32xf32>
    %cst_23 = arith.constant dense<0.000000e+00> : vector<256x32xf32>
    %49 = tpu.matmul %28, %47, %cst_23 {dimension_numbers = #tpu.dot_dimension_numbers<[1], [0], [0], [1], [0, 0, 1, 1], [], []>} : vector<256x256xf32>, vector<256x32xf32>, vector<256x32xf32> -> vector<256x32xf32>
    %50 = vector.broadcast %48 : vector<1x32xf32> to vector<256x32xf32>
    %51 = arith.addf %49, %50 : vector<256x32xf32>
    %52 = vector.extract_strided_slice %51 {offsets = [0, 2], sizes = [256, 16], strides = [1, 1]} : vector<256x32xf32> to vector<256x16xf32>
    %53 = vector.extract_strided_slice %51 {offsets = [0, 18], sizes = [256, 1], strides = [1, 1]} : vector<256x32xf32> to vector<256x1xf32>
    %54 = math.tanh %53 : vector<256x1xf32>
    %55 = vector.broadcast %54 : vector<256x1xf32> to vector<256x16xf32>
    %56 = arith.mulf %55, %52 : vector<256x16xf32>
    %57 = vector.shape_cast %56 : vector<256x16xf32> to vector<32x8x16xf32>
    %cst_24 = arith.constant dense<0.000000e+00> : vector<32x16xf32>
    %58 = vector.multi_reduction <add>, %57, %cst_24 [1] : vector<32x8x16xf32> to vector<32x16xf32>
    %cst_25 = arith.constant dense<0.000000e+00> : vector<32xf32>
    %59 = vector.multi_reduction <add>, %58, %cst_25 [1] : vector<32x16xf32> to vector<32xf32>
    %60 = vector.shape_cast %59 : vector<32xf32> to vector<32x1xf32>
    %cst_26 = arith.constant 1.600000e+01 : f32
    %61 = vector.broadcast %cst_26 : f32 to vector<32x1xf32>
    %62 = arith.divf %60, %61 : vector<32x1xf32>
    %63 = vector.broadcast %62 : vector<32x1xf32> to vector<32x16xf32>
    %64 = arith.subf %58, %63 : vector<32x16xf32>
    %65 = arith.mulf %64, %64 : vector<32x16xf32>
    %cst_27 = arith.constant dense<0.000000e+00> : vector<32xf32>
    %66 = vector.multi_reduction <add>, %65, %cst_27 [1] : vector<32x16xf32> to vector<32xf32>
    %67 = vector.shape_cast %66 : vector<32xf32> to vector<32x1xf32>
    %cst_28 = arith.constant 1.600000e+01 : f32
    %68 = vector.broadcast %cst_28 : f32 to vector<32x1xf32>
    %69 = arith.divf %67, %68 : vector<32x1xf32>
    %70 = vector.broadcast %62 : vector<32x1xf32> to vector<32x16xf32>
    %71 = arith.subf %58, %70 : vector<32x16xf32>
    %cst_29 = arith.constant 1.000000e-03 : f32
    %72 = vector.broadcast %cst_29 : f32 to vector<32x1xf32>
    %73 = arith.addf %69, %72 : vector<32x1xf32>
    %74 = math.rsqrt %73 : vector<32x1xf32>
    %75 = vector.broadcast %74 : vector<32x1xf32> to vector<32x16xf32>
    %76 = arith.mulf %71, %75 : vector<32x16xf32>
    %77 = math.tanh %76 : vector<32x16xf32>
    %cst_30 = arith.constant dense<0.000000e+00> : vector<256x1xf32>
    %78 = tpu.matmul %28, %54, %cst_30 {dimension_numbers = #tpu.dot_dimension_numbers<[1], [0], [0], [1], [0, 0, 1, 1], [], []>} : vector<256x256xf32>, vector<256x1xf32>, vector<256x1xf32> -> vector<256x1xf32>
    %79 = arith.mulf %54, %78 : vector<256x1xf32>
    %80 = vector.shape_cast %79 : vector<256x1xf32> to vector<32x8xf32>
    %cst_31 = arith.constant dense<0.000000e+00> : vector<32xf32>
    %81 = vector.multi_reduction <add>, %80, %cst_31 [1] : vector<32x8xf32> to vector<32xf32>
    %82 = vector.shape_cast %81 : vector<32xf32> to vector<32x1xf32>
    %83 = math.tanh %82 : vector<32x1xf32>
    %c4 = arith.constant 4 : index
    %c0_32 = arith.constant 0 : index
    %84 = vector.load %arg3[%c4, %c0_32] : memref<5x32xf32, #tpu.memory_space<vmem>>, vector<1x16xf32>
    %85 = vector.broadcast %84 : vector<1x16xf32> to vector<32x16xf32>
    %86 = arith.mulf %77, %85 : vector<32x16xf32>
    %cst_33 = arith.constant dense<0.000000e+00> : vector<32xf32>
    %87 = vector.multi_reduction <add>, %86, %cst_33 [1] : vector<32x16xf32> to vector<32xf32>
    %88 = vector.shape_cast %87 : vector<32xf32> to vector<32x1xf32>
    %89 = arith.mulf %83, %88 : vector<32x1xf32>
    %90 = vector.broadcast %5 : vector<1x1xf32> to vector<32x1xf32>
    %91 = arith.addf %89, %90 : vector<32x1xf32>
    %c0_34 = arith.constant 0 : index
    %c0_35 = arith.constant 0 : index
    %92 = vector.load %arg4[%c0_34, %c0_35] : memref<32x9xf32, #tpu.memory_space<vmem>>, vector<32x1xf32>
    tpu.vector_store %arg4[%c0_34, %c0_35], %91 {strides = array<i32>} : memref<32x9xf32, #tpu.memory_space<vmem>>, vector<32x1xf32>,
    %c0_36 = arith.constant 0 : index
    %c1_37 = arith.constant 1 : index
    %93 = vector.load %arg4[%c0_36, %c1_37] : memref<32x9xf32, #tpu.memory_space<vmem>>, vector<32x8xf32>
    tpu.vector_store %arg4[%c0_36, %c1_37], %24 {strides = array<i32>} : memref<32x9xf32, #tpu.memory_space<vmem>>, vector<32x8xf32>,
    return
  }
  func.func @transform_0(%arg0: i32) -> (i32, i32) {
    %c0_i32 = arith.constant 0 : i32
    %c0_i32_0 = arith.constant 0 : i32
    return %arg0, %c0_i32 : i32, i32
  }
  func.func @transform_1(%arg0: i32) -> (i32, i32, i32) {
    %c0_i32 = arith.constant 0 : i32
    %c0_i32_0 = arith.constant 0 : i32
    %c0_i32_1 = arith.constant 0 : i32
    %c0_i32_2 = arith.constant 0 : i32
    return %c0_i32, %c0_i32_0, %c0_i32_1 : i32, i32, i32
  }
  func.func @transform_2(%arg0: i32) -> (i32, i32) {
    %c0_i32 = arith.constant 0 : i32
    %c0_i32_0 = arith.constant 0 : i32
    %c0_i32_1 = arith.constant 0 : i32
    return %c0_i32, %c0_i32_0 : i32, i32
  }
  func.func @transform_3(%arg0: i32) -> (i32, i32) {
    %c0_i32 = arith.constant 0 : i32
    %c0_i32_0 = arith.constant 0 : i32
    return %arg0, %c0_i32 : i32, i32
  }
}

</mosaic_0001>

<llo_original>
// kernel: tpu_custom_call.1
$region0: #{tpu_custom_call.1}
  #allocation0 [shape = 'u32[]', space=smem, size = 0x4, offset = 0x4, fixed_abs, tag = 'smem constant byte address 0x4 - core index']
  #allocation1 [shape = 'u32[144,128]{1,0:T(1,128)}', space=vmem, size = 0x12000, scoped, tag = 'internal scratch']
  %s0 = inlined_call_operand.vmem [shape: f32[256,288], index: 0, kind: input, shape index: {}]
  %s1 = inlined_call_operand.vmem [shape: f32[3,32,32], index: 1, kind: input, shape index: {}]
  %s2 = inlined_call_operand.vmem [shape: f32[5,32], index: 2, kind: input, shape index: {}]
  %s3 = inlined_call_operand.vmem [shape: f32[32,9], index: 3, kind: output, shape index: {}]
  %s4 = sld [smem:[#allocation0]]
  $region22: #{tpu_custom_call.1} parent=0
    _
  %s6 = ssub.s32 1, %s4
  %s7 = scalar_select 0, %s6, %s4
  // Predicated region
  $region2: #{tpu_custom_call.1} parent=0 // pred_check
    _
  $region3: #{tpu_custom_call.1} parent=0 // pred_check_branch
    %9 = sbr.rel (0) target = $region5
  $region4: #{tpu_custom_call.1} parent=0 // pred_region
    _
  $region5: #{tpu_custom_call.1} parent=0 // pred_fallthru
    _
  // Predicated region
  $region6: #{tpu_custom_call.1} parent=0 // pred_check
    _
  $region7: #{tpu_custom_call.1} parent=0 // pred_check_branch
    %11 = sbr.rel (0) target = $region9
  $region8: #{tpu_custom_call.1} parent=0 // pred_region
    _
  $region9: #{tpu_custom_call.1} parent=0 // pred_fallthru
    _
  // Predicated region
  $region10: #{tpu_custom_call.1} parent=0 // pred_check
    _
  $region11: #{tpu_custom_call.1} parent=0 // pred_check_branch
    %13 = sbr.rel (0) target = $region13
  $region12: #{tpu_custom_call.1} parent=0 // pred_region
    _
  $region13: #{tpu_custom_call.1} parent=0 // pred_fallthru
    _
  %v14 = vld [vmem:[%s0] sm:$0xff]
  %v15 = vld [vmem:[%s0 + $0x18] sm:$0xff]
  %v16 = vld [vmem:[%s0 + $0x30] sm:$0xff]
  %v17 = vld [vmem:[%s0 + $0x48] sm:$0xff]
  %v18 = vld [vmem:[%s0 + $0x60] sm:$0xff]
  %v19 = vld [vmem:[%s0 + $0x78] sm:$0xff]
  %v20 = vld [vmem:[%s0 + $0x90] sm:$0xff]
  %v21 = vld [vmem:[%s0 + $0xa8] sm:$0xff]
  %v22 = vld [vmem:[%s0 + $0xc0] sm:$0xff]
  %v23 = vld [vmem:[%s0 + $0xd8] sm:$0xff]
  %v24 = vld [vmem:[%s0 + $0xf0] sm:$0xff]
  %v25 = vld [vmem:[%s0 + $0x108] sm:$0xff]
  %v26 = vld [vmem:[%s0 + $0x120] sm:$0xff]
  %v27 = vld [vmem:[%s0 + $0x138] sm:$0xff]
  %v28 = vld [vmem:[%s0 + $0x150] sm:$0xff]
  %v29 = vld [vmem:[%s0 + $0x168] sm:$0xff]
  %v30 = vld [vmem:[%s0 + $0x180] sm:$0xff]
  %v31 = vld [vmem:[%s0 + $0x198] sm:$0xff]
  %v32 = vld [vmem:[%s0 + $0x1b0] sm:$0xff]
  %v33 = vld [vmem:[%s0 + $0x1c8] sm:$0xff]
  %v34 = vld [vmem:[%s0 + $0x1e0] sm:$0xff]
  %v35 = vld [vmem:[%s0 + $0x1f8] sm:$0xff]
  %v36 = vld [vmem:[%s0 + $0x210] sm:$0xff]
  %v37 = vld [vmem:[%s0 + $0x228] sm:$0xff]
  %v38 = vld [vmem:[%s0 + $0x240] sm:$0xff]
  %v39 = vld [vmem:[%s0 + $0x258] sm:$0xff]
  %v40 = vld [vmem:[%s0 + $0x270] sm:$0xff]
  %v41 = vld [vmem:[%s0 + $0x288] sm:$0xff]
  %v42 = vld [vmem:[%s0 + $0x2a0] sm:$0xff]
  %v43 = vld [vmem:[%s0 + $0x2b8] sm:$0xff]
  %v44 = vld [vmem:[%s0 + $0x2d0] sm:$0xff]
  %v45 = vld [vmem:[%s0 + $0x2e8] sm:$0xff]
  %v46 = vld [vmem:[%s0 + $0x8] sm:$0xff]
  %v47 = vld [vmem:[%s0 + $0x10] sm:$0xff]
  %v48 = vld [vmem:[%s0 + $0x20] sm:$0xff]
  %v49 = vld [vmem:[%s0 + $0x28] sm:$0xff]
  %v50 = vld [vmem:[%s0 + $0x38] sm:$0xff]
  %v51 = vld [vmem:[%s0 + $0x40] sm:$0xff]
  %v52 = vld [vmem:[%s0 + $0x50] sm:$0xff]
  %v53 = vld [vmem:[%s0 + $0x58] sm:$0xff]
  %v54 = vld [vmem:[%s0 + $0x68] sm:$0xff]
  %v55 = vld [vmem:[%s0 + $0x70] sm:$0xff]
  %v56 = vld [vmem:[%s0 + $0x80] sm:$0xff]
  %v57 = vld [vmem:[%s0 + $0x88] sm:$0xff]
  %v58 = vld [vmem:[%s0 + $0x98] sm:$0xff]
  %v59 = vld [vmem:[%s0 + $0xa0] sm:$0xff]
  %v60 = vld [vmem:[%s0 + $0xb0] sm:$0xff]
  %v61 = vld [vmem:[%s0 + $0xb8] sm:$0xff]
  %v62 = vld [vmem:[%s0 + $0xc8] sm:$0xff]
  %v63 = vld [vmem:[%s0 + $0xd0] sm:$0xff]
  %v64 = vld [vmem:[%s0 + $0xe0] sm:$0xff]
  %v65 = vld [vmem:[%s0 + $0xe8] sm:$0xff]
  %v66 = vld [vmem:[%s0 + $0xf8] sm:$0xff]
  %v67 = vld [vmem:[%s0 + $0x100] sm:$0xff]
  %v68 = vld [vmem:[%s0 + $0x110] sm:$0xff]
  %v69 = vld [vmem:[%s0 + $0x118] sm:$0xff]
  %v70 = vld [vmem:[%s0 + $0x128] sm:$0xff]
  %v71 = vld [vmem:[%s0 + $0x130] sm:$0xff]
  %v72 = vld [vmem:[%s0 + $0x140] sm:$0xff]
  %v73 = vld [vmem:[%s0 + $0x148] sm:$0xff]
  %v74 = vld [vmem:[%s0 + $0x158] sm:$0xff]
  %v75 = vld [vmem:[%s0 + $0x160] sm:$0xff]
  %v76 = vld [vmem:[%s0 + $0x170] sm:$0xff]
  %v77 = vld [vmem:[%s0 + $0x178] sm:$0xff]
  %v78 = vld [vmem:[%s0 + $0x188] sm:$0xff]
  %v79 = vld [vmem:[%s0 + $0x190] sm:$0xff]
  %v80 = vld [vmem:[%s0 + $0x1a0] sm:$0xff]
  %v81 = vld [vmem:[%s0 + $0x1a8] sm:$0xff]
  %v82 = vld [vmem:[%s0 + $0x1b8] sm:$0xff]
  %v83 = vld [vmem:[%s0 + $0x1c0] sm:$0xff]
  %v84 = vld [vmem:[%s0 + $0x1d0] sm:$0xff]
  %v85 = vld [vmem:[%s0 + $0x1d8] sm:$0xff]
  %v86 = vld [vmem:[%s0 + $0x1e8] sm:$0xff]
  %v87 = vld [vmem:[%s0 + $0x1f0] sm:$0xff]
  %v88 = vld [vmem:[%s0 + $0x200] sm:$0xff]
  %v89 = vld [vmem:[%s0 + $0x208] sm:$0xff]
  %v90 = vld [vmem:[%s0 + $0x218] sm:$0xff]
  %v91 = vld [vmem:[%s0 + $0x220] sm:$0xff]
  %v92 = vld [vmem:[%s0 + $0x230] sm:$0xff]
  %v93 = vld [vmem:[%s0 + $0x238] sm:$0xff]
  %v94 = vld [vmem:[%s0 + $0x248] sm:$0xff]
  %v95 = vld [vmem:[%s0 + $0x250] sm:$0xff]
  %v96 = vld [vmem:[%s0 + $0x260] sm:$0xff]
  %v97 = vld [vmem:[%s0 + $0x268] sm:$0xff]
  %v98 = vld [vmem:[%s0 + $0x278] sm:$0xff]
  %v99 = vld [vmem:[%s0 + $0x280] sm:$0xff]
  %v100 = vld [vmem:[%s0 + $0x290] sm:$0xff]
  %v101 = vld [vmem:[%s0 + $0x298] sm:$0xff]
  %v102 = vld [vmem:[%s0 + $0x2a8] sm:$0xff]
  %v103 = vld [vmem:[%s0 + $0x2b0] sm:$0xff]
  %v104 = vld [vmem:[%s0 + $0x2c0] sm:$0xff]
  %v105 = vld [vmem:[%s0 + $0x2c8] sm:$0xff]
  %v106 = vld [vmem:[%s0 + $0x2d8] sm:$0xff]
  %v107 = vld [vmem:[%s0 + $0x2e0] sm:$0xff]
  %v108 = vld [vmem:[%s0 + $0x2f0] sm:$0xff]
  %v109 = vld [vmem:[%s0 + $0x2f8] sm:$0xff]
  %v110 = vld [vmem:[%s2 + $0x3] sm:$0x1]
  %s111 = scalar_lea.vmem %s1, 64
  %v112 = vld [vmem:[%s111] sm:$0xff]
  %v113 = vld [vmem:[%s111 + $0x8] sm:$0xff]
  %v114 = vld [vmem:[%s111 + $0x10] sm:$0xff]
  %v115 = vld [vmem:[%s111 + $0x18] sm:$0xff]
  %vm116 = vcmask 261120
  %v118 = vsel %vm116, %v14, 0
  %v121 = vsel %vm116, %v15, 0
  %v124 = vsel %vm116, %v16, 0
  %v127 = vsel %vm116, %v17, 0
  %v130 = vsel %vm116, %v18, 0
  %v133 = vsel %vm116, %v19, 0
  %v136 = vsel %vm116, %v20, 0
  %v139 = vsel %vm116, %v21, 0
  %v142 = vsel %vm116, %v22, 0
  %v145 = vsel %vm116, %v23, 0
  %v148 = vsel %vm116, %v24, 0
  %v151 = vsel %vm116, %v25, 0
  %v154 = vsel %vm116, %v26, 0
  %v157 = vsel %vm116, %v27, 0
  %v160 = vsel %vm116, %v28, 0
  %v163 = vsel %vm116, %v29, 0
  %v166 = vsel %vm116, %v30, 0
  %v169 = vsel %vm116, %v31, 0
  %v172 = vsel %vm116, %v32, 0
  %v175 = vsel %vm116, %v33, 0
  %v178 = vsel %vm116, %v34, 0
  %v181 = vsel %vm116, %v35, 0
  %v184 = vsel %vm116, %v36, 0
  %v187 = vsel %vm116, %v37, 0
  %v190 = vsel %vm116, %v38, 0
  %v193 = vsel %vm116, %v39, 0
  %v196 = vsel %vm116, %v40, 0
  %v199 = vsel %vm116, %v41, 0
  %v202 = vsel %vm116, %v42, 0
  %v205 = vsel %vm116, %v43, 0
  %v208 = vsel %vm116, %v44, 0
  %v211 = vsel %vm116, %v45, 0
  %213 = vmatprep.subr.mxu0 0.0
  %214 = vmatpush1.msra.mxu0 %v112
  %215 = vmatprep.subr.mxu0 0.0
  %216 = vmatpush1.msra.mxu0 %v113
  %217 = vmatprep.subr.mxu0 0.0
  %218 = vmatpush1.msra.mxu0 %v114
  %219 = vmatprep.subr.mxu0 0.0
  %220 = vmatpush1.msra.mxu0 %v115
  %221 = vmatprep.subr.mxu0 0.0
  %222 = vmatpush1.msra.mxu0 0.0
  %223 = vmatprep.subr.mxu0 0.0
  %224 = vmatpush1.msra.mxu0 0.0
  %225 = vmatprep.subr.mxu0 0.0
  %226 = vmatpush1.msra.mxu0 0.0
  %227 = vmatprep.subr.mxu0 0.0
  %228 = vmatpush1.msra.mxu0 0.0
  %229 = vmatprep.subr.mxu0 0.0
  %230 = vmatpush1.msra.mxu0 0.0
  %231 = vmatprep.subr.mxu0 0.0
  %232 = vmatpush1.msra.mxu0 0.0
  %233 = vmatprep.subr.mxu0 0.0
  %234 = vmatpush1.msra.mxu0 0.0
  %235 = vmatprep.subr.mxu0 0.0
  %236 = vmatpush1.msra.mxu0 0.0
  %237 = vmatprep.subr.mxu0 0.0
  %238 = vmatpush1.msra.mxu0 0.0
  %239 = vmatprep.subr.mxu0 0.0
  %240 = vmatpush1.msra.mxu0 0.0
  %241 = vmatprep.subr.mxu0 0.0
  %242 = vmatpush1.msra.mxu0 0.0
  %243 = vmatprep.subr.mxu0 0.0
  %244 = vmatpush1.msra.mxu0 0.0
  %245 = vmatprep.subr.mxu0 0.0
  %246 = vmatpush1.msra.mxu0 0.0
  %247 = vmatprep.subr.mxu0 0.0
  %248 = vmatpush1.msra.mxu0 0.0
  %249 = vmatprep.subr.mxu0 0.0
  %250 = vmatpush1.msra.mxu0 0.0
  %251 = vmatprep.subr.mxu0 0.0
  %252 = vmatpush1.msra.mxu0 0.0
  %253 = vmatprep.subr.mxu0 0.0
  %254 = vmatpush1.msra.mxu0 0.0
  %255 = vmatprep.subr.mxu0 0.0
  %256 = vmatpush1.msra.mxu0 0.0
  %257 = vmatprep.subr.mxu0 0.0
  %258 = vmatpush1.msra.mxu0 0.0
  %259 = vmatprep.subr.mxu0 0.0
  %260 = vmatpush1.msra.mxu0 0.0
  %261 = vmatprep.subr.mxu0 0.0
  %262 = vmatpush1.msra.mxu0 0.0
  %263 = vmatprep.subr.mxu0 0.0
  %264 = vmatpush1.msra.mxu0 0.0
  %265 = vmatprep.subr.mxu0 0.0
  %266 = vmatpush1.msra.mxu0 0.0
  %267 = vmatprep.subr.mxu0 0.0
  %268 = vmatpush1.msra.mxu0 0.0
  %269 = vmatprep.subr.mxu0 0.0
  %270 = vmatpush1.msra.mxu0 0.0
  %271 = vmatprep.subr.mxu0 0.0
  %272 = vmatpush1.msra.mxu0 0.0
  %273 = vmatprep.subr.mxu0 0.0
  %274 = vmatpush1.msra.mxu0 0.0
  %275 = vmatprep.subr.mxu0 0.0
  %276 = vmatpush1.msra.mxu0 0.0
  %277 = vmatprep.mubr.f32.mxu0 0.0
  %278 = vmatmul.mubr.f32.gmra.mrb[0].mxu0 %v118
  %v279 = vpop.f32.mrb[0].mxu0
  %v280 = vadd.f32 0.0, %v279
  %v281 = vpop.f32.mrb[0].mxu0
  %282 = vmatprep.mubr.f32.mxu0 0.0
  %283 = vmatmul.mubr.f32.gmra.mrb[0].mxu0 %v121
  %v284 = vpop.f32.mrb[0].mxu0
  %v285 = vadd.f32 0.0, %v284
  %v286 = vpop.f32.mrb[0].mxu0
  %287 = vmatprep.mubr.f32.mxu0 0.0
  %288 = vmatmul.mubr.f32.gmra.mrb[0].mxu0 %v124
  %v289 = vpop.f32.mrb[0].mxu0
  %v290 = vadd.f32 0.0, %v289
  %v291 = vpop.f32.mrb[0].mxu0
  %292 = vmatprep.mubr.f32.mxu0 0.0
  %293 = vmatmul.mubr.f32.gmra.mrb[0].mxu0 %v127
  %v294 = vpop.f32.mrb[0].mxu0
  %v295 = vadd.f32 0.0, %v294
  %v296 = vpop.f32.mrb[0].mxu0
  %297 = vmatprep.mubr.f32.mxu0 0.0
  %298 = vmatmul.mubr.f32.gmra.mrb[0].mxu0 %v130
  %v299 = vpop.f32.mrb[0].mxu0
  %v300 = vadd.f32 0.0, %v299
  %v301 = vpop.f32.mrb[0].mxu0
  %302 = vmatprep.mubr.f32.mxu0 0.0
  %303 = vmatmul.mubr.f32.gmra.mrb[0].mxu0 %v133
  %v304 = vpop.f32.mrb[0].mxu0
  %v305 = vadd.f32 0.0, %v304
  %v306 = vpop.f32.mrb[0].mxu0
  %307 = vmatprep.mubr.f32.mxu0 0.0
  %308 = vmatmul.mubr.f32.gmra.mrb[0].mxu0 %v136
  %v309 = vpop.f32.mrb[0].mxu0
  %v310 = vadd.f32 0.0, %v309
  %v311 = vpop.f32.mrb[0].mxu0
  %312 = vmatprep.mubr.f32.mxu0 0.0
  %313 = vmatmul.mubr.f32.gmra.mrb[0].mxu0 %v139
  %v314 = vpop.f32.mrb[0].mxu0
  %v315 = vadd.f32 0.0, %v314
  %v316 = vpop.f32.mrb[0].mxu0
  %317 = vmatprep.mubr.f32.mxu0 0.0
  %318 = vmatmul.mubr.f32.gmra.mrb[0].mxu0 %v142
  %v319 = vpop.f32.mrb[0].mxu0
  %v320 = vadd.f32 0.0, %v319
  %v321 = vpop.f32.mrb[0].mxu0
  %322 = vmatprep.mubr.f32.mxu0 0.0
  %323 = vmatmul.mubr.f32.gmra.mrb[0].mxu0 %v145
  %v324 = vpop.f32.mrb[0].mxu0
  %v325 = vadd.f32 0.0, %v324
  %v326 = vpop.f32.mrb[0].mxu0
  %327 = vmatprep.mubr.f32.mxu0 0.0
  %328 = vmatmul.mubr.f32.gmra.mrb[0].mxu0 %v148
  %v329 = vpop.f32.mrb[0].mxu0
  %v330 = vadd.f32 0.0, %v329
  %v331 = vpop.f32.mrb[0].mxu0
  %332 = vmatprep.mubr.f32.mxu0 0.0
  %333 = vmatmul.mubr.f32.gmra.mrb[0].mxu0 %v151
  %v334 = vpop.f32.mrb[0].mxu0
  %v335 = vadd.f32 0.0, %v334
  %v336 = vpop.f32.mrb[0].mxu0
  %337 = vmatprep.mubr.f32.mxu0 0.0
  %338 = vmatmul.mubr.f32.gmra.mrb[0].mxu0 %v154
  %v339 = vpop.f32.mrb[0].mxu0
  %v340 = vadd.f32 0.0, %v339
  %v341 = vpop.f32.mrb[0].mxu0
  %342 = vmatprep.mubr.f32.mxu0 0.0
  %343 = vmatmul.mubr.f32.gmra.mrb[0].mxu0 %v157
  %v344 = vpop.f32.mrb[0].mxu0
  %v345 = vadd.f32 0.0, %v344
  %v346 = vpop.f32.mrb[0].mxu0
  %347 = vmatprep.mubr.f32.mxu0 0.0
  %348 = vmatmul.mubr.f32.gmra.mrb[0].mxu0 %v160
  %v349 = vpop.f32.mrb[0].mxu0
  %v350 = vadd.f32 0.0, %v349
  %v351 = vpop.f32.mrb[0].mxu0
  %352 = vmatprep.mubr.f32.mxu0 0.0
  %353 = vmatmul.mubr.f32.gmra.mrb[0].mxu0 %v163
  %v354 = vpop.f32.mrb[0].mxu0
  %v355 = vadd.f32 0.0, %v354
  %v356 = vpop.f32.mrb[0].mxu0
  %357 = vmatprep.mubr.f32.mxu0 0.0
  %358 = vmatmul.mubr.f32.gmra.mrb[0].mxu0 %v166
  %v359 = vpop.f32.mrb[0].mxu0
  %v360 = vadd.f32 0.0, %v359
  %v361 = vpop.f32.mrb[0].mxu0
  %362 = vmatprep.mubr.f32.mxu0 0.0
  %363 = vmatmul.mubr.f32.gmra.mrb[0].mxu0 %v169
  %v364 = vpop.f32.mrb[0].mxu0
  %v365 = vadd.f32 0.0, %v364
  %v366 = vpop.f32.mrb[0].mxu0
  %367 = vmatprep.mubr.f32.mxu0 0.0
  %368 = vmatmul.mubr.f32.gmra.mrb[0].mxu0 %v172
  %v369 = vpop.f32.mrb[0].mxu0
  %v370 = vadd.f32 0.0, %v369
  %v371 = vpop.f32.mrb[0].mxu0
  %372 = vmatprep.mubr.f32.mxu0 0.0
  %373 = vmatmul.mubr.f32.gmra.mrb[0].mxu0 %v175
  %v374 = vpop.f32.mrb[0].mxu0
  %v375 = vadd.f32 0.0, %v374
  %v376 = vpop.f32.mrb[0].mxu0
  %377 = vmatprep.mubr.f32.mxu0 0.0
  %378 = vmatmul.mubr.f32.gmra.mrb[0].mxu0 %v178
  %v379 = vpop.f32.mrb[0].mxu0
  %v380 = vadd.f32 0.0, %v379
  %v381 = vpop.f32.mrb[0].mxu0
  %382 = vmatprep.mubr.f32.mxu0 0.0
  %383 = vmatmul.mubr.f32.gmra.mrb[0].mxu0 %v181
  %v384 = vpop.f32.mrb[0].mxu0
  %v385 = vadd.f32 0.0, %v384
  %v386 = vpop.f32.mrb[0].mxu0
  %387 = vmatprep.mubr.f32.mxu0 0.0
  %388 = vmatmul.mubr.f32.gmra.mrb[0].mxu0 %v184
  %v389 = vpop.f32.mrb[0].mxu0
  %v390 = vadd.f32 0.0, %v389
  %v391 = vpop.f32.mrb[0].mxu0
  %392 = vmatprep.mubr.f32.mxu0 0.0
  %393 = vmatmul.mubr.f32.gmra.mrb[0].mxu0 %v187
  %v394 = vpop.f32.mrb[0].mxu0
  %v395 = vadd.f32 0.0, %v394
  %v396 = vpop.f32.mrb[0].mxu0
  %397 = vmatprep.mubr.f32.mxu0 0.0
  %398 = vmatmul.mubr.f32.gmra.mrb[0].mxu0 %v190
  %v399 = vpop.f32.mrb[0].mxu0
  %v400 = vadd.f32 0.0, %v399
  %v401 = vpop.f32.mrb[0].mxu0
  %402 = vmatprep.mubr.f32.mxu0 0.0
  %403 = vmatmul.mubr.f32.gmra.mrb[0].mxu0 %v193
  %v404 = vpop.f32.mrb[0].mxu0
  %v405 = vadd.f32 0.0, %v404
  %v406 = vpop.f32.mrb[0].mxu0
  %407 = vmatprep.mubr.f32.mxu0 0.0
  %408 = vmatmul.mubr.f32.gmra.mrb[0].mxu0 %v196
  %v409 = vpop.f32.mrb[0].mxu0
  %v410 = vadd.f32 0.0, %v409
  %v411 = vpop.f32.mrb[0].mxu0
  %412 = vmatprep.mubr.f32.mxu0 0.0
  %413 = vmatmul.mubr.f32.gmra.mrb[0].mxu0 %v199
  %v414 = vpop.f32.mrb[0].mxu0
  %v415 = vadd.f32 0.0, %v414
  %v416 = vpop.f32.mrb[0].mxu0
  %417 = vmatprep.mubr.f32.mxu0 0.0
  %418 = vmatmul.mubr.f32.gmra.mrb[0].mxu0 %v202
  %v419 = vpop.f32.mrb[0].mxu0
  %v420 = vadd.f32 0.0, %v419
  %v421 = vpop.f32.mrb[0].mxu0
  %422 = vmatprep.mubr.f32.mxu0 0.0
  %423 = vmatmul.mubr.f32.gmra.mrb[0].mxu0 %v205
  %v424 = vpop.f32.mrb[0].mxu0
  %v425 = vadd.f32 0.0, %v424
  %v426 = vpop.f32.mrb[0].mxu0
  %427 = vmatprep.mubr.f32.mxu0 0.0
  %428 = vmatmul.mubr.f32.gmra.mrb[0].mxu0 %v208
  %v429 = vpop.f32.mrb[0].mxu0
  %v430 = vadd.f32 0.0, %v429
  %v431 = vpop.f32.mrb[0].mxu0
  %432 = vmatprep.mubr.f32.mxu0 0.0
  %433 = vmatmul.mubr.f32.gmra.mrb[0].mxu0 %v211
  %v434 = vpop.f32.mrb[0].mxu0
  %v435 = vadd.f32 0.0, %v434
  %v436 = vpop.f32.mrb[0].mxu0
  %437 = vdwg.mxu0
  %v438 = vlaneseq
  %v439 = vshrl.u32 %v438, 7
  %v440 = vsub.s32 0, %v439
  %v441 = vrot.slane %v110, %v440
  %v442 = vadd.f32 %v280, %v441
  %v443 = vadd.f32 %v285, %v441
  %v444 = vadd.f32 %v290, %v441
  %v445 = vadd.f32 %v295, %v441
  %v446 = vadd.f32 %v300, %v441
  %v447 = vadd.f32 %v305, %v441
  %v448 = vadd.f32 %v310, %v441
  %v449 = vadd.f32 %v315, %v441
  %v450 = vadd.f32 %v320, %v441
  %v451 = vadd.f32 %v325, %v441
  %v452 = vadd.f32 %v330, %v441
  %v453 = vadd.f32 %v335, %v441
  %v454 = vadd.f32 %v340, %v441
  %v455 = vadd.f32 %v345, %v441
  %v456 = vadd.f32 %v350, %v441
  %v457 = vadd.f32 %v355, %v441
  %v458 = vadd.f32 %v360, %v441
  %v459 = vadd.f32 %v365, %v441
  %v460 = vadd.f32 %v370, %v441
  %v461 = vadd.f32 %v375, %v441
  %v462 = vadd.f32 %v380, %v441
  %v463 = vadd.f32 %v385, %v441
  %v464 = vadd.f32 %v390, %v441
  %v465 = vadd.f32 %v395, %v441
  %v466 = vadd.f32 %v400, %v441
  %v467 = vadd.f32 %v405, %v441
  %v468 = vadd.f32 %v410, %v441
  %v469 = vadd.f32 %v415, %v441
  %v470 = vadd.f32 %v420, %v441
  %v471 = vadd.f32 %v425, %v441
  %v472 = vadd.f32 %v430, %v441
  %v473 = vadd.f32 %v435, %v441
  %506 = vset.pattern.permute.xlu0 0
  %507 = vperm.xlu0 %506, %v442
  %v508 = vpop.permute.xlu0 %507
  %509 = vset.pattern.permute.xlu0 0
  %510 = vperm.xlu0 %509, %v443
  %v511 = vpop.permute.xlu0 %510
  %512 = vset.pattern.permute.xlu0 0
  %513 = vperm.xlu0 %512, %v444
  %v514 = vpop.permute.xlu0 %513
  %515 = vset.pattern.permute.xlu0 0
  %516 = vperm.xlu0 %515, %v445
  %v517 = vpop.permute.xlu0 %516
  %518 = vset.pattern.permute.xlu0 0
  %519 = vperm.xlu0 %518, %v446
  %v520 = vpop.permute.xlu0 %519
  %521 = vset.pattern.permute.xlu0 0
  %522 = vperm.xlu0 %521, %v447
  %v523 = vpop.permute.xlu0 %522
  %524 = vset.pattern.permute.xlu0 0
  %525 = vperm.xlu0 %524, %v448
  %v526 = vpop.permute.xlu0 %525
  %527 = vset.pattern.permute.xlu0 0
  %528 = vperm.xlu0 %527, %v449
  %v529 = vpop.permute.xlu0 %528
  %530 = vset.pattern.permute.xlu0 0
  %531 = vperm.xlu0 %530, %v450
  %v532 = vpop.permute.xlu0 %531
  %533 = vset.pattern.permute.xlu0 0
  %534 = vperm.xlu0 %533, %v451
  %v535 = vpop.permute.xlu0 %534
  %536 = vset.pattern.permute.xlu0 0
  %537 = vperm.xlu0 %536, %v452
  %v538 = vpop.permute.xlu0 %537
  %539 = vset.pattern.permute.xlu0 0
  %540 = vperm.xlu0 %539, %v453
  %v541 = vpop.permute.xlu0 %540
  %542 = vset.pattern.permute.xlu0 0
  %543 = vperm.xlu0 %542, %v454
  %v544 = vpop.permute.xlu0 %543
  %545 = vset.pattern.permute.xlu0 0
  %546 = vperm.xlu0 %545, %v455
  %v547 = vpop.permute.xlu0 %546
  %548 = vset.pattern.permute.xlu0 0
  %549 = vperm.xlu0 %548, %v456
  %v550 = vpop.permute.xlu0 %549
  %551 = vset.pattern.permute.xlu0 0
  %552 = vperm.xlu0 %551, %v457
  %v553 = vpop.permute.xlu0 %552
  %554 = vset.pattern.permute.xlu0 0
  %555 = vperm.xlu0 %554, %v458
  %v556 = vpop.permute.xlu0 %555
  %557 = vset.pattern.permute.xlu0 0
  %558 = vperm.xlu0 %557, %v459
  %v559 = vpop.permute.xlu0 %558
  %560 = vset.pattern.permute.xlu0 0
  %561 = vperm.xlu0 %560, %v460
  %v562 = vpop.permute.xlu0 %561
  %563 = vset.pattern.permute.xlu0 0
  %564 = vperm.xlu0 %563, %v461
  %v565 = vpop.permute.xlu0 %564
  %566 = vset.pattern.permute.xlu0 0
  %567 = vperm.xlu0 %566, %v462
  %v568 = vpop.permute.xlu0 %567
  %569 = vset.pattern.permute.xlu0 0
  %570 = vperm.xlu0 %569, %v463
  %v571 = vpop.permute.xlu0 %570
  %572 = vset.pattern.permute.xlu0 0
  %573 = vperm.xlu0 %572, %v464
  %v574 = vpop.permute.xlu0 %573
  %575 = vset.pattern.permute.xlu0 0
  %576 = vperm.xlu0 %575, %v465
  %v577 = vpop.permute.xlu0 %576
  %578 = vset.pattern.permute.xlu0 0
  %579 = vperm.xlu0 %578, %v466
  %v580 = vpop.permute.xlu0 %579
  %581 = vset.pattern.permute.xlu0 0
  %582 = vperm.xlu0 %581, %v467
  %v583 = vpop.permute.xlu0 %582
  %584 = vset.pattern.permute.xlu0 0
  %585 = vperm.xlu0 %584, %v468
  %v586 = vpop.permute.xlu0 %585
  %587 = vset.pattern.permute.xlu0 0
  %588 = vperm.xlu0 %587, %v469
  %v589 = vpop.permute.xlu0 %588
  %590 = vset.pattern.permute.xlu0 0
  %591 = vperm.xlu0 %590, %v470
  %v592 = vpop.permute.xlu0 %591
  %593 = vset.pattern.permute.xlu0 0
  %594 = vperm.xlu0 %593, %v471
  %v595 = vpop.permute.xlu0 %594
  %596 = vset.pattern.permute.xlu0 0
  %597 = vperm.xlu0 %596, %v472
  %v598 = vpop.permute.xlu0 %597
  %599 = vset.pattern.permute.xlu0 0
  %600 = vperm.xlu0 %599, %v473
  %v601 = vpop.permute.xlu0 %600
  %v602 = vlaneseq
  %v603 = vand.u32 %v602, 127
  %v604 = vlaneseq
  %v605 = vshrl.u32 %v604, 7
  %v606 = vsub.s32 %v603, %v605
  %v607 = vrot.slane %v508, %v606
  %v608 = vlaneseq
  %v609 = vshrl.u32 %v608, 7
  %v610 = vsub.s32 %v603, %v609
  %v611 = vrot.slane %v511, %v610
  %v612 = vlaneseq
  %v613 = vshrl.u32 %v612, 7
  %v614 = vsub.s32 %v603, %v613
  %v615 = vrot.slane %v514, %v614
  %v616 = vlaneseq
  %v617 = vshrl.u32 %v616, 7
  %v618 = vsub.s32 %v603, %v617
  %v619 = vrot.slane %v517, %v618
  %v620 = vlaneseq
  %v621 = vshrl.u32 %v620, 7
  %v622 = vsub.s32 %v603, %v621
  %v623 = vrot.slane %v520, %v622
  %v624 = vlaneseq
  %v625 = vshrl.u32 %v624, 7
  %v626 = vsub.s32 %v603, %v625
  %v627 = vrot.slane %v523, %v626
  %v628 = vlaneseq
  %v629 = vshrl.u32 %v628, 7
  %v630 = vsub.s32 %v603, %v629
  %v631 = vrot.slane %v526, %v630
  %v632 = vlaneseq
  %v633 = vshrl.u32 %v632, 7
  %v634 = vsub.s32 %v603, %v633
  %v635 = vrot.slane %v529, %v634
  %v636 = vlaneseq
  %v637 = vshrl.u32 %v636, 7
  %v638 = vsub.s32 %v603, %v637
  %v639 = vrot.slane %v532, %v638
  %v640 = vlaneseq
  %v641 = vshrl.u32 %v640, 7
  %v642 = vsub.s32 %v603, %v641
  %v643 = vrot.slane %v535, %v642
  %v644 = vlaneseq
  %v645 = vshrl.u32 %v644, 7
  %v646 = vsub.s32 %v603, %v645
  %v647 = vrot.slane %v538, %v646
  %v648 = vlaneseq
  %v649 = vshrl.u32 %v648, 7
  %v650 = vsub.s32 %v603, %v649
  %v651 = vrot.slane %v541, %v650
  %v652 = vlaneseq
  %v653 = vshrl.u32 %v652, 7
  %v654 = vsub.s32 %v603, %v653
  %v655 = vrot.slane %v544, %v654
  %v656 = vlaneseq
  %v657 = vshrl.u32 %v656, 7
  %v658 = vsub.s32 %v603, %v657
  %v659 = vrot.slane %v547, %v658
  %v660 = vlaneseq
  %v661 = vshrl.u32 %v660, 7
  %v662 = vsub.s32 %v603, %v661
  %v663 = vrot.slane %v550, %v662
  %v664 = vlaneseq
  %v665 = vshrl.u32 %v664, 7
  %v666 = vsub.s32 %v603, %v665
  %v667 = vrot.slane %v553, %v666
  %v668 = vlaneseq
  %v669 = vshrl.u32 %v668, 7
  %v670 = vsub.s32 %v603, %v669
  %v671 = vrot.slane %v556, %v670
  %v672 = vlaneseq
  %v673 = vshrl.u32 %v672, 7
  %v674 = vsub.s32 %v603, %v673
  %v675 = vrot.slane %v559, %v674
  %v676 = vlaneseq
  %v677 = vshrl.u32 %v676, 7
  %v678 = vsub.s32 %v603, %v677
  %v679 = vrot.slane %v562, %v678
  %v680 = vlaneseq
  %v681 = vshrl.u32 %v680, 7
  %v682 = vsub.s32 %v603, %v681
  %v683 = vrot.slane %v565, %v682
  %v684 = vlaneseq
  %v685 = vshrl.u32 %v684, 7
  %v686 = vsub.s32 %v603, %v685
  %v687 = vrot.slane %v568, %v686
  %v688 = vlaneseq
  %v689 = vshrl.u32 %v688, 7
  %v690 = vsub.s32 %v603, %v689
  %v691 = vrot.slane %v571, %v690
  %v692 = vlaneseq
  %v693 = vshrl.u32 %v692, 7
  %v694 = vsub.s32 %v603, %v693
  %v695 = vrot.slane %v574, %v694
  %v696 = vlaneseq
  %v697 = vshrl.u32 %v696, 7
  %v698 = vsub.s32 %v603, %v697
  %v699 = vrot.slane %v577, %v698
  %v700 = vlaneseq
  %v701 = vshrl.u32 %v700, 7
  %v702 = vsub.s32 %v603, %v701
  %v703 = vrot.slane %v580, %v702
  %v704 = vlaneseq
  %v705 = vshrl.u32 %v704, 7
  %v706 = vsub.s32 %v603, %v705
  %v707 = vrot.slane %v583, %v706
  %v708 = vlaneseq
  %v709 = vshrl.u32 %v708, 7
  %v710 = vsub.s32 %v603, %v709
  %v711 = vrot.slane %v586, %v710
  %v712 = vlaneseq
  %v713 = vshrl.u32 %v712, 7
  %v714 = vsub.s32 %v603, %v713
  %v715 = vrot.slane %v589, %v714
  %v716 = vlaneseq
  %v717 = vshrl.u32 %v716, 7
  %v718 = vsub.s32 %v603, %v717
  %v719 = vrot.slane %v592, %v718
  %v720 = vlaneseq
  %v721 = vshrl.u32 %v720, 7
  %v722 = vsub.s32 %v603, %v721
  %v723 = vrot.slane %v595, %v722
  %v724 = vlaneseq
  %v725 = vshrl.u32 %v724, 7
  %v726 = vsub.s32 %v603, %v725
  %v727 = vrot.slane %v598, %v726
  %v728 = vlaneseq
  %v729 = vshrl.u32 %v728, 7
  %v730 = vsub.s32 %v603, %v729
  %v731 = vrot.slane %v601, %v730
  %vm732 = vcmask 1041409
  %v733 = vsel %vm732, %v611, %v607
  %vm734 = vcmask 1042434
  %v735 = vsel %vm734, %v615, %v733
  %vm736 = vcmask 1043459
  %v737 = vsel %vm736, %v619, %v735
  %vm738 = vcmask 1044484
  %v739 = vsel %vm738, %v623, %v737
  %vm740 = vcmask 1045509
  %v741 = vsel %vm740, %v627, %v739
  %vm742 = vcmask 1046534
  %v743 = vsel %vm742, %v631, %v741
  %vm744 = vcmask 1047559
  %v745 = vsel %vm744, %v635, %v743
  %v746 = vsel %vm732, %v643, %v639
  %v747 = vsel %vm734, %v647, %v746
  %v748 = vsel %vm736, %v651, %v747
  %v749 = vsel %vm738, %v655, %v748
  %v750 = vsel %vm740, %v659, %v749
  %v751 = vsel %vm742, %v663, %v750
  %v752 = vsel %vm744, %v667, %v751
  %v753 = vsel %vm732, %v675, %v671
  %v754 = vsel %vm734, %v679, %v753
  %v755 = vsel %vm736, %v683, %v754
  %v756 = vsel %vm738, %v687, %v755
  %v757 = vsel %vm740, %v691, %v756
  %v758 = vsel %vm742, %v695, %v757
  %v759 = vsel %vm744, %v699, %v758
  %v760 = vsel %vm732, %v707, %v703
  %v761 = vsel %vm734, %v711, %v760
  %v762 = vsel %vm736, %v715, %v761
  %v763 = vsel %vm738, %v719, %v762
  %v764 = vsel %vm740, %v723, %v763
  %v765 = vsel %vm742, %v727, %v764
  %v766 = vsel %vm744, %v731, %v765
  %vm771 = vcmask 64512
  %v772 = vsel %vm771, %v745, -inf
  %773 = vmax.xlane.f32.xlu0 %v772
  %v774 = vpop.xlane.xlu0 %773
  %v775 = vsel %vm771, %v752, -inf
  %776 = vmax.xlane.f32.xlu0 %v775
  %v777 = vpop.xlane.xlu0 %776
  %v778 = vsel %vm771, %v759, -inf
  %779 = vmax.xlane.f32.xlu0 %v778
  %v780 = vpop.xlane.xlu0 %779
  %v781 = vsel %vm771, %v766, -inf
  %782 = vmax.xlane.f32.xlu0 %v781
  %v783 = vpop.xlane.xlu0 %782
  %v788 = vlaneseq
  %v789 = vshrl.u32 %v788, 7
  %v790 = vsub.s32 0, %v789
  %v791 = vrot.slane %v774, %v790
  %v792 = vlaneseq
  %v793 = vshrl.u32 %v792, 7
  %v794 = vsub.s32 1, %v793
  %v795 = vrot.slane %v774, %v794
  %v796 = vlaneseq
  %v797 = vshrl.u32 %v796, 7
  %v798 = vsub.s32 2, %v797
  %v799 = vrot.slane %v774, %v798
  %v800 = vlaneseq
  %v801 = vshrl.u32 %v800, 7
  %v802 = vsub.s32 3, %v801
  %v803 = vrot.slane %v774, %v802
  %v804 = vlaneseq
  %v805 = vshrl.u32 %v804, 7
  %v806 = vsub.s32 4, %v805
  %v807 = vrot.slane %v774, %v806
  %v808 = vlaneseq
  %v809 = vshrl.u32 %v808, 7
  %v810 = vsub.s32 5, %v809
  %v811 = vrot.slane %v774, %v810
  %v812 = vlaneseq
  %v813 = vshrl.u32 %v812, 7
  %v814 = vsub.s32 6, %v813
  %v815 = vrot.slane %v774, %v814
  %v816 = vlaneseq
  %v817 = vshrl.u32 %v816, 7
  %v818 = vsub.s32 7, %v817
  %v819 = vrot.slane %v774, %v818
  %v820 = vlaneseq
  %v821 = vshrl.u32 %v820, 7
  %v822 = vsub.s32 0, %v821
  %v823 = vrot.slane %v777, %v822
  %v824 = vlaneseq
  %v825 = vshrl.u32 %v824, 7
  %v826 = vsub.s32 1, %v825
  %v827 = vrot.slane %v777, %v826
  %v828 = vlaneseq
  %v829 = vshrl.u32 %v828, 7
  %v830 = vsub.s32 2, %v829
  %v831 = vrot.slane %v777, %v830
  %v832 = vlaneseq
  %v833 = vshrl.u32 %v832, 7
  %v834 = vsub.s32 3, %v833
  %v835 = vrot.slane %v777, %v834
  %v836 = vlaneseq
  %v837 = vshrl.u32 %v836, 7
  %v838 = vsub.s32 4, %v837
  %v839 = vrot.slane %v777, %v838
  %v840 = vlaneseq
  %v841 = vshrl.u32 %v840, 7
  %v842 = vsub.s32 5, %v841
  %v843 = vrot.slane %v777, %v842
  %v844 = vlaneseq
  %v845 = vshrl.u32 %v844, 7
  %v846 = vsub.s32 6, %v845
  %v847 = vrot.slane %v777, %v846
  %v848 = vlaneseq
  %v849 = vshrl.u32 %v848, 7
  %v850 = vsub.s32 7, %v849
  %v851 = vrot.slane %v777, %v850
  %v852 = vlaneseq
  %v853 = vshrl.u32 %v852, 7
  %v854 = vsub.s32 0, %v853
  %v855 = vrot.slane %v780, %v854
  %v856 = vlaneseq
  %v857 = vshrl.u32 %v856, 7
  %v858 = vsub.s32 1, %v857
  %v859 = vrot.slane %v780, %v858
  %v860 = vlaneseq
  %v861 = vshrl.u32 %v860, 7
  %v862 = vsub.s32 2, %v861
  %v863 = vrot.slane %v780, %v862
  %v864 = vlaneseq
  %v865 = vshrl.u32 %v864, 7
  %v866 = vsub.s32 3, %v865
  %v867 = vrot.slane %v780, %v866
  %v868 = vlaneseq
  %v869 = vshrl.u32 %v868, 7
  %v870 = vsub.s32 4, %v869
  %v871 = vrot.slane %v780, %v870
  %v872 = vlaneseq
  %v873 = vshrl.u32 %v872, 7
  %v874 = vsub.s32 5, %v873
  %v875 = vrot.slane %v780, %v874
  %v876 = vlaneseq
  %v877 = vshrl.u32 %v876, 7
  %v878 = vsub.s32 6, %v877
  %v879 = vrot.slane %v780, %v878
  %v880 = vlaneseq
  %v881 = vshrl.u32 %v880, 7
  %v882 = vsub.s32 7, %v881
  %v883 = vrot.slane %v780, %v882
  %v884 = vlaneseq
  %v885 = vshrl.u32 %v884, 7
  %v886 = vsub.s32 0, %v885
  %v887 = vrot.slane %v783, %v886
  %v888 = vlaneseq
  %v889 = vshrl.u32 %v888, 7
  %v890 = vsub.s32 1, %v889
  %v891 = vrot.slane %v783, %v890
  %v892 = vlaneseq
  %v893 = vshrl.u32 %v892, 7
  %v894 = vsub.s32 2, %v893
  %v895 = vrot.slane %v783, %v894
  %v896 = vlaneseq
  %v897 = vshrl.u32 %v896, 7
  %v898 = vsub.s32 3, %v897
  %v899 = vrot.slane %v783, %v898
  %v900 = vlaneseq
  %v901 = vshrl.u32 %v900, 7
  %v902 = vsub.s32 4, %v901
  %v903 = vrot.slane %v783, %v902
  %v904 = vlaneseq
  %v905 = vshrl.u32 %v904, 7
  %v906 = vsub.s32 5, %v905
  %v907 = vrot.slane %v783, %v906
  %v908 = vlaneseq
  %v909 = vshrl.u32 %v908, 7
  %v910 = vsub.s32 6, %v909
  %v911 = vrot.slane %v783, %v910
  %v912 = vlaneseq
  %v913 = vshrl.u32 %v912, 7
  %v914 = vsub.s32 7, %v913
  %v915 = vrot.slane %v783, %v914
  %v948 = vsub.f32 %v442, %v791
  %v949 = vsub.f32 %v443, %v795
  %v950 = vsub.f32 %v444, %v799
  %v951 = vsub.f32 %v445, %v803
  %v952 = vsub.f32 %v446, %v807
  %v953 = vsub.f32 %v447, %v811
  %v954 = vsub.f32 %v448, %v815
  %v955 = vsub.f32 %v449, %v819
  %v956 = vsub.f32 %v450, %v823
  %v957 = vsub.f32 %v451, %v827
  %v958 = vsub.f32 %v452, %v831
  %v959 = vsub.f32 %v453, %v835
  %v960 = vsub.f32 %v454, %v839
  %v961 = vsub.f32 %v455, %v843
  %v962 = vsub.f32 %v456, %v847
  %v963 = vsub.f32 %v457, %v851
  %v964 = vsub.f32 %v458, %v855
  %v965 = vsub.f32 %v459, %v859
  %v966 = vsub.f32 %v460, %v863
  %v967 = vsub.f32 %v461, %v867
  %v968 = vsub.f32 %v462, %v871
  %v969 = vsub.f32 %v463, %v875
  %v970 = vsub.f32 %v464, %v879
  %v971 = vsub.f32 %v465, %v883
  %v972 = vsub.f32 %v466, %v887
  %v973 = vsub.f32 %v467, %v891
  %v974 = vsub.f32 %v468, %v895
  %v975 = vsub.f32 %v469, %v899
  %v976 = vsub.f32 %v470, %v903
  %v977 = vsub.f32 %v471, %v907
  %v978 = vsub.f32 %v472, %v911
  %v979 = vsub.f32 %v473, %v915
  %v980 = vmul.f32 %v948, 1.442695
  %v981 = vpow.pop %v980
  %v982 = vmul.f32 %v949, 1.442695
  %v983 = vpow.pop %v982
  %v984 = vmul.f32 %v950, 1.442695
  %v985 = vpow.pop %v984
  %v986 = vmul.f32 %v951, 1.442695
  %v987 = vpow.pop %v986
  %v988 = vmul.f32 %v952, 1.442695
  %v989 = vpow.pop %v988
  %v990 = vmul.f32 %v953, 1.442695
  %v991 = vpow.pop %v990
  %v992 = vmul.f32 %v954, 1.442695
  %v993 = vpow.pop %v992
  %v994 = vmul.f32 %v955, 1.442695
  %v995 = vpow.pop %v994
  %v996 = vmul.f32 %v956, 1.442695
  %v997 = vpow.pop %v996
  %v998 = vmul.f32 %v957, 1.442695
  %v999 = vpow.pop %v998
  %v1000 = vmul.f32 %v958, 1.442695
  %v1001 = vpow.pop %v1000
  %v1002 = vmul.f32 %v959, 1.442695
  %v1003 = vpow.pop %v1002
  %v1004 = vmul.f32 %v960, 1.442695
  %v1005 = vpow.pop %v1004
  %v1006 = vmul.f32 %v961, 1.442695
  %v1007 = vpow.pop %v1006
  %v1008 = vmul.f32 %v962, 1.442695
  %v1009 = vpow.pop %v1008
  %v1010 = vmul.f32 %v963, 1.442695
  %v1011 = vpow.pop %v1010
  %v1012 = vmul.f32 %v964, 1.442695
  %v1013 = vpow.pop %v1012
  %v1014 = vmul.f32 %v965, 1.442695
  %v1015 = vpow.pop %v1014
  %v1016 = vmul.f32 %v966, 1.442695
  %v1017 = vpow.pop %v1016
  %v1018 = vmul.f32 %v967, 1.442695
  %v1019 = vpow.pop %v1018
  %v1020 = vmul.f32 %v968, 1.442695
  %v1021 = vpow.pop %v1020
  %v1022 = vmul.f32 %v969, 1.442695
  %v1023 = vpow.pop %v1022
  %v1024 = vmul.f32 %v970, 1.442695
  %v1025 = vpow.pop %v1024
  %v1026 = vmul.f32 %v971, 1.442695
  %v1027 = vpow.pop %v1026
  %v1028 = vmul.f32 %v972, 1.442695
  %v1029 = vpow.pop %v1028
  %v1030 = vmul.f32 %v973, 1.442695
  %v1031 = vpow.pop %v1030
  %v1032 = vmul.f32 %v974, 1.442695
  %v1033 = vpow.pop %v1032
  %v1034 = vmul.f32 %v975, 1.442695
  %v1035 = vpow.pop %v1034
  %v1036 = vmul.f32 %v976, 1.442695
  %v1037 = vpow.pop %v1036
  %v1038 = vmul.f32 %v977, 1.442695
  %v1039 = vpow.pop %v1038
  %v1040 = vmul.f32 %v978, 1.442695
  %v1041 = vpow.pop %v1040
  %v1042 = vmul.f32 %v979, 1.442695
  %v1043 = vpow.pop %v1042
  %1076 = vset.pattern.permute.xlu0 0
  %1077 = vperm.xlu0 %1076, %v981
  %v1078 = vpop.permute.xlu0 %1077
  %1079 = vset.pattern.permute.xlu0 0
  %1080 = vperm.xlu0 %1079, %v983
  %v1081 = vpop.permute.xlu0 %1080
  %1082 = vset.pattern.permute.xlu0 0
  %1083 = vperm.xlu0 %1082, %v985
  %v1084 = vpop.permute.xlu0 %1083
  %1085 = vset.pattern.permute.xlu0 0
  %1086 = vperm.xlu0 %1085, %v987
  %v1087 = vpop.permute.xlu0 %1086
  %1088 = vset.pattern.permute.xlu0 0
  %1089 = vperm.xlu0 %1088, %v989
  %v1090 = vpop.permute.xlu0 %1089
  %1091 = vset.pattern.permute.xlu0 0
  %1092 = vperm.xlu0 %1091, %v991
  %v1093 = vpop.permute.xlu0 %1092
  %1094 = vset.pattern.permute.xlu0 0
  %1095 = vperm.xlu0 %1094, %v993
  %v1096 = vpop.permute.xlu0 %1095
  %1097 = vset.pattern.permute.xlu0 0
  %1098 = vperm.xlu0 %1097, %v995
  %v1099 = vpop.permute.xlu0 %1098
  %1100 = vset.pattern.permute.xlu0 0
  %1101 = vperm.xlu0 %1100, %v997
  %v1102 = vpop.permute.xlu0 %1101
  %1103 = vset.pattern.permute.xlu0 0
  %1104 = vperm.xlu0 %1103, %v999
  %v1105 = vpop.permute.xlu0 %1104
  %1106 = vset.pattern.permute.xlu0 0
  %1107 = vperm.xlu0 %1106, %v1001
  %v1108 = vpop.permute.xlu0 %1107
  %1109 = vset.pattern.permute.xlu0 0
  %1110 = vperm.xlu0 %1109, %v1003
  %v1111 = vpop.permute.xlu0 %1110
  %1112 = vset.pattern.permute.xlu0 0
  %1113 = vperm.xlu0 %1112, %v1005
  %v1114 = vpop.permute.xlu0 %1113
  %1115 = vset.pattern.permute.xlu0 0
  %1116 = vperm.xlu0 %1115, %v1007
  %v1117 = vpop.permute.xlu0 %1116
  %1118 = vset.pattern.permute.xlu0 0
  %1119 = vperm.xlu0 %1118, %v1009
  %v1120 = vpop.permute.xlu0 %1119
  %1121 = vset.pattern.permute.xlu0 0
  %1122 = vperm.xlu0 %1121, %v1011
  %v1123 = vpop.permute.xlu0 %1122
  %1124 = vset.pattern.permute.xlu0 0
  %1125 = vperm.xlu0 %1124, %v1013
  %v1126 = vpop.permute.xlu0 %1125
  %1127 = vset.pattern.permute.xlu0 0
  %1128 = vperm.xlu0 %1127, %v1015
  %v1129 = vpop.permute.xlu0 %1128
  %1130 = vset.pattern.permute.xlu0 0
  %1131 = vperm.xlu0 %1130, %v1017
  %v1132 = vpop.permute.xlu0 %1131
  %1133 = vset.pattern.permute.xlu0 0
  %1134 = vperm.xlu0 %1133, %v1019
  %v1135 = vpop.permute.xlu0 %1134
  %1136 = vset.pattern.permute.xlu0 0
  %1137 = vperm.xlu0 %1136, %v1021
  %v1138 = vpop.permute.xlu0 %1137
  %1139 = vset.pattern.permute.xlu0 0
  %1140 = vperm.xlu0 %1139, %v1023
  %v1141 = vpop.permute.xlu0 %1140
  %1142 = vset.pattern.permute.xlu0 0
  %1143 = vperm.xlu0 %1142, %v1025
  %v1144 = vpop.permute.xlu0 %1143
  %1145 = vset.pattern.permute.xlu0 0
  %1146 = vperm.xlu0 %1145, %v1027
  %v1147 = vpop.permute.xlu0 %1146
  %1148 = vset.pattern.permute.xlu0 0
  %1149 = vperm.xlu0 %1148, %v1029
  %v1150 = vpop.permute.xlu0 %1149
  %1151 = vset.pattern.permute.xlu0 0
  %1152 = vperm.xlu0 %1151, %v1031
  %v1153 = vpop.permute.xlu0 %1152
  %1154 = vset.pattern.permute.xlu0 0
  %1155 = vperm.xlu0 %1154, %v1033
  %v1156 = vpop.permute.xlu0 %1155
  %1157 = vset.pattern.permute.xlu0 0
  %1158 = vperm.xlu0 %1157, %v1035
  %v1159 = vpop.permute.xlu0 %1158
  %1160 = vset.pattern.permute.xlu0 0
  %1161 = vperm.xlu0 %1160, %v1037
  %v1162 = vpop.permute.xlu0 %1161
  %1163 = vset.pattern.permute.xlu0 0
  %1164 = vperm.xlu0 %1163, %v1039
  %v1165 = vpop.permute.xlu0 %1164
  %1166 = vset.pattern.permute.xlu0 0
  %1167 = vperm.xlu0 %1166, %v1041
  %v1168 = vpop.permute.xlu0 %1167
  %1169 = vset.pattern.permute.xlu0 0
  %1170 = vperm.xlu0 %1169, %v1043
  %v1171 = vpop.permute.xlu0 %1170
  %v1172 = vlaneseq
  %v1173 = vshrl.u32 %v1172, 7
  %v1174 = vsub.s32 %v603, %v1173
  %v1175 = vrot.slane %v1078, %v1174
  %v1176 = vlaneseq
  %v1177 = vshrl.u32 %v1176, 7
  %v1178 = vsub.s32 %v603, %v1177
  %v1179 = vrot.slane %v1081, %v1178
  %v1180 = vlaneseq
  %v1181 = vshrl.u32 %v1180, 7
  %v1182 = vsub.s32 %v603, %v1181
  %v1183 = vrot.slane %v1084, %v1182
  %v1184 = vlaneseq
  %v1185 = vshrl.u32 %v1184, 7
  %v1186 = vsub.s32 %v603, %v1185
  %v1187 = vrot.slane %v1087, %v1186
  %v1188 = vlaneseq
  %v1189 = vshrl.u32 %v1188, 7
  %v1190 = vsub.s32 %v603, %v1189
  %v1191 = vrot.slane %v1090, %v1190
  %v1192 = vlaneseq
  %v1193 = vshrl.u32 %v1192, 7
  %v1194 = vsub.s32 %v603, %v1193
  %v1195 = vrot.slane %v1093, %v1194
  %v1196 = vlaneseq
  %v1197 = vshrl.u32 %v1196, 7
  %v1198 = vsub.s32 %v603, %v1197
  %v1199 = vrot.slane %v1096, %v1198
  %v1200 = vlaneseq
  %v1201 = vshrl.u32 %v1200, 7
  %v1202 = vsub.s32 %v603, %v1201
  %v1203 = vrot.slane %v1099, %v1202
  %v1204 = vlaneseq
  %v1205 = vshrl.u32 %v1204, 7
  %v1206 = vsub.s32 %v603, %v1205
  %v1207 = vrot.slane %v1102, %v1206
  %v1208 = vlaneseq
  %v1209 = vshrl.u32 %v1208, 7
  %v1210 = vsub.s32 %v603, %v1209
  %v1211 = vrot.slane %v1105, %v1210
  %v1212 = vlaneseq
  %v1213 = vshrl.u32 %v1212, 7
  %v1214 = vsub.s32 %v603, %v1213
  %v1215 = vrot.slane %v1108, %v1214
  %v1216 = vlaneseq
  %v1217 = vshrl.u32 %v1216, 7
  %v1218 = vsub.s32 %v603, %v1217
  %v1219 = vrot.slane %v1111, %v1218
  %v1220 = vlaneseq
  %v1221 = vshrl.u32 %v1220, 7
  %v1222 = vsub.s32 %v603, %v1221
  %v1223 = vrot.slane %v1114, %v1222
  %v1224 = vlaneseq
  %v1225 = vshrl.u32 %v1224, 7
  %v1226 = vsub.s32 %v603, %v1225
  %v1227 = vrot.slane %v1117, %v1226
  %v1228 = vlaneseq
  %v1229 = vshrl.u32 %v1228, 7
  %v1230 = vsub.s32 %v603, %v1229
  %v1231 = vrot.slane %v1120, %v1230
  %v1232 = vlaneseq
  %v1233 = vshrl.u32 %v1232, 7
  %v1234 = vsub.s32 %v603, %v1233
  %v1235 = vrot.slane %v1123, %v1234
  %v1236 = vlaneseq
  %v1237 = vshrl.u32 %v1236, 7
  %v1238 = vsub.s32 %v603, %v1237
  %v1239 = vrot.slane %v1126, %v1238
  %v1240 = vlaneseq
  %v1241 = vshrl.u32 %v1240, 7
  %v1242 = vsub.s32 %v603, %v1241
  %v1243 = vrot.slane %v1129, %v1242
  %v1244 = vlaneseq
  %v1245 = vshrl.u32 %v1244, 7
  %v1246 = vsub.s32 %v603, %v1245
  %v1247 = vrot.slane %v1132, %v1246
  %v1248 = vlaneseq
  %v1249 = vshrl.u32 %v1248, 7
  %v1250 = vsub.s32 %v603, %v1249
  %v1251 = vrot.slane %v1135, %v1250
  %v1252 = vlaneseq
  %v1253 = vshrl.u32 %v1252, 7
  %v1254 = vsub.s32 %v603, %v1253
  %v1255 = vrot.slane %v1138, %v1254
  %v1256 = vlaneseq
  %v1257 = vshrl.u32 %v1256, 7
  %v1258 = vsub.s32 %v603, %v1257
  %v1259 = vrot.slane %v1141, %v1258
  %v1260 = vlaneseq
  %v1261 = vshrl.u32 %v1260, 7
  %v1262 = vsub.s32 %v603, %v1261
  %v1263 = vrot.slane %v1144, %v1262
  %v1264 = vlaneseq
  %v1265 = vshrl.u32 %v1264, 7
  %v1266 = vsub.s32 %v603, %v1265
  %v1267 = vrot.slane %v1147, %v1266
  %v1268 = vlaneseq
  %v1269 = vshrl.u32 %v1268, 7
  %v1270 = vsub.s32 %v603, %v1269
  %v1271 = vrot.slane %v1150, %v1270
  %v1272 = vlaneseq
  %v1273 = vshrl.u32 %v1272, 7
  %v1274 = vsub.s32 %v603, %v1273
  %v1275 = vrot.slane %v1153, %v1274
  %v1276 = vlaneseq
  %v1277 = vshrl.u32 %v1276, 7
  %v1278 = vsub.s32 %v603, %v1277
  %v1279 = vrot.slane %v1156, %v1278
  %v1280 = vlaneseq
  %v1281 = vshrl.u32 %v1280, 7
  %v1282 = vsub.s32 %v603, %v1281
  %v1283 = vrot.slane %v1159, %v1282
  %v1284 = vlaneseq
  %v1285 = vshrl.u32 %v1284, 7
  %v1286 = vsub.s32 %v603, %v1285
  %v1287 = vrot.slane %v1162, %v1286
  %v1288 = vlaneseq
  %v1289 = vshrl.u32 %v1288, 7
  %v1290 = vsub.s32 %v603, %v1289
  %v1291 = vrot.slane %v1165, %v1290
  %v1292 = vlaneseq
  %v1293 = vshrl.u32 %v1292, 7
  %v1294 = vsub.s32 %v603, %v1293
  %v1295 = vrot.slane %v1168, %v1294
  %v1296 = vlaneseq
  %v1297 = vshrl.u32 %v1296, 7
  %v1298 = vsub.s32 %v603, %v1297
  %v1299 = vrot.slane %v1171, %v1298
  %v1300 = vsel %vm732, %v1179, %v1175
  %v1301 = vsel %vm734, %v1183, %v1300
  %v1302 = vsel %vm736, %v1187, %v1301
  %v1303 = vsel %vm738, %v1191, %v1302
  %v1304 = vsel %vm740, %v1195, %v1303
  %v1305 = vsel %vm742, %v1199, %v1304
  %v1306 = vsel %vm744, %v1203, %v1305
  %v1307 = vsel %vm732, %v1211, %v1207
  %v1308 = vsel %vm734, %v1215, %v1307
  %v1309 = vsel %vm736, %v1219, %v1308
  %v1310 = vsel %vm738, %v1223, %v1309
  %v1311 = vsel %vm740, %v1227, %v1310
  %v1312 = vsel %vm742, %v1231, %v1311
  %v1313 = vsel %vm744, %v1235, %v1312
  %v1314 = vsel %vm732, %v1243, %v1239
  %v1315 = vsel %vm734, %v1247, %v1314
  %v1316 = vsel %vm736, %v1251, %v1315
  %v1317 = vsel %vm738, %v1255, %v1316
  %v1318 = vsel %vm740, %v1259, %v1317
  %v1319 = vsel %vm742, %v1263, %v1318
  %v1320 = vsel %vm744, %v1267, %v1319
  %v1321 = vsel %vm732, %v1275, %v1271
  %v1322 = vsel %vm734, %v1279, %v1321
  %v1323 = vsel %vm736, %v1283, %v1322
  %v1324 = vsel %vm738, %v1287, %v1323
  %v1325 = vsel %vm740, %v1291, %v1324
  %v1326 = vsel %vm742, %v1295, %v1325
  %v1327 = vsel %vm744, %v1299, %v1326
  %v1332 = vsel %vm771, %v1306, 0.0
  %1333 = vadd.xlane.f32.xlu0 %v1332
  %v1334 = vpop.xlane.xlu0 %1333
  %v1335 = vsel %vm771, %v1313, 0.0
  %1336 = vadd.xlane.f32.xlu0 %v1335
  %v1337 = vpop.xlane.xlu0 %1336
  %v1338 = vsel %vm771, %v1320, 0.0
  %1339 = vadd.xlane.f32.xlu0 %v1338
  %v1340 = vpop.xlane.xlu0 %1339
  %v1341 = vsel %vm771, %v1327, 0.0
  %1342 = vadd.xlane.f32.xlu0 %v1341
  %v1343 = vpop.xlane.xlu0 %1342
  %v1348 = vlaneseq
  %v1349 = vshrl.u32 %v1348, 7
  %v1350 = vsub.s32 0, %v1349
  %v1351 = vrot.slane %v1334, %v1350
  %v1352 = vlaneseq
  %v1353 = vshrl.u32 %v1352, 7
  %v1354 = vsub.s32 1, %v1353
  %v1355 = vrot.slane %v1334, %v1354
  %v1356 = vlaneseq
  %v1357 = vshrl.u32 %v1356, 7
  %v1358 = vsub.s32 2, %v1357
  %v1359 = vrot.slane %v1334, %v1358
  %v1360 = vlaneseq
  %v1361 = vshrl.u32 %v1360, 7
  %v1362 = vsub.s32 3, %v1361
  %v1363 = vrot.slane %v1334, %v1362
  %v1364 = vlaneseq
  %v1365 = vshrl.u32 %v1364, 7
  %v1366 = vsub.s32 4, %v1365
  %v1367 = vrot.slane %v1334, %v1366
  %v1368 = vlaneseq
  %v1369 = vshrl.u32 %v1368, 7
  %v1370 = vsub.s32 5, %v1369
  %v1371 = vrot.slane %v1334, %v1370
  %v1372 = vlaneseq
  %v1373 = vshrl.u32 %v1372, 7
  %v1374 = vsub.s32 6, %v1373
  %v1375 = vrot.slane %v1334, %v1374
  %v1376 = vlaneseq
  %v1377 = vshrl.u32 %v1376, 7
  %v1378 = vsub.s32 7, %v1377
  %v1379 = vrot.slane %v1334, %v1378
  %v1380 = vlaneseq
  %v1381 = vshrl.u32 %v1380, 7
  %v1382 = vsub.s32 0, %v1381
  %v1383 = vrot.slane %v1337, %v1382
  %v1384 = vlaneseq
  %v1385 = vshrl.u32 %v1384, 7
  %v1386 = vsub.s32 1, %v1385
  %v1387 = vrot.slane %v1337, %v1386
  %v1388 = vlaneseq
  %v1389 = vshrl.u32 %v1388, 7
  %v1390 = vsub.s32 2, %v1389
  %v1391 = vrot.slane %v1337, %v1390
  %v1392 = vlaneseq
  %v1393 = vshrl.u32 %v1392, 7
  %v1394 = vsub.s32 3, %v1393
  %v1395 = vrot.slane %v1337, %v1394
  %v1396 = vlaneseq
  %v1397 = vshrl.u32 %v1396, 7
  %v1398 = vsub.s32 4, %v1397
  %v1399 = vrot.slane %v1337, %v1398
  %v1400 = vlaneseq
  %v1401 = vshrl.u32 %v1400, 7
  %v1402 = vsub.s32 5, %v1401
  %v1403 = vrot.slane %v1337, %v1402
  %v1404 = vlaneseq
  %v1405 = vshrl.u32 %v1404, 7
  %v1406 = vsub.s32 6, %v1405
  %v1407 = vrot.slane %v1337, %v1406
  %v1408 = vlaneseq
  %v1409 = vshrl.u32 %v1408, 7
  %v1410 = vsub.s32 7, %v1409
  %v1411 = vrot.slane %v1337, %v1410
  %v1412 = vlaneseq
  %v1413 = vshrl.u32 %v1412, 7
  %v1414 = vsub.s32 0, %v1413
  %v1415 = vrot.slane %v1340, %v1414
  %v1416 = vlaneseq
  %v1417 = vshrl.u32 %v1416, 7
  %v1418 = vsub.s32 1, %v1417
  %v1419 = vrot.slane %v1340, %v1418
  %v1420 = vlaneseq
  %v1421 = vshrl.u32 %v1420, 7
  %v1422 = vsub.s32 2, %v1421
  %v1423 = vrot.slane %v1340, %v1422
  %v1424 = vlaneseq
  %v1425 = vshrl.u32 %v1424, 7
  %v1426 = vsub.s32 3, %v1425
  %v1427 = vrot.slane %v1340, %v1426
  %v1428 = vlaneseq
  %v1429 = vshrl.u32 %v1428, 7
  %v1430 = vsub.s32 4, %v1429
  %v1431 = vrot.slane %v1340, %v1430
  %v1432 = vlaneseq
  %v1433 = vshrl.u32 %v1432, 7
  %v1434 = vsub.s32 5, %v1433
  %v1435 = vrot.slane %v1340, %v1434
  %v1436 = vlaneseq
  %v1437 = vshrl.u32 %v1436, 7
  %v1438 = vsub.s32 6, %v1437
  %v1439 = vrot.slane %v1340, %v1438
  %v1440 = vlaneseq
  %v1441 = vshrl.u32 %v1440, 7
  %v1442 = vsub.s32 7, %v1441
  %v1443 = vrot.slane %v1340, %v1442
  %v1444 = vlaneseq
  %v1445 = vshrl.u32 %v1444, 7
  %v1446 = vsub.s32 0, %v1445
  %v1447 = vrot.slane %v1343, %v1446
  %v1448 = vlaneseq
  %v1449 = vshrl.u32 %v1448, 7
  %v1450 = vsub.s32 1, %v1449
  %v1451 = vrot.slane %v1343, %v1450
  %v1452 = vlaneseq
  %v1453 = vshrl.u32 %v1452, 7
  %v1454 = vsub.s32 2, %v1453
  %v1455 = vrot.slane %v1343, %v1454
  %v1456 = vlaneseq
  %v1457 = vshrl.u32 %v1456, 7
  %v1458 = vsub.s32 3, %v1457
  %v1459 = vrot.slane %v1343, %v1458
  %v1460 = vlaneseq
  %v1461 = vshrl.u32 %v1460, 7
  %v1462 = vsub.s32 4, %v1461
  %v1463 = vrot.slane %v1343, %v1462
  %v1464 = vlaneseq
  %v1465 = vshrl.u32 %v1464, 7
  %v1466 = vsub.s32 5, %v1465
  %v1467 = vrot.slane %v1343, %v1466
  %v1468 = vlaneseq
  %v1469 = vshrl.u32 %v1468, 7
  %v1470 = vsub.s32 6, %v1469
  %v1471 = vrot.slane %v1343, %v1470
  %v1472 = vlaneseq
  %v1473 = vshrl.u32 %v1472, 7
  %v1474 = vsub.s32 7, %v1473
  %v1475 = vrot.slane %v1343, %v1474
  %v1508 = vrcp.pop %v1351
  %v1509 = vmul.f32 %v981, %v1508
  %v1510 = vrcp.pop %v1355
  %v1511 = vmul.f32 %v983, %v1510
  %v1512 = vrcp.pop %v1359
  %v1513 = vmul.f32 %v985, %v1512
  %v1514 = vrcp.pop %v1363
  %v1515 = vmul.f32 %v987, %v1514
  %v1516 = vrcp.pop %v1367
  %v1517 = vmul.f32 %v989, %v1516
  %v1518 = vrcp.pop %v1371
  %v1519 = vmul.f32 %v991, %v1518
  %v1520 = vrcp.pop %v1375
  %v1521 = vmul.f32 %v993, %v1520
  %v1522 = vrcp.pop %v1379
  %v1523 = vmul.f32 %v995, %v1522
  %v1524 = vrcp.pop %v1383
  %v1525 = vmul.f32 %v997, %v1524
  %v1526 = vrcp.pop %v1387
  %v1527 = vmul.f32 %v999, %v1526
  %v1528 = vrcp.pop %v1391
  %v1529 = vmul.f32 %v1001, %v1528
  %v1530 = vrcp.pop %v1395
  %v1531 = vmul.f32 %v1003, %v1530
  %v1532 = vrcp.pop %v1399
  %v1533 = vmul.f32 %v1005, %v1532
  %v1534 = vrcp.pop %v1403
  %v1535 = vmul.f32 %v1007, %v1534
  %v1536 = vrcp.pop %v1407
  %v1537 = vmul.f32 %v1009, %v1536
  %v1538 = vrcp.pop %v1411
  %v1539 = vmul.f32 %v1011, %v1538
  %v1540 = vrcp.pop %v1415
  %v1541 = vmul.f32 %v1013, %v1540
  %v1542 = vrcp.pop %v1419
  %v1543 = vmul.f32 %v1015, %v1542
  %v1544 = vrcp.pop %v1423
  %v1545 = vmul.f32 %v1017, %v1544
  %v1546 = vrcp.pop %v1427
  %v1547 = vmul.f32 %v1019, %v1546
  %v1548 = vrcp.pop %v1431
  %v1549 = vmul.f32 %v1021, %v1548
  %v1550 = vrcp.pop %v1435
  %v1551 = vmul.f32 %v1023, %v1550
  %v1552 = vrcp.pop %v1439
  %v1553 = vmul.f32 %v1025, %v1552
  %v1554 = vrcp.pop %v1443
  %v1555 = vmul.f32 %v1027, %v1554
  %v1556 = vrcp.pop %v1447
  %v1557 = vmul.f32 %v1029, %v1556
  %v1558 = vrcp.pop %v1451
  %v1559 = vmul.f32 %v1031, %v1558
  %v1560 = vrcp.pop %v1455
  %v1561 = vmul.f32 %v1033, %v1560
  %v1562 = vrcp.pop %v1459
  %v1563 = vmul.f32 %v1035, %v1562
  %v1564 = vrcp.pop %v1463
  %v1565 = vmul.f32 %v1037, %v1564
  %v1566 = vrcp.pop %v1467
  %v1567 = vmul.f32 %v1039, %v1566
  %v1568 = vrcp.pop %v1471
  %v1569 = vmul.f32 %v1041, %v1568
  %v1570 = vrcp.pop %v1475
  %v1571 = vmul.f32 %v1043, %v1570
  %v1604 = vmul.f32 %v508, %v14
  %v1605 = vmul.f32 %v511, %v15
  %v1606 = vmul.f32 %v514, %v16
  %v1607 = vmul.f32 %v517, %v17
  %v1608 = vmul.f32 %v520, %v18
  %v1609 = vmul.f32 %v523, %v19
  %v1610 = vmul.f32 %v526, %v20
  %v1611 = vmul.f32 %v529, %v21
  %v1612 = vmul.f32 %v532, %v22
  %v1613 = vmul.f32 %v535, %v23
  %v1614 = vmul.f32 %v538, %v24
  %v1615 = vmul.f32 %v541, %v25
  %v1616 = vmul.f32 %v544, %v26
  %v1617 = vmul.f32 %v547, %v27
  %v1618 = vmul.f32 %v550, %v28
  %v1619 = vmul.f32 %v553, %v29
  %v1620 = vmul.f32 %v556, %v30
  %v1621 = vmul.f32 %v559, %v31
  %v1622 = vmul.f32 %v562, %v32
  %v1623 = vmul.f32 %v565, %v33
  %v1624 = vmul.f32 %v568, %v34
  %v1625 = vmul.f32 %v571, %v35
  %v1626 = vmul.f32 %v574, %v36
  %v1627 = vmul.f32 %v577, %v37
  %v1628 = vmul.f32 %v580, %v38
  %v1629 = vmul.f32 %v583, %v39
  %v1630 = vmul.f32 %v586, %v40
  %v1631 = vmul.f32 %v589, %v41
  %v1632 = vmul.f32 %v592, %v42
  %v1633 = vmul.f32 %v595, %v43
  %v1634 = vmul.f32 %v598, %v44
  %v1635 = vmul.f32 %v601, %v45
  %1636 = vset.pattern.permute.xlu0 1
  %1637 = vperm.xlu0 %1636, %v442
  %v1638 = vpop.permute.xlu0 %1637
  %1640 = vset.pattern.permute.xlu0 1
  %1641 = vperm.xlu0 %1640, %v443
  %v1642 = vpop.permute.xlu0 %1641
  %1644 = vset.pattern.permute.xlu0 1
  %1645 = vperm.xlu0 %1644, %v444
  %v1646 = vpop.permute.xlu0 %1645
  %1648 = vset.pattern.permute.xlu0 1
  %1649 = vperm.xlu0 %1648, %v445
  %v1650 = vpop.permute.xlu0 %1649
  %1652 = vset.pattern.permute.xlu0 1
  %1653 = vperm.xlu0 %1652, %v446
  %v1654 = vpop.permute.xlu0 %1653
  %1656 = vset.pattern.permute.xlu0 1
  %1657 = vperm.xlu0 %1656, %v447
  %v1658 = vpop.permute.xlu0 %1657
  %1660 = vset.pattern.permute.xlu0 1
  %1661 = vperm.xlu0 %1660, %v448
  %v1662 = vpop.permute.xlu0 %1661
  %1664 = vset.pattern.permute.xlu0 1
  %1665 = vperm.xlu0 %1664, %v449
  %v1666 = vpop.permute.xlu0 %1665
  %1668 = vset.pattern.permute.xlu0 1
  %1669 = vperm.xlu0 %1668, %v450
  %v1670 = vpop.permute.xlu0 %1669
  %1672 = vset.pattern.permute.xlu0 1
  %1673 = vperm.xlu0 %1672, %v451
  %v1674 = vpop.permute.xlu0 %1673
  %1676 = vset.pattern.permute.xlu0 1
  %1677 = vperm.xlu0 %1676, %v452
  %v1678 = vpop.permute.xlu0 %1677
  %1680 = vset.pattern.permute.xlu0 1
  %1681 = vperm.xlu0 %1680, %v453
  %v1682 = vpop.permute.xlu0 %1681
  %1684 = vset.pattern.permute.xlu0 1
  %1685 = vperm.xlu0 %1684, %v454
  %v1686 = vpop.permute.xlu0 %1685
  %1688 = vset.pattern.permute.xlu0 1
  %1689 = vperm.xlu0 %1688, %v455
  %v1690 = vpop.permute.xlu0 %1689
  %1692 = vset.pattern.permute.xlu0 1
  %1693 = vperm.xlu0 %1692, %v456
  %v1694 = vpop.permute.xlu0 %1693
  %1696 = vset.pattern.permute.xlu0 1
  %1697 = vperm.xlu0 %1696, %v457
  %v1698 = vpop.permute.xlu0 %1697
  %1700 = vset.pattern.permute.xlu0 1
  %1701 = vperm.xlu0 %1700, %v458
  %v1702 = vpop.permute.xlu0 %1701
  %1704 = vset.pattern.permute.xlu0 1
  %1705 = vperm.xlu0 %1704, %v459
  %v1706 = vpop.permute.xlu0 %1705
  %1708 = vset.pattern.permute.xlu0 1
  %1709 = vperm.xlu0 %1708, %v460
  %v1710 = vpop.permute.xlu0 %1709
  %1712 = vset.pattern.permute.xlu0 1
  %1713 = vperm.xlu0 %1712, %v461
  %v1714 = vpop.permute.xlu0 %1713
  %1716 = vset.pattern.permute.xlu0 1
  %1717 = vperm.xlu0 %1716, %v462
  %v1718 = vpop.permute.xlu0 %1717
  %1720 = vset.pattern.permute.xlu0 1
  %1721 = vperm.xlu0 %1720, %v463
  %v1722 = vpop.permute.xlu0 %1721
  %1724 = vset.pattern.permute.xlu0 1
  %1725 = vperm.xlu0 %1724, %v464
  %v1726 = vpop.permute.xlu0 %1725
  %1728 = vset.pattern.permute.xlu0 1
  %1729 = vperm.xlu0 %1728, %v465
  %v1730 = vpop.permute.xlu0 %1729
  %1732 = vset.pattern.permute.xlu0 1
  %1733 = vperm.xlu0 %1732, %v466
  %v1734 = vpop.permute.xlu0 %1733
  %1736 = vset.pattern.permute.xlu0 1
  %1737 = vperm.xlu0 %1736, %v467
  %v1738 = vpop.permute.xlu0 %1737
  %1740 = vset.pattern.permute.xlu0 1
  %1741 = vperm.xlu0 %1740, %v468
  %v1742 = vpop.permute.xlu0 %1741
  %1744 = vset.pattern.permute.xlu0 1
  %1745 = vperm.xlu0 %1744, %v469
  %v1746 = vpop.permute.xlu0 %1745
  %1748 = vset.pattern.permute.xlu0 1
  %1749 = vperm.xlu0 %1748, %v470
  %v1750 = vpop.permute.xlu0 %1749
  %1752 = vset.pattern.permute.xlu0 1
  %1753 = vperm.xlu0 %1752, %v471
  %v1754 = vpop.permute.xlu0 %1753
  %1756 = vset.pattern.permute.xlu0 1
  %1757 = vperm.xlu0 %1756, %v472
  %v1758 = vpop.permute.xlu0 %1757
  %1760 = vset.pattern.permute.xlu0 1
  %1761 = vperm.xlu0 %1760, %v473
  %v1762 = vpop.permute.xlu0 %1761
  %v1764 = vmul.f32 %v1638, %v14
  %v1765 = vmul.f32 %v1638, %v46
  %v1766 = vmul.f32 %v1638, %v47
  %v1767 = vmul.f32 %v1642, %v15
  %v1768 = vmul.f32 %v1642, %v48
  %v1769 = vmul.f32 %v1642, %v49
  %v1770 = vmul.f32 %v1646, %v16
  %v1771 = vmul.f32 %v1646, %v50
  %v1772 = vmul.f32 %v1646, %v51
  %v1773 = vmul.f32 %v1650, %v17
  %v1774 = vmul.f32 %v1650, %v52
  %v1775 = vmul.f32 %v1650, %v53
  %v1776 = vmul.f32 %v1654, %v18
  %v1777 = vmul.f32 %v1654, %v54
  %v1778 = vmul.f32 %v1654, %v55
  %v1779 = vmul.f32 %v1658, %v19
  %v1780 = vmul.f32 %v1658, %v56
  %v1781 = vmul.f32 %v1658, %v57
  %v1782 = vmul.f32 %v1662, %v20
  %v1783 = vmul.f32 %v1662, %v58
  %v1784 = vmul.f32 %v1662, %v59
  %v1785 = vmul.f32 %v1666, %v21
  %v1786 = vmul.f32 %v1666, %v60
  %v1787 = vmul.f32 %v1666, %v61
  %v1788 = vmul.f32 %v1670, %v22
  %v1789 = vmul.f32 %v1670, %v62
  %v1790 = vmul.f32 %v1670, %v63
  %v1791 = vmul.f32 %v1674, %v23
  %v1792 = vmul.f32 %v1674, %v64
  %v1793 = vmul.f32 %v1674, %v65
  %v1794 = vmul.f32 %v1678, %v24
  %v1795 = vmul.f32 %v1678, %v66
  %v1796 = vmul.f32 %v1678, %v67
  %v1797 = vmul.f32 %v1682, %v25
  %v1798 = vmul.f32 %v1682, %v68
  %v1799 = vmul.f32 %v1682, %v69
  %v1800 = vmul.f32 %v1686, %v26
  %v1801 = vmul.f32 %v1686, %v70
  %v1802 = vmul.f32 %v1686, %v71
  %v1803 = vmul.f32 %v1690, %v27
  %v1804 = vmul.f32 %v1690, %v72
  %v1805 = vmul.f32 %v1690, %v73
  %v1806 = vmul.f32 %v1694, %v28
  %v1807 = vmul.f32 %v1694, %v74
  %v1808 = vmul.f32 %v1694, %v75
  %v1809 = vmul.f32 %v1698, %v29
  %v1810 = vmul.f32 %v1698, %v76
  %v1811 = vmul.f32 %v1698, %v77
  %v1812 = vmul.f32 %v1702, %v30
  %v1813 = vmul.f32 %v1702, %v78
  %v1814 = vmul.f32 %v1702, %v79
  %v1815 = vmul.f32 %v1706, %v31
  %v1816 = vmul.f32 %v1706, %v80
  %v1817 = vmul.f32 %v1706, %v81
  %v1818 = vmul.f32 %v1710, %v32
  %v1819 = vmul.f32 %v1710, %v82
  %v1820 = vmul.f32 %v1710, %v83
  %v1821 = vmul.f32 %v1714, %v33
  %v1822 = vmul.f32 %v1714, %v84
  %v1823 = vmul.f32 %v1714, %v85
  %v1824 = vmul.f32 %v1718, %v34
  %v1825 = vmul.f32 %v1718, %v86
  %v1826 = vmul.f32 %v1718, %v87
  %v1827 = vmul.f32 %v1722, %v35
  %v1828 = vmul.f32 %v1722, %v88
  %v1829 = vmul.f32 %v1722, %v89
  %v1830 = vmul.f32 %v1726, %v36
  %v1831 = vmul.f32 %v1726, %v90
  %v1832 = vmul.f32 %v1726, %v91
  %v1833 = vmul.f32 %v1730, %v37
  %v1834 = vmul.f32 %v1730, %v92
  %v1835 = vmul.f32 %v1730, %v93
  %v1836 = vmul.f32 %v1734, %v38
  %v1837 = vmul.f32 %v1734, %v94
  %v1838 = vmul.f32 %v1734, %v95
  %v1839 = vmul.f32 %v1738, %v39
  %v1840 = vmul.f32 %v1738, %v96
  %v1841 = vmul.f32 %v1738, %v97
  %v1842 = vmul.f32 %v1742, %v40
  %v1843 = vmul.f32 %v1742, %v98
  %v1844 = vmul.f32 %v1742, %v99
  %v1845 = vmul.f32 %v1746, %v41
  %v1846 = vmul.f32 %v1746, %v100
  %v1847 = vmul.f32 %v1746, %v101
  %v1848 = vmul.f32 %v1750, %v42
  %v1849 = vmul.f32 %v1750, %v102
  %v1850 = vmul.f32 %v1750, %v103
  %v1851 = vmul.f32 %v1754, %v43
  %v1852 = vmul.f32 %v1754, %v104
  %v1853 = vmul.f32 %v1754, %v105
  %v1854 = vmul.f32 %v1758, %v44
  %v1855 = vmul.f32 %v1758, %v106
  %v1856 = vmul.f32 %v1758, %v107
  %v1857 = vmul.f32 %v1762, %v45
  %v1858 = vmul.f32 %v1762, %v108
  %v1859 = vmul.f32 %v1762, %v109
  %v1860 = vld [vmem:[%s1] sm:$0xff]
  %v1861 = vld [vmem:[%s1 + $0x8] sm:$0xff]
  %v1862 = vld [vmem:[%s1 + $0x10] sm:$0xff]
  %v1863 = vld [vmem:[%s1 + $0x18] sm:$0xff]
  %v1865 = vsel %vm116, %v1604, 0
  %v1868 = vsel %vm116, %v1605, 0
  %v1871 = vsel %vm116, %v1606, 0
  %v1874 = vsel %vm116, %v1607, 0
  %v1877 = vsel %vm116, %v1608, 0
  %v1880 = vsel %vm116, %v1609, 0
  %v1883 = vsel %vm116, %v1610, 0
  %v1886 = vsel %vm116, %v1611, 0
  %v1889 = vsel %vm116, %v1612, 0
  %v1892 = vsel %vm116, %v1613, 0
  %v1895 = vsel %vm116, %v1614, 0
  %v1898 = vsel %vm116, %v1615, 0
  %v1901 = vsel %vm116, %v1616, 0
  %v1904 = vsel %vm116, %v1617, 0
  %v1907 = vsel %vm116, %v1618, 0
  %v1910 = vsel %vm116, %v1619, 0
  %v1913 = vsel %vm116, %v1620, 0
  %v1916 = vsel %vm116, %v1621, 0
  %v1919 = vsel %vm116, %v1622, 0
  %v1922 = vsel %vm116, %v1623, 0
  %v1925 = vsel %vm116, %v1624, 0
  %v1928 = vsel %vm116, %v1625, 0
  %v1931 = vsel %vm116, %v1626, 0
  %v1934 = vsel %vm116, %v1627, 0
  %v1937 = vsel %vm116, %v1628, 0
  %v1940 = vsel %vm116, %v1629, 0
  %v1943 = vsel %vm116, %v1630, 0
  %v1946 = vsel %vm116, %v1631, 0
  %v1949 = vsel %vm116, %v1632, 0
  %v1952 = vsel %vm116, %v1633, 0
  %v1955 = vsel %vm116, %v1634, 0
  %v1958 = vsel %vm116, %v1635, 0
  %1960 = vmatprep.subr.mxu0 0.0
  %1961 = vmatpush1.msra.mxu0 %v1860
  %1962 = vmatprep.subr.mxu0 0.0
  %1963 = vmatpush1.msra.mxu0 %v1861
  %1964 = vmatprep.subr.mxu0 0.0
  %1965 = vmatpush1.msra.mxu0 %v1862
  %1966 = vmatprep.subr.mxu0 0.0
  %1967 = vmatpush1.msra.mxu0 %v1863
  %1968 = vmatprep.subr.mxu0 0.0
  %1969 = vmatpush1.msra.mxu0 0.0
  %1970 = vmatprep.subr.mxu0 0.0
  %1971 = vmatpush1.msra.mxu0 0.0
  %1972 = vmatprep.subr.mxu0 0.0
  %1973 = vmatpush1.msra.mxu0 0.0
  %1974 = vmatprep.subr.mxu0 0.0
  %1975 = vmatpush1.msra.mxu0 0.0
  %1976 = vmatprep.subr.mxu0 0.0
  %1977 = vmatpush1.msra.mxu0 0.0
  %1978 = vmatprep.subr.mxu0 0.0
  %1979 = vmatpush1.msra.mxu0 0.0
  %1980 = vmatprep.subr.mxu0 0.0
  %1981 = vmatpush1.msra.mxu0 0.0
  %1982 = vmatprep.subr.mxu0 0.0
  %1983 = vmatpush1.msra.mxu0 0.0
  %1984 = vmatprep.subr.mxu0 0.0
  %1985 = vmatpush1.msra.mxu0 0.0
  %1986 = vmatprep.subr.mxu0 0.0
  %1987 = vmatpush1.msra.mxu0 0.0
  %1988 = vmatprep.subr.mxu0 0.0
  %1989 = vmatpush1.msra.mxu0 0.0
  %1990 = vmatprep.subr.mxu0 0.0
  %1991 = vmatpush1.msra.mxu0 0.0
  %1992 = vmatprep.subr.mxu0 0.0
  %1993 = vmatpush1.msra.mxu0 0.0
  %1994 = vmatprep.subr.mxu0 0.0
  %1995 = vmatpush1.msra.mxu0 0.0
  %1996 = vmatprep.subr.mxu0 0.0
  %1997 = vmatpush1.msra.mxu0 0.0
  %1998 = vmatprep.subr.mxu0 0.0
  %1999 = vmatpush1.msra.mxu0 0.0
  %2000 = vmatprep.subr.mxu0 0.0
  %2001 = vmatpush1.msra.mxu0 0.0
  %2002 = vmatprep.subr.mxu0 0.0
  %2003 = vmatpush1.msra.mxu0 0.0
  %2004 = vmatprep.subr.mxu0 0.0
  %2005 = vmatpush1.msra.mxu0 0.0
  %2006 = vmatprep.subr.mxu0 0.0
  %2007 = vmatpush1.msra.mxu0 0.0
  %2008 = vmatprep.subr.mxu0 0.0
  %2009 = vmatpush1.msra.mxu0 0.0
  %2010 = vmatprep.subr.mxu0 0.0
  %2011 = vmatpush1.msra.mxu0 0.0
  %2012 = vmatprep.subr.mxu0 0.0
  %2013 = vmatpush1.msra.mxu0 0.0
  %2014 = vmatprep.subr.mxu0 0.0
  %2015 = vmatpush1.msra.mxu0 0.0
  %2016 = vmatprep.subr.mxu0 0.0
  %2017 = vmatpush1.msra.mxu0 0.0
  %2018 = vmatprep.subr.mxu0 0.0
  %2019 = vmatpush1.msra.mxu0 0.0
  %2020 = vmatprep.subr.mxu0 0.0
  %2021 = vmatpush1.msra.mxu0 0.0
  %2022 = vmatprep.subr.mxu0 0.0
  %2023 = vmatpush1.msra.mxu0 0.0
  %2024 = vmatprep.mubr.f32.mxu0 0.0
  %2025 = vmatmul.mubr.f32.gmra.mrb[0].mxu0 %v1865
  %v2026 = vpop.f32.mrb[0].mxu0
  %v2027 = vadd.f32 0.0, %v2026
  %v2028 = vpop.f32.mrb[0].mxu0
  %2029 = vmatprep.mubr.f32.mxu0 0.0
  %2030 = vmatmul.mubr.f32.gmra.mrb[0].mxu0 %v1868
  %v2031 = vpop.f32.mrb[0].mxu0
  %v2032 = vadd.f32 0.0, %v2031
  %v2033 = vpop.f32.mrb[0].mxu0
  %2034 = vmatprep.mubr.f32.mxu0 0.0
  %2035 = vmatmul.mubr.f32.gmra.mrb[0].mxu0 %v1871
  %v2036 = vpop.f32.mrb[0].mxu0
  %v2037 = vadd.f32 0.0, %v2036
  %v2038 = vpop.f32.mrb[0].mxu0
  %2039 = vmatprep.mubr.f32.mxu0 0.0
  %2040 = vmatmul.mubr.f32.gmra.mrb[0].mxu0 %v1874
  %v2041 = vpop.f32.mrb[0].mxu0
  %v2042 = vadd.f32 0.0, %v2041
  %v2043 = vpop.f32.mrb[0].mxu0
  %2044 = vmatprep.mubr.f32.mxu0 0.0
  %2045 = vmatmul.mubr.f32.gmra.mrb[0].mxu0 %v1877
  %v2046 = vpop.f32.mrb[0].mxu0
  %v2047 = vadd.f32 0.0, %v2046
  %v2048 = vpop.f32.mrb[0].mxu0
  %2049 = vmatprep.mubr.f32.mxu0 0.0
  %2050 = vmatmul.mubr.f32.gmra.mrb[0].mxu0 %v1880
  %v2051 = vpop.f32.mrb[0].mxu0
  %v2052 = vadd.f32 0.0, %v2051
  %v2053 = vpop.f32.mrb[0].mxu0
  %2054 = vmatprep.mubr.f32.mxu0 0.0
  %2055 = vmatmul.mubr.f32.gmra.mrb[0].mxu0 %v1883
  %v2056 = vpop.f32.mrb[0].mxu0
  %v2057 = vadd.f32 0.0, %v2056
  %v2058 = vpop.f32.mrb[0].mxu0
  %2059 = vmatprep.mubr.f32.mxu0 0.0
  %2060 = vmatmul.mubr.f32.gmra.mrb[0].mxu0 %v1886
  %v2061 = vpop.f32.mrb[0].mxu0
  %v2062 = vadd.f32 0.0, %v2061
  %v2063 = vpop.f32.mrb[0].mxu0
  %2064 = vmatprep.mubr.f32.mxu0 0.0
  %2065 = vmatmul.mubr.f32.gmra.mrb[0].mxu0 %v1889
  %v2066 = vpop.f32.mrb[0].mxu0
  %v2067 = vadd.f32 0.0, %v2066
  %v2068 = vpop.f32.mrb[0].mxu0
  %2069 = vmatprep.mubr.f32.mxu0 0.0
  %2070 = vmatmul.mubr.f32.gmra.mrb[0].mxu0 %v1892
  %v2071 = vpop.f32.mrb[0].mxu0
  %v2072 = vadd.f32 0.0, %v2071
  %v2073 = vpop.f32.mrb[0].mxu0
  %2074 = vmatprep.mubr.f32.mxu0 0.0
  %2075 = vmatmul.mubr.f32.gmra.mrb[0].mxu0 %v1895
  %v2076 = vpop.f32.mrb[0].mxu0
  %v2077 = vadd.f32 0.0, %v2076
  %v2078 = vpop.f32.mrb[0].mxu0
  %2079 = vmatprep.mubr.f32.mxu0 0.0
  %2080 = vmatmul.mubr.f32.gmra.mrb[0].mxu0 %v1898
  %v2081 = vpop.f32.mrb[0].mxu0
  %v2082 = vadd.f32 0.0, %v2081
  %v2083 = vpop.f32.mrb[0].mxu0
  %2084 = vmatprep.mubr.f32.mxu0 0.0
  %2085 = vmatmul.mubr.f32.gmra.mrb[0].mxu0 %v1901
  %v2086 = vpop.f32.mrb[0].mxu0
  %v2087 = vadd.f32 0.0, %v2086
  %v2088 = vpop.f32.mrb[0].mxu0
  %2089 = vmatprep.mubr.f32.mxu0 0.0
  %2090 = vmatmul.mubr.f32.gmra.mrb[0].mxu0 %v1904
  %v2091 = vpop.f32.mrb[0].mxu0
  %v2092 = vadd.f32 0.0, %v2091
  %v2093 = vpop.f32.mrb[0].mxu0
  %2094 = vmatprep.mubr.f32.mxu0 0.0
  %2095 = vmatmul.mubr.f32.gmra.mrb[0].mxu0 %v1907
  %v2096 = vpop.f32.mrb[0].mxu0
  %v2097 = vadd.f32 0.0, %v2096
  %v2098 = vpop.f32.mrb[0].mxu0
  %2099 = vmatprep.mubr.f32.mxu0 0.0
  %2100 = vmatmul.mubr.f32.gmra.mrb[0].mxu0 %v1910
  %v2101 = vpop.f32.mrb[0].mxu0
  %v2102 = vadd.f32 0.0, %v2101
  %v2103 = vpop.f32.mrb[0].mxu0
  %2104 = vmatprep.mubr.f32.mxu0 0.0
  %2105 = vmatmul.mubr.f32.gmra.mrb[0].mxu0 %v1913
  %v2106 = vpop.f32.mrb[0].mxu0
  %v2107 = vadd.f32 0.0, %v2106
  %v2108 = vpop.f32.mrb[0].mxu0
  %2109 = vmatprep.mubr.f32.mxu0 0.0
  %2110 = vmatmul.mubr.f32.gmra.mrb[0].mxu0 %v1916
  %v2111 = vpop.f32.mrb[0].mxu0
  %v2112 = vadd.f32 0.0, %v2111
  %v2113 = vpop.f32.mrb[0].mxu0
  %2114 = vmatprep.mubr.f32.mxu0 0.0
  %2115 = vmatmul.mubr.f32.gmra.mrb[0].mxu0 %v1919
  %v2116 = vpop.f32.mrb[0].mxu0
  %v2117 = vadd.f32 0.0, %v2116
  %v2118 = vpop.f32.mrb[0].mxu0
  %2119 = vmatprep.mubr.f32.mxu0 0.0
  %2120 = vmatmul.mubr.f32.gmra.mrb[0].mxu0 %v1922
  %v2121 = vpop.f32.mrb[0].mxu0
  %v2122 = vadd.f32 0.0, %v2121
  %v2123 = vpop.f32.mrb[0].mxu0
  %2124 = vmatprep.mubr.f32.mxu0 0.0
  %2125 = vmatmul.mubr.f32.gmra.mrb[0].mxu0 %v1925
  %v2126 = vpop.f32.mrb[0].mxu0
  %v2127 = vadd.f32 0.0, %v2126
  %v2128 = vpop.f32.mrb[0].mxu0
  %2129 = vmatprep.mubr.f32.mxu0 0.0
  %2130 = vmatmul.mubr.f32.gmra.mrb[0].mxu0 %v1928
  %v2131 = vpop.f32.mrb[0].mxu0
  %v2132 = vadd.f32 0.0, %v2131
  %v2133 = vpop.f32.mrb[0].mxu0
  %2134 = vmatprep.mubr.f32.mxu0 0.0
  %2135 = vmatmul.mubr.f32.gmra.mrb[0].mxu0 %v1931
  %v2136 = vpop.f32.mrb[0].mxu0
  %v2137 = vadd.f32 0.0, %v2136
  %v2138 = vpop.f32.mrb[0].mxu0
  %2139 = vmatprep.mubr.f32.mxu0 0.0
  %2140 = vmatmul.mubr.f32.gmra.mrb[0].mxu0 %v1934
  %v2141 = vpop.f32.mrb[0].mxu0
  %v2142 = vadd.f32 0.0, %v2141
  %v2143 = vpop.f32.mrb[0].mxu0
  %2144 = vmatprep.mubr.f32.mxu0 0.0
  %2145 = vmatmul.mubr.f32.gmra.mrb[0].mxu0 %v1937
  %v2146 = vpop.f32.mrb[0].mxu0
  %v2147 = vadd.f32 0.0, %v2146
  %v2148 = vpop.f32.mrb[0].mxu0
  %2149 = vmatprep.mubr.f32.mxu0 0.0
  %2150 = vmatmul.mubr.f32.gmra.mrb[0].mxu0 %v1940
  %v2151 = vpop.f32.mrb[0].mxu0
  %v2152 = vadd.f32 0.0, %v2151
  %v2153 = vpop.f32.mrb[0].mxu0
  %2154 = vmatprep.mubr.f32.mxu0 0.0
  %2155 = vmatmul.mubr.f32.gmra.mrb[0].mxu0 %v1943
  %v2156 = vpop.f32.mrb[0].mxu0
  %v2157 = vadd.f32 0.0, %v2156
  %v2158 = vpop.f32.mrb[0].mxu0
  %2159 = vmatprep.mubr.f32.mxu0 0.0
  %2160 = vmatmul.mubr.f32.gmra.mrb[0].mxu0 %v1946
  %v2161 = vpop.f32.mrb[0].mxu0
  %v2162 = vadd.f32 0.0, %v2161
  %v2163 = vpop.f32.mrb[0].mxu0
  %2164 = vmatprep.mubr.f32.mxu0 0.0
  %2165 = vmatmul.mubr.f32.gmra.mrb[0].mxu0 %v1949
  %v2166 = vpop.f32.mrb[0].mxu0
  %v2167 = vadd.f32 0.0, %v2166
  %v2168 = vpop.f32.mrb[0].mxu0
  %2169 = vmatprep.mubr.f32.mxu0 0.0
  %2170 = vmatmul.mubr.f32.gmra.mrb[0].mxu0 %v1952
  %v2171 = vpop.f32.mrb[0].mxu0
  %v2172 = vadd.f32 0.0, %v2171
  %v2173 = vpop.f32.mrb[0].mxu0
  %2174 = vmatprep.mubr.f32.mxu0 0.0
  %2175 = vmatmul.mubr.f32.gmra.mrb[0].mxu0 %v1955
  %v2176 = vpop.f32.mrb[0].mxu0
  %v2177 = vadd.f32 0.0, %v2176
  %v2178 = vpop.f32.mrb[0].mxu0
  %2179 = vmatprep.mubr.f32.mxu0 0.0
  %2180 = vmatmul.mubr.f32.gmra.mrb[0].mxu0 %v1958
  %v2181 = vpop.f32.mrb[0].mxu0
  %v2182 = vadd.f32 0.0, %v2181
  %v2183 = vpop.f32.mrb[0].mxu0
  %2184 = vdwg.mxu0
  %v2185 = vld [vmem:[%s2] sm:$0x1]
  %v2186 = vlaneseq
  %v2187 = vshrl.u32 %v2186, 7
  %v2188 = vsub.s32 0, %v2187
  %v2189 = vrot.slane %v2185, %v2188
  %2286 = vrot.lane.b32.xlu0 %v1764, 96
  %v2287 = vpop.permute.xlu0 %2286
  %2288 = vrot.lane.b32.xlu0 %v1765, 96
  %v2289 = vpop.permute.xlu0 %2288
  %2290 = vrot.lane.b32.xlu0 %v1766, 96
  %v2291 = vpop.permute.xlu0 %2290
  %2292 = vrot.lane.b32.xlu0 %v1767, 96
  %v2293 = vpop.permute.xlu0 %2292
  %2294 = vrot.lane.b32.xlu0 %v1768, 96
  %v2295 = vpop.permute.xlu0 %2294
  %2296 = vrot.lane.b32.xlu0 %v1769, 96
  %v2297 = vpop.permute.xlu0 %2296
  %2298 = vrot.lane.b32.xlu0 %v1770, 96
  %v2299 = vpop.permute.xlu0 %2298
  %2300 = vrot.lane.b32.xlu0 %v1771, 96
  %v2301 = vpop.permute.xlu0 %2300
  %2302 = vrot.lane.b32.xlu0 %v1772, 96
  %v2303 = vpop.permute.xlu0 %2302
  %2304 = vrot.lane.b32.xlu0 %v1773, 96
  %v2305 = vpop.permute.xlu0 %2304
  %2306 = vrot.lane.b32.xlu0 %v1774, 96
  %v2307 = vpop.permute.xlu0 %2306
  %2308 = vrot.lane.b32.xlu0 %v1775, 96
  %v2309 = vpop.permute.xlu0 %2308
  %2310 = vrot.lane.b32.xlu0 %v1776, 96
  %v2311 = vpop.permute.xlu0 %2310
  %2312 = vrot.lane.b32.xlu0 %v1777, 96
  %v2313 = vpop.permute.xlu0 %2312
  %2314 = vrot.lane.b32.xlu0 %v1778, 96
  %v2315 = vpop.permute.xlu0 %2314
  %2316 = vrot.lane.b32.xlu0 %v1779, 96
  %v2317 = vpop.permute.xlu0 %2316
  %2318 = vrot.lane.b32.xlu0 %v1780, 96
  %v2319 = vpop.permute.xlu0 %2318
  %2320 = vrot.lane.b32.xlu0 %v1781, 96
  %v2321 = vpop.permute.xlu0 %2320
  %2322 = vrot.lane.b32.xlu0 %v1782, 96
  %v2323 = vpop.permute.xlu0 %2322
  %2324 = vrot.lane.b32.xlu0 %v1783, 96
  %v2325 = vpop.permute.xlu0 %2324
  %2326 = vrot.lane.b32.xlu0 %v1784, 96
  %v2327 = vpop.permute.xlu0 %2326
  %2328 = vrot.lane.b32.xlu0 %v1785, 96
  %v2329 = vpop.permute.xlu0 %2328
  %2330 = vrot.lane.b32.xlu0 %v1786, 96
  %v2331 = vpop.permute.xlu0 %2330
  %2332 = vrot.lane.b32.xlu0 %v1787, 96
  %v2333 = vpop.permute.xlu0 %2332
  %2334 = vrot.lane.b32.xlu0 %v1788, 96
  %v2335 = vpop.permute.xlu0 %2334
  %2336 = vrot.lane.b32.xlu0 %v1789, 96
  %v2337 = vpop.permute.xlu0 %2336
  %2338 = vrot.lane.b32.xlu0 %v1790, 96
  %v2339 = vpop.permute.xlu0 %2338
  %2340 = vrot.lane.b32.xlu0 %v1791, 96
  %v2341 = vpop.permute.xlu0 %2340
  %2342 = vrot.lane.b32.xlu0 %v1792, 96
  %v2343 = vpop.permute.xlu0 %2342
  %2344 = vrot.lane.b32.xlu0 %v1793, 96
  %v2345 = vpop.permute.xlu0 %2344
  %2346 = vrot.lane.b32.xlu0 %v1794, 96
  %v2347 = vpop.permute.xlu0 %2346
  %2348 = vrot.lane.b32.xlu0 %v1795, 96
  %v2349 = vpop.permute.xlu0 %2348
  %2350 = vrot.lane.b32.xlu0 %v1796, 96
  %v2351 = vpop.permute.xlu0 %2350
  %2352 = vrot.lane.b32.xlu0 %v1797, 96
  %v2353 = vpop.permute.xlu0 %2352
  %2354 = vrot.lane.b32.xlu0 %v1798, 96
  %v2355 = vpop.permute.xlu0 %2354
  %2356 = vrot.lane.b32.xlu0 %v1799, 96
  %v2357 = vpop.permute.xlu0 %2356
  %2358 = vrot.lane.b32.xlu0 %v1800, 96
  %v2359 = vpop.permute.xlu0 %2358
  %2360 = vrot.lane.b32.xlu0 %v1801, 96
  %v2361 = vpop.permute.xlu0 %2360
  %2362 = vrot.lane.b32.xlu0 %v1802, 96
  %v2363 = vpop.permute.xlu0 %2362
  %2364 = vrot.lane.b32.xlu0 %v1803, 96
  %v2365 = vpop.permute.xlu0 %2364
  %2366 = vrot.lane.b32.xlu0 %v1804, 96
  %v2367 = vpop.permute.xlu0 %2366
  %2368 = vrot.lane.b32.xlu0 %v1805, 96
  %v2369 = vpop.permute.xlu0 %2368
  %2370 = vrot.lane.b32.xlu0 %v1806, 96
  %v2371 = vpop.permute.xlu0 %2370
  %2372 = vrot.lane.b32.xlu0 %v1807, 96
  %v2373 = vpop.permute.xlu0 %2372
  %2374 = vrot.lane.b32.xlu0 %v1808, 96
  %v2375 = vpop.permute.xlu0 %2374
  %2376 = vrot.lane.b32.xlu0 %v1809, 96
  %v2377 = vpop.permute.xlu0 %2376
  %2378 = vrot.lane.b32.xlu0 %v1810, 96
  %v2379 = vpop.permute.xlu0 %2378
  %2380 = vrot.lane.b32.xlu0 %v1811, 96
  %v2381 = vpop.permute.xlu0 %2380
  %2382 = vrot.lane.b32.xlu0 %v1812, 96
  %v2383 = vpop.permute.xlu0 %2382
  %2384 = vrot.lane.b32.xlu0 %v1813, 96
  %v2385 = vpop.permute.xlu0 %2384
  %2386 = vrot.lane.b32.xlu0 %v1814, 96
  %v2387 = vpop.permute.xlu0 %2386
  %2388 = vrot.lane.b32.xlu0 %v1815, 96
  %v2389 = vpop.permute.xlu0 %2388
  %2390 = vrot.lane.b32.xlu0 %v1816, 96
  %v2391 = vpop.permute.xlu0 %2390
  %2392 = vrot.lane.b32.xlu0 %v1817, 96
  %v2393 = vpop.permute.xlu0 %2392
  %2394 = vrot.lane.b32.xlu0 %v1818, 96
  %v2395 = vpop.permute.xlu0 %2394
  %2396 = vrot.lane.b32.xlu0 %v1819, 96
  %v2397 = vpop.permute.xlu0 %2396
  %2398 = vrot.lane.b32.xlu0 %v1820, 96
  %v2399 = vpop.permute.xlu0 %2398
  %2400 = vrot.lane.b32.xlu0 %v1821, 96
  %v2401 = vpop.permute.xlu0 %2400
  %2402 = vrot.lane.b32.xlu0 %v1822, 96
  %v2403 = vpop.permute.xlu0 %2402
  %2404 = vrot.lane.b32.xlu0 %v1823, 96
  %v2405 = vpop.permute.xlu0 %2404
  %2406 = vrot.lane.b32.xlu0 %v1824, 96
  %v2407 = vpop.permute.xlu0 %2406
  %2408 = vrot.lane.b32.xlu0 %v1825, 96
  %v2409 = vpop.permute.xlu0 %2408
  %2410 = vrot.lane.b32.xlu0 %v1826, 96
  %v2411 = vpop.permute.xlu0 %2410
  %2412 = vrot.lane.b32.xlu0 %v1827, 96
  %v2413 = vpop.permute.xlu0 %2412
  %2414 = vrot.lane.b32.xlu0 %v1828, 96
  %v2415 = vpop.permute.xlu0 %2414
  %2416 = vrot.lane.b32.xlu0 %v1829, 96
  %v2417 = vpop.permute.xlu0 %2416
  %2418 = vrot.lane.b32.xlu0 %v1830, 96
  %v2419 = vpop.permute.xlu0 %2418
  %2420 = vrot.lane.b32.xlu0 %v1831, 96
  %v2421 = vpop.permute.xlu0 %2420
  %2422 = vrot.lane.b32.xlu0 %v1832, 96
  %v2423 = vpop.permute.xlu0 %2422
  %2424 = vrot.lane.b32.xlu0 %v1833, 96
  %v2425 = vpop.permute.xlu0 %2424
  %2426 = vrot.lane.b32.xlu0 %v1834, 96
  %v2427 = vpop.permute.xlu0 %2426
  %2428 = vrot.lane.b32.xlu0 %v1835, 96
  %v2429 = vpop.permute.xlu0 %2428
  %2430 = vrot.lane.b32.xlu0 %v1836, 96
  %v2431 = vpop.permute.xlu0 %2430
  %2432 = vrot.lane.b32.xlu0 %v1837, 96
  %v2433 = vpop.permute.xlu0 %2432
  %2434 = vrot.lane.b32.xlu0 %v1838, 96
  %v2435 = vpop.permute.xlu0 %2434
  %2436 = vrot.lane.b32.xlu0 %v1839, 96
  %v2437 = vpop.permute.xlu0 %2436
  %2438 = vrot.lane.b32.xlu0 %v1840, 96
  %v2439 = vpop.permute.xlu0 %2438
  %2440 = vrot.lane.b32.xlu0 %v1841, 96
  %v2441 = vpop.permute.xlu0 %2440
  %2442 = vrot.lane.b32.xlu0 %v1842, 96
  %v2443 = vpop.permute.xlu0 %2442
  %2444 = vrot.lane.b32.xlu0 %v1843, 96
  %v2445 = vpop.permute.xlu0 %2444
  %2446 = vrot.lane.b32.xlu0 %v1844, 96
  %v2447 = vpop.permute.xlu0 %2446
  %2448 = vrot.lane.b32.xlu0 %v1845, 96
  %v2449 = vpop.permute.xlu0 %2448
  %2450 = vrot.lane.b32.xlu0 %v1846, 96
  %v2451 = vpop.permute.xlu0 %2450
  %2452 = vrot.lane.b32.xlu0 %v1847, 96
  %v2453 = vpop.permute.xlu0 %2452
  %2454 = vrot.lane.b32.xlu0 %v1848, 96
  %v2455 = vpop.permute.xlu0 %2454
  %2456 = vrot.lane.b32.xlu0 %v1849, 96
  %v2457 = vpop.permute.xlu0 %2456
  %2458 = vrot.lane.b32.xlu0 %v1850, 96
  %v2459 = vpop.permute.xlu0 %2458
  %2460 = vrot.lane.b32.xlu0 %v1851, 96
  %v2461 = vpop.permute.xlu0 %2460
  %2462 = vrot.lane.b32.xlu0 %v1852, 96
  %v2463 = vpop.permute.xlu0 %2462
  %2464 = vrot.lane.b32.xlu0 %v1853, 96
  %v2465 = vpop.permute.xlu0 %2464
  %2466 = vrot.lane.b32.xlu0 %v1854, 96
  %v2467 = vpop.permute.xlu0 %2466
  %2468 = vrot.lane.b32.xlu0 %v1855, 96
  %v2469 = vpop.permute.xlu0 %2468
  %2470 = vrot.lane.b32.xlu0 %v1856, 96
  %v2471 = vpop.permute.xlu0 %2470
  %2472 = vrot.lane.b32.xlu0 %v1857, 96
  %v2473 = vpop.permute.xlu0 %2472
  %2474 = vrot.lane.b32.xlu0 %v1858, 96
  %v2475 = vpop.permute.xlu0 %2474
  %2476 = vrot.lane.b32.xlu0 %v1859, 96
  %v2477 = vpop.permute.xlu0 %2476
  %vm2478 = vcmask 785408
  %v2479 = vsel %vm2478, %v2287, %v2289
  %v2480 = vsel %vm2478, %v2289, %v2291
  %v2481 = vsel %vm2478, %v2293, %v2295
  %v2482 = vsel %vm2478, %v2295, %v2297
  %v2483 = vsel %vm2478, %v2299, %v2301
  %v2484 = vsel %vm2478, %v2301, %v2303
  %v2485 = vsel %vm2478, %v2305, %v2307
  %v2486 = vsel %vm2478, %v2307, %v2309
  %v2487 = vsel %vm2478, %v2311, %v2313
  %v2488 = vsel %vm2478, %v2313, %v2315
  %v2489 = vsel %vm2478, %v2317, %v2319
  %v2490 = vsel %vm2478, %v2319, %v2321
  %v2491 = vsel %vm2478, %v2323, %v2325
  %v2492 = vsel %vm2478, %v2325, %v2327
  %v2493 = vsel %vm2478, %v2329, %v2331
  %v2494 = vsel %vm2478, %v2331, %v2333
  %v2495 = vsel %vm2478, %v2335, %v2337
  %v2496 = vsel %vm2478, %v2337, %v2339
  %v2497 = vsel %vm2478, %v2341, %v2343
  %v2498 = vsel %vm2478, %v2343, %v2345
  %v2499 = vsel %vm2478, %v2347, %v2349
  %v2500 = vsel %vm2478, %v2349, %v2351
  %v2501 = vsel %vm2478, %v2353, %v2355
  %v2502 = vsel %vm2478, %v2355, %v2357
  %v2503 = vsel %vm2478, %v2359, %v2361
  %v2504 = vsel %vm2478, %v2361, %v2363
  %v2505 = vsel %vm2478, %v2365, %v2367
  %v2506 = vsel %vm2478, %v2367, %v2369
  %v2507 = vsel %vm2478, %v2371, %v2373
  %v2508 = vsel %vm2478, %v2373, %v2375
  %v2509 = vsel %vm2478, %v2377, %v2379
  %v2510 = vsel %vm2478, %v2379, %v2381
  %v2511 = vsel %vm2478, %v2383, %v2385
  %v2512 = vsel %vm2478, %v2385, %v2387
  %v2513 = vsel %vm2478, %v2389, %v2391
  %v2514 = vsel %vm2478, %v2391, %v2393
  %v2515 = vsel %vm2478, %v2395, %v2397
  %v2516 = vsel %vm2478, %v2397, %v2399
  %v2517 = vsel %vm2478, %v2401, %v2403
  %v2518 = vsel %vm2478, %v2403, %v2405
  %v2519 = vsel %vm2478, %v2407, %v2409
  %v2520 = vsel %vm2478, %v2409, %v2411
  %v2521 = vsel %vm2478, %v2413, %v2415
  %v2522 = vsel %vm2478, %v2415, %v2417
  %v2523 = vsel %vm2478, %v2419, %v2421
  %v2524 = vsel %vm2478, %v2421, %v2423
  %v2525 = vsel %vm2478, %v2425, %v2427
  %v2526 = vsel %vm2478, %v2427, %v2429
  %v2527 = vsel %vm2478, %v2431, %v2433
  %v2528 = vsel %vm2478, %v2433, %v2435
  %v2529 = vsel %vm2478, %v2437, %v2439
  %v2530 = vsel %vm2478, %v2439, %v2441
  %v2531 = vsel %vm2478, %v2443, %v2445
  %v2532 = vsel %vm2478, %v2445, %v2447
  %v2533 = vsel %vm2478, %v2449, %v2451
  %v2534 = vsel %vm2478, %v2451, %v2453
  %v2535 = vsel %vm2478, %v2455, %v2457
  %v2536 = vsel %vm2478, %v2457, %v2459
  %v2537 = vsel %vm2478, %v2461, %v2463
  %v2538 = vsel %vm2478, %v2463, %v2465
  %v2539 = vsel %vm2478, %v2467, %v2469
  %v2540 = vsel %vm2478, %v2469, %v2471
  %v2541 = vsel %vm2478, %v2473, %v2475
  %v2542 = vsel %vm2478, %v2475, %v2477
  %2607 = vmatprep.subr.mxu0 0.0
  %2608 = vmatpush1.msra.mxu0 %v2027
  %2609 = vmatprep.subr.mxu0 0.0
  %2610 = vmatpush1.msra.mxu0 %v2032
  %2611 = vmatprep.subr.mxu0 0.0
  %2612 = vmatpush1.msra.mxu0 %v2037
  %2613 = vmatprep.subr.mxu0 0.0
  %2614 = vmatpush1.msra.mxu0 %v2042
  %2615 = vmatprep.subr.mxu0 0.0
  %2616 = vmatpush1.msra.mxu0 %v2047
  %2617 = vmatprep.subr.mxu0 0.0
  %2618 = vmatpush1.msra.mxu0 %v2052
  %2619 = vmatprep.subr.mxu0 0.0
  %2620 = vmatpush1.msra.mxu0 %v2057
  %2621 = vmatprep.subr.mxu0 0.0
  %2622 = vmatpush1.msra.mxu0 %v2062
  %2623 = vmatprep.subr.mxu0 0.0
  %2624 = vmatpush1.msra.mxu0 %v2067
  %2625 = vmatprep.subr.mxu0 0.0
  %2626 = vmatpush1.msra.mxu0 %v2072
  %2627 = vmatprep.subr.mxu0 0.0
  %2628 = vmatpush1.msra.mxu0 %v2077
  %2629 = vmatprep.subr.mxu0 0.0
  %2630 = vmatpush1.msra.mxu0 %v2082
  %2631 = vmatprep.subr.mxu0 0.0
  %2632 = vmatpush1.msra.mxu0 %v2087
  %2633 = vmatprep.subr.mxu0 0.0
  %2634 = vmatpush1.msra.mxu0 %v2092
  %2635 = vmatprep.subr.mxu0 0.0
  %2636 = vmatpush1.msra.mxu0 %v2097
  %2637 = vmatprep.subr.mxu0 0.0
  %2638 = vmatpush1.msra.mxu0 %v2102
  %2639 = vmatprep.subr.mxu0 0.0
  %2640 = vmatpush1.msra.mxu0 %v2107
  %2641 = vmatprep.subr.mxu0 0.0
  %2642 = vmatpush1.msra.mxu0 %v2112
  %2643 = vmatprep.subr.mxu0 0.0
  %2644 = vmatpush1.msra.mxu0 %v2117
  %2645 = vmatprep.subr.mxu0 0.0
  %2646 = vmatpush1.msra.mxu0 %v2122
  %2647 = vmatprep.subr.mxu0 0.0
  %2648 = vmatpush1.msra.mxu0 %v2127
  %2649 = vmatprep.subr.mxu0 0.0
  %2650 = vmatpush1.msra.mxu0 %v2132
  %2651 = vmatprep.subr.mxu0 0.0
  %2652 = vmatpush1.msra.mxu0 %v2137
  %2653 = vmatprep.subr.mxu0 0.0
  %2654 = vmatpush1.msra.mxu0 %v2142
  %2655 = vmatprep.subr.mxu0 0.0
  %2656 = vmatpush1.msra.mxu0 %v2147
  %2657 = vmatprep.subr.mxu0 0.0
  %2658 = vmatpush1.msra.mxu0 %v2152
  %2659 = vmatprep.subr.mxu0 0.0
  %2660 = vmatpush1.msra.mxu0 %v2157
  %2661 = vmatprep.subr.mxu0 0.0
  %2662 = vmatpush1.msra.mxu0 %v2162
  %2663 = vmatprep.subr.mxu0 0.0
  %2664 = vmatpush1.msra.mxu0 %v2167
  %2665 = vmatprep.subr.mxu0 0.0
  %2666 = vmatpush1.msra.mxu0 %v2172
  %2667 = vmatprep.subr.mxu0 0.0
  %2668 = vmatpush1.msra.mxu0 %v2177
  %2669 = vmatprep.subr.mxu0 0.0
  %2670 = vmatpush1.msra.mxu0 %v2182
  %2671 = vmatprep.mubr.f32.mxu0 %v2480
  %2672 = vmatmul.mubr.f32.gmra.mrb[0].mxu0 %v2479
  %v2673 = vpop.f32.mrb[0].mxu0
  %v2674 = vadd.f32 %v2189, %v2673
  %v2675 = vpop.f32.mrb[0].mxu0
  %2676 = vmatprep.mubr.f32.mxu0 %v2482
  %2677 = vmatmul.mubr.f32.gmra.mrb[0].mxu0 %v2481
  %v2678 = vpop.f32.mrb[0].mxu0
  %v2679 = vadd.f32 %v2189, %v2678
  %v2680 = vpop.f32.mrb[0].mxu0
  %2681 = vmatprep.mubr.f32.mxu0 %v2484
  %2682 = vmatmul.mubr.f32.gmra.mrb[0].mxu0 %v2483
  %v2683 = vpop.f32.mrb[0].mxu0
  %v2684 = vadd.f32 %v2189, %v2683
  %v2685 = vpop.f32.mrb[0].mxu0
  %2686 = vmatprep.mubr.f32.mxu0 %v2486
  %2687 = vmatmul.mubr.f32.gmra.mrb[0].mxu0 %v2485
  %v2688 = vpop.f32.mrb[0].mxu0
  %v2689 = vadd.f32 %v2189, %v2688
  %v2690 = vpop.f32.mrb[0].mxu0
  %2691 = vmatprep.mubr.f32.mxu0 %v2488
  %2692 = vmatmul.mubr.f32.gmra.mrb[0].mxu0 %v2487
  %v2693 = vpop.f32.mrb[0].mxu0
  %v2694 = vadd.f32 %v2189, %v2693
  %v2695 = vpop.f32.mrb[0].mxu0
  %2696 = vmatprep.mubr.f32.mxu0 %v2490
  %2697 = vmatmul.mubr.f32.gmra.mrb[0].mxu0 %v2489
  %v2698 = vpop.f32.mrb[0].mxu0
  %v2699 = vadd.f32 %v2189, %v2698
  %v2700 = vpop.f32.mrb[0].mxu0
  %2701 = vmatprep.mubr.f32.mxu0 %v2492
  %2702 = vmatmul.mubr.f32.gmra.mrb[0].mxu0 %v2491
  %v2703 = vpop.f32.mrb[0].mxu0
  %v2704 = vadd.f32 %v2189, %v2703
  %v2705 = vpop.f32.mrb[0].mxu0
  %2706 = vmatprep.mubr.f32.mxu0 %v2494
  %2707 = vmatmul.mubr.f32.gmra.mrb[0].mxu0 %v2493
  %v2708 = vpop.f32.mrb[0].mxu0
  %v2709 = vadd.f32 %v2189, %v2708
  %v2710 = vpop.f32.mrb[0].mxu0
  %2711 = vmatprep.mubr.f32.mxu0 %v2496
  %2712 = vmatmul.mubr.f32.gmra.mrb[0].mxu0 %v2495
  %v2713 = vpop.f32.mrb[0].mxu0
  %v2714 = vadd.f32 %v2189, %v2713
  %v2715 = vpop.f32.mrb[0].mxu0
  %2716 = vmatprep.mubr.f32.mxu0 %v2498
  %2717 = vmatmul.mubr.f32.gmra.mrb[0].mxu0 %v2497
  %v2718 = vpop.f32.mrb[0].mxu0
  %v2719 = vadd.f32 %v2189, %v2718
  %v2720 = vpop.f32.mrb[0].mxu0
  %2721 = vmatprep.mubr.f32.mxu0 %v2500
  %2722 = vmatmul.mubr.f32.gmra.mrb[0].mxu0 %v2499
  %v2723 = vpop.f32.mrb[0].mxu0
  %v2724 = vadd.f32 %v2189, %v2723
  %v2725 = vpop.f32.mrb[0].mxu0
  %2726 = vmatprep.mubr.f32.mxu0 %v2502
  %2727 = vmatmul.mubr.f32.gmra.mrb[0].mxu0 %v2501
  %v2728 = vpop.f32.mrb[0].mxu0
  %v2729 = vadd.f32 %v2189, %v2728
  %v2730 = vpop.f32.mrb[0].mxu0
  %2731 = vmatprep.mubr.f32.mxu0 %v2504
  %2732 = vmatmul.mubr.f32.gmra.mrb[0].mxu0 %v2503
  %v2733 = vpop.f32.mrb[0].mxu0
  %v2734 = vadd.f32 %v2189, %v2733
  %v2735 = vpop.f32.mrb[0].mxu0
  %2736 = vmatprep.mubr.f32.mxu0 %v2506
  %2737 = vmatmul.mubr.f32.gmra.mrb[0].mxu0 %v2505
  %v2738 = vpop.f32.mrb[0].mxu0
  %v2739 = vadd.f32 %v2189, %v2738
  %v2740 = vpop.f32.mrb[0].mxu0
  %2741 = vmatprep.mubr.f32.mxu0 %v2508
  %2742 = vmatmul.mubr.f32.gmra.mrb[0].mxu0 %v2507
  %v2743 = vpop.f32.mrb[0].mxu0
  %v2744 = vadd.f32 %v2189, %v2743
  %v2745 = vpop.f32.mrb[0].mxu0
  %2746 = vmatprep.mubr.f32.mxu0 %v2510
  %2747 = vmatmul.mubr.f32.gmra.mrb[0].mxu0 %v2509
  %v2748 = vpop.f32.mrb[0].mxu0
  %v2749 = vadd.f32 %v2189, %v2748
  %v2750 = vpop.f32.mrb[0].mxu0
  %2751 = vmatprep.mubr.f32.mxu0 %v2512
  %2752 = vmatmul.mubr.f32.gmra.mrb[0].mxu0 %v2511
  %v2753 = vpop.f32.mrb[0].mxu0
  %v2754 = vadd.f32 %v2189, %v2753
  %v2755 = vpop.f32.mrb[0].mxu0
  %2756 = vmatprep.mubr.f32.mxu0 %v2514
  %2757 = vmatmul.mubr.f32.gmra.mrb[0].mxu0 %v2513
  %v2758 = vpop.f32.mrb[0].mxu0
  %v2759 = vadd.f32 %v2189, %v2758
  %v2760 = vpop.f32.mrb[0].mxu0
  %2761 = vmatprep.mubr.f32.mxu0 %v2516
  %2762 = vmatmul.mubr.f32.gmra.mrb[0].mxu0 %v2515
  %v2763 = vpop.f32.mrb[0].mxu0
  %v2764 = vadd.f32 %v2189, %v2763
  %v2765 = vpop.f32.mrb[0].mxu0
  %2766 = vmatprep.mubr.f32.mxu0 %v2518
  %2767 = vmatmul.mubr.f32.gmra.mrb[0].mxu0 %v2517
  %v2768 = vpop.f32.mrb[0].mxu0
  %v2769 = vadd.f32 %v2189, %v2768
  %v2770 = vpop.f32.mrb[0].mxu0
  %2771 = vmatprep.mubr.f32.mxu0 %v2520
  %2772 = vmatmul.mubr.f32.gmra.mrb[0].mxu0 %v2519
  %v2773 = vpop.f32.mrb[0].mxu0
  %v2774 = vadd.f32 %v2189, %v2773
  %v2775 = vpop.f32.mrb[0].mxu0
  %2776 = vmatprep.mubr.f32.mxu0 %v2522
  %2777 = vmatmul.mubr.f32.gmra.mrb[0].mxu0 %v2521
  %v2778 = vpop.f32.mrb[0].mxu0
  %v2779 = vadd.f32 %v2189, %v2778
  %v2780 = vpop.f32.mrb[0].mxu0
  %2781 = vmatprep.mubr.f32.mxu0 %v2524
  %2782 = vmatmul.mubr.f32.gmra.mrb[0].mxu0 %v2523
  %v2783 = vpop.f32.mrb[0].mxu0
  %v2784 = vadd.f32 %v2189, %v2783
  %v2785 = vpop.f32.mrb[0].mxu0
  %2786 = vmatprep.mubr.f32.mxu0 %v2526
  %2787 = vmatmul.mubr.f32.gmra.mrb[0].mxu0 %v2525
  %v2788 = vpop.f32.mrb[0].mxu0
  %v2789 = vadd.f32 %v2189, %v2788
  %v2790 = vpop.f32.mrb[0].mxu0
  %2791 = vmatprep.mubr.f32.mxu0 %v2528
  %2792 = vmatmul.mubr.f32.gmra.mrb[0].mxu0 %v2527
  %v2793 = vpop.f32.mrb[0].mxu0
  %v2794 = vadd.f32 %v2189, %v2793
  %v2795 = vpop.f32.mrb[0].mxu0
  %2796 = vmatprep.mubr.f32.mxu0 %v2530
  %2797 = vmatmul.mubr.f32.gmra.mrb[0].mxu0 %v2529
  %v2798 = vpop.f32.mrb[0].mxu0
  %v2799 = vadd.f32 %v2189, %v2798
  %v2800 = vpop.f32.mrb[0].mxu0
  %2801 = vmatprep.mubr.f32.mxu0 %v2532
  %2802 = vmatmul.mubr.f32.gmra.mrb[0].mxu0 %v2531
  %v2803 = vpop.f32.mrb[0].mxu0
  %v2804 = vadd.f32 %v2189, %v2803
  %v2805 = vpop.f32.mrb[0].mxu0
  %2806 = vmatprep.mubr.f32.mxu0 %v2534
  %2807 = vmatmul.mubr.f32.gmra.mrb[0].mxu0 %v2533
  %v2808 = vpop.f32.mrb[0].mxu0
  %v2809 = vadd.f32 %v2189, %v2808
  %v2810 = vpop.f32.mrb[0].mxu0
  %2811 = vmatprep.mubr.f32.mxu0 %v2536
  %2812 = vmatmul.mubr.f32.gmra.mrb[0].mxu0 %v2535
  %v2813 = vpop.f32.mrb[0].mxu0
  %v2814 = vadd.f32 %v2189, %v2813
  %v2815 = vpop.f32.mrb[0].mxu0
  %2816 = vmatprep.mubr.f32.mxu0 %v2538
  %2817 = vmatmul.mubr.f32.gmra.mrb[0].mxu0 %v2537
  %v2818 = vpop.f32.mrb[0].mxu0
  %v2819 = vadd.f32 %v2189, %v2818
  %v2820 = vpop.f32.mrb[0].mxu0
  %2821 = vmatprep.mubr.f32.mxu0 %v2540
  %2822 = vmatmul.mubr.f32.gmra.mrb[0].mxu0 %v2539
  %v2823 = vpop.f32.mrb[0].mxu0
  %v2824 = vadd.f32 %v2189, %v2823
  %v2825 = vpop.f32.mrb[0].mxu0
  %2826 = vmatprep.mubr.f32.mxu0 %v2542
  %2827 = vmatmul.mubr.f32.gmra.mrb[0].mxu0 %v2541
  %v2828 = vpop.f32.mrb[0].mxu0
  %v2829 = vadd.f32 %v2189, %v2828
  %v2830 = vpop.f32.mrb[0].mxu0
  %2831 = vdwg.mxu0
  %v2832 = vtanh.pop %v2674
  %v2833 = vtanh.pop %v2679
  %v2834 = vtanh.pop %v2684
  %v2835 = vtanh.pop %v2689
  %v2836 = vtanh.pop %v2694
  %v2837 = vtanh.pop %v2699
  %v2838 = vtanh.pop %v2704
  %v2839 = vtanh.pop %v2709
  %v2840 = vtanh.pop %v2714
  %v2841 = vtanh.pop %v2719
  %v2842 = vtanh.pop %v2724
  %v2843 = vtanh.pop %v2729
  %v2844 = vtanh.pop %v2734
  %v2845 = vtanh.pop %v2739
  %v2846 = vtanh.pop %v2744
  %v2847 = vtanh.pop %v2749
  %v2848 = vtanh.pop %v2754
  %v2849 = vtanh.pop %v2759
  %v2850 = vtanh.pop %v2764
  %v2851 = vtanh.pop %v2769
  %v2852 = vtanh.pop %v2774
  %v2853 = vtanh.pop %v2779
  %v2854 = vtanh.pop %v2784
  %v2855 = vtanh.pop %v2789
  %v2856 = vtanh.pop %v2794
  %v2857 = vtanh.pop %v2799
  %v2858 = vtanh.pop %v2804
  %v2859 = vtanh.pop %v2809
  %v2860 = vtanh.pop %v2814
  %v2861 = vtanh.pop %v2819
  %v2862 = vtanh.pop %v2824
  %v2863 = vtanh.pop %v2829
  %v2864 = vadd.f32 %v2832, %v1604
  %v2865 = vadd.f32 %v2833, %v1605
  %v2866 = vadd.f32 %v2834, %v1606
  %v2867 = vadd.f32 %v2835, %v1607
  %v2868 = vadd.f32 %v2836, %v1608
  %v2869 = vadd.f32 %v2837, %v1609
  %v2870 = vadd.f32 %v2838, %v1610
  %v2871 = vadd.f32 %v2839, %v1611
  %v2872 = vadd.f32 %v2840, %v1612
  %v2873 = vadd.f32 %v2841, %v1613
  %v2874 = vadd.f32 %v2842, %v1614
  %v2875 = vadd.f32 %v2843, %v1615
  %v2876 = vadd.f32 %v2844, %v1616
  %v2877 = vadd.f32 %v2845, %v1617
  %v2878 = vadd.f32 %v2846, %v1618
  %v2879 = vadd.f32 %v2847, %v1619
  %v2880 = vadd.f32 %v2848, %v1620
  %v2881 = vadd.f32 %v2849, %v1621
  %v2882 = vadd.f32 %v2850, %v1622
  %v2883 = vadd.f32 %v2851, %v1623
  %v2884 = vadd.f32 %v2852, %v1624
  %v2885 = vadd.f32 %v2853, %v1625
  %v2886 = vadd.f32 %v2854, %v1626
  %v2887 = vadd.f32 %v2855, %v1627
  %v2888 = vadd.f32 %v2856, %v1628
  %v2889 = vadd.f32 %v2857, %v1629
  %v2890 = vadd.f32 %v2858, %v1630
  %v2891 = vadd.f32 %v2859, %v1631
  %v2892 = vadd.f32 %v2860, %v1632
  %v2893 = vadd.f32 %v2861, %v1633
  %v2894 = vadd.f32 %v2862, %v1634
  %v2895 = vadd.f32 %v2863, %v1635
  %s2896 = scalar_lea.vmem %s1, 32
  %v2897 = vld [vmem:[%s2896] sm:$0xff]
  %v2898 = vld [vmem:[%s2896 + $0x8] sm:$0xff]
  %v2899 = vld [vmem:[%s2896 + $0x10] sm:$0xff]
  %v2900 = vld [vmem:[%s2896 + $0x18] sm:$0xff]
  %v2902 = vsel %vm116, %v2864, 0
  %v2905 = vsel %vm116, %v2865, 0
  %v2908 = vsel %vm116, %v2866, 0
  %v2911 = vsel %vm116, %v2867, 0
  %v2914 = vsel %vm116, %v2868, 0
  %v2917 = vsel %vm116, %v2869, 0
  %v2920 = vsel %vm116, %v2870, 0
  %v2923 = vsel %vm116, %v2871, 0
  %v2926 = vsel %vm116, %v2872, 0
  %v2929 = vsel %vm116, %v2873, 0
  %v2932 = vsel %vm116, %v2874, 0
  %v2935 = vsel %vm116, %v2875, 0
  %v2938 = vsel %vm116, %v2876, 0
  %v2941 = vsel %vm116, %v2877, 0
  %v2944 = vsel %vm116, %v2878, 0
  %v2947 = vsel %vm116, %v2879, 0
  %v2950 = vsel %vm116, %v2880, 0
  %v2953 = vsel %vm116, %v2881, 0
  %v2956 = vsel %vm116, %v2882, 0
  %v2959 = vsel %vm116, %v2883, 0
  %v2962 = vsel %vm116, %v2884, 0
  %v2965 = vsel %vm116, %v2885, 0
  %v2968 = vsel %vm116, %v2886, 0
  %v2971 = vsel %vm116, %v2887, 0
  %v2974 = vsel %vm116, %v2888, 0
  %v2977 = vsel %vm116, %v2889, 0
  %v2980 = vsel %vm116, %v2890, 0
  %v2983 = vsel %vm116, %v2891, 0
  %v2986 = vsel %vm116, %v2892, 0
  %v2989 = vsel %vm116, %v2893, 0
  %v2992 = vsel %vm116, %v2894, 0
  %v2995 = vsel %vm116, %v2895, 0
  %2997 = vmatprep.subr.mxu0 0.0
  %2998 = vmatpush1.msra.mxu0 %v2897
  %2999 = vmatprep.subr.mxu0 0.0
  %3000 = vmatpush1.msra.mxu0 %v2898
  %3001 = vmatprep.subr.mxu0 0.0
  %3002 = vmatpush1.msra.mxu0 %v2899
  %3003 = vmatprep.subr.mxu0 0.0
  %3004 = vmatpush1.msra.mxu0 %v2900
  %3005 = vmatprep.subr.mxu0 0.0
  %3006 = vmatpush1.msra.mxu0 0.0
  %3007 = vmatprep.subr.mxu0 0.0
  %3008 = vmatpush1.msra.mxu0 0.0
  %3009 = vmatprep.subr.mxu0 0.0
  %3010 = vmatpush1.msra.mxu0 0.0
  %3011 = vmatprep.subr.mxu0 0.0
  %3012 = vmatpush1.msra.mxu0 0.0
  %3013 = vmatprep.subr.mxu0 0.0
  %3014 = vmatpush1.msra.mxu0 0.0
  %3015 = vmatprep.subr.mxu0 0.0
  %3016 = vmatpush1.msra.mxu0 0.0
  %3017 = vmatprep.subr.mxu0 0.0
  %3018 = vmatpush1.msra.mxu0 0.0
  %3019 = vmatprep.subr.mxu0 0.0
  %3020 = vmatpush1.msra.mxu0 0.0
  %3021 = vmatprep.subr.mxu0 0.0
  %3022 = vmatpush1.msra.mxu0 0.0
  %3023 = vmatprep.subr.mxu0 0.0
  %3024 = vmatpush1.msra.mxu0 0.0
  %3025 = vmatprep.subr.mxu0 0.0
  %3026 = vmatpush1.msra.mxu0 0.0
  %3027 = vmatprep.subr.mxu0 0.0
  %3028 = vmatpush1.msra.mxu0 0.0
  %3029 = vmatprep.subr.mxu0 0.0
  %3030 = vmatpush1.msra.mxu0 0.0
  %3031 = vmatprep.subr.mxu0 0.0
  %3032 = vmatpush1.msra.mxu0 0.0
  %3033 = vmatprep.subr.mxu0 0.0
  %3034 = vmatpush1.msra.mxu0 0.0
  %3035 = vmatprep.subr.mxu0 0.0
  %3036 = vmatpush1.msra.mxu0 0.0
  %3037 = vmatprep.subr.mxu0 0.0
  %3038 = vmatpush1.msra.mxu0 0.0
  %3039 = vmatprep.subr.mxu0 0.0
  %3040 = vmatpush1.msra.mxu0 0.0
  %3041 = vmatprep.subr.mxu0 0.0
  %3042 = vmatpush1.msra.mxu0 0.0
  %3043 = vmatprep.subr.mxu0 0.0
  %3044 = vmatpush1.msra.mxu0 0.0
  %3045 = vmatprep.subr.mxu0 0.0
  %3046 = vmatpush1.msra.mxu0 0.0
  %3047 = vmatprep.subr.mxu0 0.0
  %3048 = vmatpush1.msra.mxu0 0.0
  %3049 = vmatprep.subr.mxu0 0.0
  %3050 = vmatpush1.msra.mxu0 0.0
  %3051 = vmatprep.subr.mxu0 0.0
  %3052 = vmatpush1.msra.mxu0 0.0
  %3053 = vmatprep.subr.mxu0 0.0
  %3054 = vmatpush1.msra.mxu0 0.0
  %3055 = vmatprep.subr.mxu0 0.0
  %3056 = vmatpush1.msra.mxu0 0.0
  %3057 = vmatprep.subr.mxu0 0.0
  %3058 = vmatpush1.msra.mxu0 0.0
  %3059 = vmatprep.subr.mxu0 0.0
  %3060 = vmatpush1.msra.mxu0 0.0
  %3061 = vmatprep.mubr.f32.mxu0 0.0
  %3062 = vmatmul.mubr.f32.gmra.mrb[0].mxu0 %v2902
  %v3063 = vpop.f32.mrb[0].mxu0
  %v3064 = vadd.f32 0.0, %v3063
  %v3065 = vpop.f32.mrb[0].mxu0
  %3066 = vmatprep.mubr.f32.mxu0 0.0
  %3067 = vmatmul.mubr.f32.gmra.mrb[0].mxu0 %v2905
  %v3068 = vpop.f32.mrb[0].mxu0
  %v3069 = vadd.f32 0.0, %v3068
  %v3070 = vpop.f32.mrb[0].mxu0
  %3071 = vmatprep.mubr.f32.mxu0 0.0
  %3072 = vmatmul.mubr.f32.gmra.mrb[0].mxu0 %v2908
  %v3073 = vpop.f32.mrb[0].mxu0
  %v3074 = vadd.f32 0.0, %v3073
  %v3075 = vpop.f32.mrb[0].mxu0
  %3076 = vmatprep.mubr.f32.mxu0 0.0
  %3077 = vmatmul.mubr.f32.gmra.mrb[0].mxu0 %v2911
  %v3078 = vpop.f32.mrb[0].mxu0
  %v3079 = vadd.f32 0.0, %v3078
  %v3080 = vpop.f32.mrb[0].mxu0
  %3081 = vmatprep.mubr.f32.mxu0 0.0
  %3082 = vmatmul.mubr.f32.gmra.mrb[0].mxu0 %v2914
  %v3083 = vpop.f32.mrb[0].mxu0
  %v3084 = vadd.f32 0.0, %v3083
  %v3085 = vpop.f32.mrb[0].mxu0
  %3086 = vmatprep.mubr.f32.mxu0 0.0
  %3087 = vmatmul.mubr.f32.gmra.mrb[0].mxu0 %v2917
  %v3088 = vpop.f32.mrb[0].mxu0
  %v3089 = vadd.f32 0.0, %v3088
  %v3090 = vpop.f32.mrb[0].mxu0
  %3091 = vmatprep.mubr.f32.mxu0 0.0
  %3092 = vmatmul.mubr.f32.gmra.mrb[0].mxu0 %v2920
  %v3093 = vpop.f32.mrb[0].mxu0
  %v3094 = vadd.f32 0.0, %v3093
  %v3095 = vpop.f32.mrb[0].mxu0
  %3096 = vmatprep.mubr.f32.mxu0 0.0
  %3097 = vmatmul.mubr.f32.gmra.mrb[0].mxu0 %v2923
  %v3098 = vpop.f32.mrb[0].mxu0
  %v3099 = vadd.f32 0.0, %v3098
  %v3100 = vpop.f32.mrb[0].mxu0
  %3101 = vmatprep.mubr.f32.mxu0 0.0
  %3102 = vmatmul.mubr.f32.gmra.mrb[0].mxu0 %v2926
  %v3103 = vpop.f32.mrb[0].mxu0
  %v3104 = vadd.f32 0.0, %v3103
  %v3105 = vpop.f32.mrb[0].mxu0
  %3106 = vmatprep.mubr.f32.mxu0 0.0
  %3107 = vmatmul.mubr.f32.gmra.mrb[0].mxu0 %v2929
  %v3108 = vpop.f32.mrb[0].mxu0
  %v3109 = vadd.f32 0.0, %v3108
  %v3110 = vpop.f32.mrb[0].mxu0
  %3111 = vmatprep.mubr.f32.mxu0 0.0
  %3112 = vmatmul.mubr.f32.gmra.mrb[0].mxu0 %v2932
  %v3113 = vpop.f32.mrb[0].mxu0
  %v3114 = vadd.f32 0.0, %v3113
  %v3115 = vpop.f32.mrb[0].mxu0
  %3116 = vmatprep.mubr.f32.mxu0 0.0
  %3117 = vmatmul.mubr.f32.gmra.mrb[0].mxu0 %v2935
  %v3118 = vpop.f32.mrb[0].mxu0
  %v3119 = vadd.f32 0.0, %v3118
  %v3120 = vpop.f32.mrb[0].mxu0
  %3121 = vmatprep.mubr.f32.mxu0 0.0
  %3122 = vmatmul.mubr.f32.gmra.mrb[0].mxu0 %v2938
  %v3123 = vpop.f32.mrb[0].mxu0
  %v3124 = vadd.f32 0.0, %v3123
  %v3125 = vpop.f32.mrb[0].mxu0
  %3126 = vmatprep.mubr.f32.mxu0 0.0
  %3127 = vmatmul.mubr.f32.gmra.mrb[0].mxu0 %v2941
  %v3128 = vpop.f32.mrb[0].mxu0
  %v3129 = vadd.f32 0.0, %v3128
  %v3130 = vpop.f32.mrb[0].mxu0
  %3131 = vmatprep.mubr.f32.mxu0 0.0
  %3132 = vmatmul.mubr.f32.gmra.mrb[0].mxu0 %v2944
  %v3133 = vpop.f32.mrb[0].mxu0
  %v3134 = vadd.f32 0.0, %v3133
  %v3135 = vpop.f32.mrb[0].mxu0
  %3136 = vmatprep.mubr.f32.mxu0 0.0
  %3137 = vmatmul.mubr.f32.gmra.mrb[0].mxu0 %v2947
  %v3138 = vpop.f32.mrb[0].mxu0
  %v3139 = vadd.f32 0.0, %v3138
  %v3140 = vpop.f32.mrb[0].mxu0
  %3141 = vmatprep.mubr.f32.mxu0 0.0
  %3142 = vmatmul.mubr.f32.gmra.mrb[0].mxu0 %v2950
  %v3143 = vpop.f32.mrb[0].mxu0
  %v3144 = vadd.f32 0.0, %v3143
  %v3145 = vpop.f32.mrb[0].mxu0
  %3146 = vmatprep.mubr.f32.mxu0 0.0
  %3147 = vmatmul.mubr.f32.gmra.mrb[0].mxu0 %v2953
  %v3148 = vpop.f32.mrb[0].mxu0
  %v3149 = vadd.f32 0.0, %v3148
  %v3150 = vpop.f32.mrb[0].mxu0
  %3151 = vmatprep.mubr.f32.mxu0 0.0
  %3152 = vmatmul.mubr.f32.gmra.mrb[0].mxu0 %v2956
  %v3153 = vpop.f32.mrb[0].mxu0
  %v3154 = vadd.f32 0.0, %v3153
  %v3155 = vpop.f32.mrb[0].mxu0
  %3156 = vmatprep.mubr.f32.mxu0 0.0
  %3157 = vmatmul.mubr.f32.gmra.mrb[0].mxu0 %v2959
  %v3158 = vpop.f32.mrb[0].mxu0
  %v3159 = vadd.f32 0.0, %v3158
  %v3160 = vpop.f32.mrb[0].mxu0
  %3161 = vmatprep.mubr.f32.mxu0 0.0
  %3162 = vmatmul.mubr.f32.gmra.mrb[0].mxu0 %v2962
  %v3163 = vpop.f32.mrb[0].mxu0
  %v3164 = vadd.f32 0.0, %v3163
  %v3165 = vpop.f32.mrb[0].mxu0
  %3166 = vmatprep.mubr.f32.mxu0 0.0
  %3167 = vmatmul.mubr.f32.gmra.mrb[0].mxu0 %v2965
  %v3168 = vpop.f32.mrb[0].mxu0
  %v3169 = vadd.f32 0.0, %v3168
  %v3170 = vpop.f32.mrb[0].mxu0
  %3171 = vmatprep.mubr.f32.mxu0 0.0
  %3172 = vmatmul.mubr.f32.gmra.mrb[0].mxu0 %v2968
  %v3173 = vpop.f32.mrb[0].mxu0
  %v3174 = vadd.f32 0.0, %v3173
  %v3175 = vpop.f32.mrb[0].mxu0
  %3176 = vmatprep.mubr.f32.mxu0 0.0
  %3177 = vmatmul.mubr.f32.gmra.mrb[0].mxu0 %v2971
  %v3178 = vpop.f32.mrb[0].mxu0
  %v3179 = vadd.f32 0.0, %v3178
  %v3180 = vpop.f32.mrb[0].mxu0
  %3181 = vmatprep.mubr.f32.mxu0 0.0
  %3182 = vmatmul.mubr.f32.gmra.mrb[0].mxu0 %v2974
  %v3183 = vpop.f32.mrb[0].mxu0
  %v3184 = vadd.f32 0.0, %v3183
  %v3185 = vpop.f32.mrb[0].mxu0
  %3186 = vmatprep.mubr.f32.mxu0 0.0
  %3187 = vmatmul.mubr.f32.gmra.mrb[0].mxu0 %v2977
  %v3188 = vpop.f32.mrb[0].mxu0
  %v3189 = vadd.f32 0.0, %v3188
  %v3190 = vpop.f32.mrb[0].mxu0
  %3191 = vmatprep.mubr.f32.mxu0 0.0
  %3192 = vmatmul.mubr.f32.gmra.mrb[0].mxu0 %v2980
  %v3193 = vpop.f32.mrb[0].mxu0
  %v3194 = vadd.f32 0.0, %v3193
  %v3195 = vpop.f32.mrb[0].mxu0
  %3196 = vmatprep.mubr.f32.mxu0 0.0
  %3197 = vmatmul.mubr.f32.gmra.mrb[0].mxu0 %v2983
  %v3198 = vpop.f32.mrb[0].mxu0
  %v3199 = vadd.f32 0.0, %v3198
  %v3200 = vpop.f32.mrb[0].mxu0
  %3201 = vmatprep.mubr.f32.mxu0 0.0
  %3202 = vmatmul.mubr.f32.gmra.mrb[0].mxu0 %v2986
  %v3203 = vpop.f32.mrb[0].mxu0
  %v3204 = vadd.f32 0.0, %v3203
  %v3205 = vpop.f32.mrb[0].mxu0
  %3206 = vmatprep.mubr.f32.mxu0 0.0
  %3207 = vmatmul.mubr.f32.gmra.mrb[0].mxu0 %v2989
  %v3208 = vpop.f32.mrb[0].mxu0
  %v3209 = vadd.f32 0.0, %v3208
  %v3210 = vpop.f32.mrb[0].mxu0
  %3211 = vmatprep.mubr.f32.mxu0 0.0
  %3212 = vmatmul.mubr.f32.gmra.mrb[0].mxu0 %v2992
  %v3213 = vpop.f32.mrb[0].mxu0
  %v3214 = vadd.f32 0.0, %v3213
  %v3215 = vpop.f32.mrb[0].mxu0
  %3216 = vmatprep.mubr.f32.mxu0 0.0
  %3217 = vmatmul.mubr.f32.gmra.mrb[0].mxu0 %v2995
  %v3218 = vpop.f32.mrb[0].mxu0
  %v3219 = vadd.f32 0.0, %v3218
  %v3220 = vpop.f32.mrb[0].mxu0
  %3221 = vdwg.mxu0
  %v3222 = vld [vmem:[%s2 + $0x1] sm:$0x1]
  %v3223 = vlaneseq
  %v3224 = vshrl.u32 %v3223, 7
  %v3225 = vsub.s32 0, %v3224
  %v3226 = vrot.slane %v3222, %v3225
  %3227 = vmatprep.subr.mxu0 0.0
  %3228 = vmatpush1.msra.mxu0 %v3064
  %3229 = vmatprep.subr.mxu0 0.0
  %3230 = vmatpush1.msra.mxu0 %v3069
  %3231 = vmatprep.subr.mxu0 0.0
  %3232 = vmatpush1.msra.mxu0 %v3074
  %3233 = vmatprep.subr.mxu0 0.0
  %3234 = vmatpush1.msra.mxu0 %v3079
  %3235 = vmatprep.subr.mxu0 0.0
  %3236 = vmatpush1.msra.mxu0 %v3084
  %3237 = vmatprep.subr.mxu0 0.0
  %3238 = vmatpush1.msra.mxu0 %v3089
  %3239 = vmatprep.subr.mxu0 0.0
  %3240 = vmatpush1.msra.mxu0 %v3094
  %3241 = vmatprep.subr.mxu0 0.0
  %3242 = vmatpush1.msra.mxu0 %v3099
  %3243 = vmatprep.subr.mxu0 0.0
  %3244 = vmatpush1.msra.mxu0 %v3104
  %3245 = vmatprep.subr.mxu0 0.0
  %3246 = vmatpush1.msra.mxu0 %v3109
  %3247 = vmatprep.subr.mxu0 0.0
  %3248 = vmatpush1.msra.mxu0 %v3114
  %3249 = vmatprep.subr.mxu0 0.0
  %3250 = vmatpush1.msra.mxu0 %v3119
  %3251 = vmatprep.subr.mxu0 0.0
  %3252 = vmatpush1.msra.mxu0 %v3124
  %3253 = vmatprep.subr.mxu0 0.0
  %3254 = vmatpush1.msra.mxu0 %v3129
  %3255 = vmatprep.subr.mxu0 0.0
  %3256 = vmatpush1.msra.mxu0 %v3134
  %3257 = vmatprep.subr.mxu0 0.0
  %3258 = vmatpush1.msra.mxu0 %v3139
  %3259 = vmatprep.subr.mxu0 0.0
  %3260 = vmatpush1.msra.mxu0 %v3144
  %3261 = vmatprep.subr.mxu0 0.0
  %3262 = vmatpush1.msra.mxu0 %v3149
  %3263 = vmatprep.subr.mxu0 0.0
  %3264 = vmatpush1.msra.mxu0 %v3154
  %3265 = vmatprep.subr.mxu0 0.0
  %3266 = vmatpush1.msra.mxu0 %v3159
  %3267 = vmatprep.subr.mxu0 0.0
  %3268 = vmatpush1.msra.mxu0 %v3164
  %3269 = vmatprep.subr.mxu0 0.0
  %3270 = vmatpush1.msra.mxu0 %v3169
  %3271 = vmatprep.subr.mxu0 0.0
  %3272 = vmatpush1.msra.mxu0 %v3174
  %3273 = vmatprep.subr.mxu0 0.0
  %3274 = vmatpush1.msra.mxu0 %v3179
  %3275 = vmatprep.subr.mxu0 0.0
  %3276 = vmatpush1.msra.mxu0 %v3184
  %3277 = vmatprep.subr.mxu0 0.0
  %3278 = vmatpush1.msra.mxu0 %v3189
  %3279 = vmatprep.subr.mxu0 0.0
  %3280 = vmatpush1.msra.mxu0 %v3194
  %3281 = vmatprep.subr.mxu0 0.0
  %3282 = vmatpush1.msra.mxu0 %v3199
  %3283 = vmatprep.subr.mxu0 0.0
  %3284 = vmatpush1.msra.mxu0 %v3204
  %3285 = vmatprep.subr.mxu0 0.0
  %3286 = vmatpush1.msra.mxu0 %v3209
  %3287 = vmatprep.subr.mxu0 0.0
  %3288 = vmatpush1.msra.mxu0 %v3214
  %3289 = vmatprep.subr.mxu0 0.0
  %3290 = vmatpush1.msra.mxu0 %v3219
  %3291 = vmatprep.mubr.f32.mxu0 %v2480
  %3292 = vmatmul.mubr.f32.gmra.mrb[0].mxu0 %v2479
  %v3293 = vpop.f32.mrb[0].mxu0
  %v3294 = vadd.f32 %v3226, %v3293
  %v3295 = vpop.f32.mrb[0].mxu0
  %3296 = vmatprep.mubr.f32.mxu0 %v2482
  %3297 = vmatmul.mubr.f32.gmra.mrb[0].mxu0 %v2481
  %v3298 = vpop.f32.mrb[0].mxu0
  %v3299 = vadd.f32 %v3226, %v3298
  %v3300 = vpop.f32.mrb[0].mxu0
  %3301 = vmatprep.mubr.f32.mxu0 %v2484
  %3302 = vmatmul.mubr.f32.gmra.mrb[0].mxu0 %v2483
  %v3303 = vpop.f32.mrb[0].mxu0
  %v3304 = vadd.f32 %v3226, %v3303
  %v3305 = vpop.f32.mrb[0].mxu0
  %3306 = vmatprep.mubr.f32.mxu0 %v2486
  %3307 = vmatmul.mubr.f32.gmra.mrb[0].mxu0 %v2485
  %v3308 = vpop.f32.mrb[0].mxu0
  %v3309 = vadd.f32 %v3226, %v3308
  %v3310 = vpop.f32.mrb[0].mxu0
  %3311 = vmatprep.mubr.f32.mxu0 %v2488
  %3312 = vmatmul.mubr.f32.gmra.mrb[0].mxu0 %v2487
  %v3313 = vpop.f32.mrb[0].mxu0
  %v3314 = vadd.f32 %v3226, %v3313
  %v3315 = vpop.f32.mrb[0].mxu0
  %3316 = vmatprep.mubr.f32.mxu0 %v2490
  %3317 = vmatmul.mubr.f32.gmra.mrb[0].mxu0 %v2489
  %v3318 = vpop.f32.mrb[0].mxu0
  %v3319 = vadd.f32 %v3226, %v3318
  %v3320 = vpop.f32.mrb[0].mxu0
  %3321 = vmatprep.mubr.f32.mxu0 %v2492
  %3322 = vmatmul.mubr.f32.gmra.mrb[0].mxu0 %v2491
  %v3323 = vpop.f32.mrb[0].mxu0
  %v3324 = vadd.f32 %v3226, %v3323
  %v3325 = vpop.f32.mrb[0].mxu0
  %3326 = vmatprep.mubr.f32.mxu0 %v2494
  %3327 = vmatmul.mubr.f32.gmra.mrb[0].mxu0 %v2493
  %v3328 = vpop.f32.mrb[0].mxu0
  %v3329 = vadd.f32 %v3226, %v3328
  %v3330 = vpop.f32.mrb[0].mxu0
  %3331 = vmatprep.mubr.f32.mxu0 %v2496
  %3332 = vmatmul.mubr.f32.gmra.mrb[0].mxu0 %v2495
  %v3333 = vpop.f32.mrb[0].mxu0
  %v3334 = vadd.f32 %v3226, %v3333
  %v3335 = vpop.f32.mrb[0].mxu0
  %3336 = vmatprep.mubr.f32.mxu0 %v2498
  %3337 = vmatmul.mubr.f32.gmra.mrb[0].mxu0 %v2497
  %v3338 = vpop.f32.mrb[0].mxu0
  %v3339 = vadd.f32 %v3226, %v3338
  %v3340 = vpop.f32.mrb[0].mxu0
  %3341 = vmatprep.mubr.f32.mxu0 %v2500
  %3342 = vmatmul.mubr.f32.gmra.mrb[0].mxu0 %v2499
  %v3343 = vpop.f32.mrb[0].mxu0
  %v3344 = vadd.f32 %v3226, %v3343
  %v3345 = vpop.f32.mrb[0].mxu0
  %3346 = vmatprep.mubr.f32.mxu0 %v2502
  %3347 = vmatmul.mubr.f32.gmra.mrb[0].mxu0 %v2501
  %v3348 = vpop.f32.mrb[0].mxu0
  %v3349 = vadd.f32 %v3226, %v3348
  %v3350 = vpop.f32.mrb[0].mxu0
  %3351 = vmatprep.mubr.f32.mxu0 %v2504
  %3352 = vmatmul.mubr.f32.gmra.mrb[0].mxu0 %v2503
  %v3353 = vpop.f32.mrb[0].mxu0
  %v3354 = vadd.f32 %v3226, %v3353
  %v3355 = vpop.f32.mrb[0].mxu0
  %3356 = vmatprep.mubr.f32.mxu0 %v2506
  %3357 = vmatmul.mubr.f32.gmra.mrb[0].mxu0 %v2505
  %v3358 = vpop.f32.mrb[0].mxu0
  %v3359 = vadd.f32 %v3226, %v3358
  %v3360 = vpop.f32.mrb[0].mxu0
  %3361 = vmatprep.mubr.f32.mxu0 %v2508
  %3362 = vmatmul.mubr.f32.gmra.mrb[0].mxu0 %v2507
  %v3363 = vpop.f32.mrb[0].mxu0
  %v3364 = vadd.f32 %v3226, %v3363
  %v3365 = vpop.f32.mrb[0].mxu0
  %3366 = vmatprep.mubr.f32.mxu0 %v2510
  %3367 = vmatmul.mubr.f32.gmra.mrb[0].mxu0 %v2509
  %v3368 = vpop.f32.mrb[0].mxu0
  %v3369 = vadd.f32 %v3226, %v3368
  %v3370 = vpop.f32.mrb[0].mxu0
  %3371 = vmatprep.mubr.f32.mxu0 %v2512
  %3372 = vmatmul.mubr.f32.gmra.mrb[0].mxu0 %v2511
  %v3373 = vpop.f32.mrb[0].mxu0
  %v3374 = vadd.f32 %v3226, %v3373
  %v3375 = vpop.f32.mrb[0].mxu0
  %3376 = vmatprep.mubr.f32.mxu0 %v2514
  %3377 = vmatmul.mubr.f32.gmra.mrb[0].mxu0 %v2513
  %v3378 = vpop.f32.mrb[0].mxu0
  %v3379 = vadd.f32 %v3226, %v3378
  %v3380 = vpop.f32.mrb[0].mxu0
  %3381 = vmatprep.mubr.f32.mxu0 %v2516
  %3382 = vmatmul.mubr.f32.gmra.mrb[0].mxu0 %v2515
  %v3383 = vpop.f32.mrb[0].mxu0
  %v3384 = vadd.f32 %v3226, %v3383
  %v3385 = vpop.f32.mrb[0].mxu0
  %3386 = vmatprep.mubr.f32.mxu0 %v2518
  %3387 = vmatmul.mubr.f32.gmra.mrb[0].mxu0 %v2517
  %v3388 = vpop.f32.mrb[0].mxu0
  %v3389 = vadd.f32 %v3226, %v3388
  %v3390 = vpop.f32.mrb[0].mxu0
  %3391 = vmatprep.mubr.f32.mxu0 %v2520
  %3392 = vmatmul.mubr.f32.gmra.mrb[0].mxu0 %v2519
  %v3393 = vpop.f32.mrb[0].mxu0
  %v3394 = vadd.f32 %v3226, %v3393
  %v3395 = vpop.f32.mrb[0].mxu0
  %3396 = vmatprep.mubr.f32.mxu0 %v2522
  %3397 = vmatmul.mubr.f32.gmra.mrb[0].mxu0 %v2521
  %v3398 = vpop.f32.mrb[0].mxu0
  %v3399 = vadd.f32 %v3226, %v3398
  %v3400 = vpop.f32.mrb[0].mxu0
  %3401 = vmatprep.mubr.f32.mxu0 %v2524
  %3402 = vmatmul.mubr.f32.gmra.mrb[0].mxu0 %v2523
  %v3403 = vpop.f32.mrb[0].mxu0
  %v3404 = vadd.f32 %v3226, %v3403
  %v3405 = vpop.f32.mrb[0].mxu0
  %3406 = vmatprep.mubr.f32.mxu0 %v2526
  %3407 = vmatmul.mubr.f32.gmra.mrb[0].mxu0 %v2525
  %v3408 = vpop.f32.mrb[0].mxu0
  %v3409 = vadd.f32 %v3226, %v3408
  %v3410 = vpop.f32.mrb[0].mxu0
  %3411 = vmatprep.mubr.f32.mxu0 %v2528
  %3412 = vmatmul.mubr.f32.gmra.mrb[0].mxu0 %v2527
  %v3413 = vpop.f32.mrb[0].mxu0
  %v3414 = vadd.f32 %v3226, %v3413
  %v3415 = vpop.f32.mrb[0].mxu0
  %3416 = vmatprep.mubr.f32.mxu0 %v2530
  %3417 = vmatmul.mubr.f32.gmra.mrb[0].mxu0 %v2529
  %v3418 = vpop.f32.mrb[0].mxu0
  %v3419 = vadd.f32 %v3226, %v3418
  %v3420 = vpop.f32.mrb[0].mxu0
  %3421 = vmatprep.mubr.f32.mxu0 %v2532
  %3422 = vmatmul.mubr.f32.gmra.mrb[0].mxu0 %v2531
  %v3423 = vpop.f32.mrb[0].mxu0
  %v3424 = vadd.f32 %v3226, %v3423
  %v3425 = vpop.f32.mrb[0].mxu0
  %3426 = vmatprep.mubr.f32.mxu0 %v2534
  %3427 = vmatmul.mubr.f32.gmra.mrb[0].mxu0 %v2533
  %v3428 = vpop.f32.mrb[0].mxu0
  %v3429 = vadd.f32 %v3226, %v3428
  %v3430 = vpop.f32.mrb[0].mxu0
  %3431 = vmatprep.mubr.f32.mxu0 %v2536
  %3432 = vmatmul.mubr.f32.gmra.mrb[0].mxu0 %v2535
  %v3433 = vpop.f32.mrb[0].mxu0
  %v3434 = vadd.f32 %v3226, %v3433
  %v3435 = vpop.f32.mrb[0].mxu0
  %3436 = vmatprep.mubr.f32.mxu0 %v2538
  %3437 = vmatmul.mubr.f32.gmra.mrb[0].mxu0 %v2537
  %v3438 = vpop.f32.mrb[0].mxu0
  %v3439 = vadd.f32 %v3226, %v3438
  %v3440 = vpop.f32.mrb[0].mxu0
  %3441 = vmatprep.mubr.f32.mxu0 %v2540
  %3442 = vmatmul.mubr.f32.gmra.mrb[0].mxu0 %v2539
  %v3443 = vpop.f32.mrb[0].mxu0
  %v3444 = vadd.f32 %v3226, %v3443
  %v3445 = vpop.f32.mrb[0].mxu0
  %3446 = vmatprep.mubr.f32.mxu0 %v2542
  %3447 = vmatmul.mubr.f32.gmra.mrb[0].mxu0 %v2541
  %v3448 = vpop.f32.mrb[0].mxu0
  %v3449 = vadd.f32 %v3226, %v3448
  %v3450 = vpop.f32.mrb[0].mxu0
  %3451 = vdwg.mxu0
  %v3452 = vtanh.pop %v3294
  %v3453 = vtanh.pop %v3299
  %v3454 = vtanh.pop %v3304
  %v3455 = vtanh.pop %v3309
  %v3456 = vtanh.pop %v3314
  %v3457 = vtanh.pop %v3319
  %v3458 = vtanh.pop %v3324
  %v3459 = vtanh.pop %v3329
  %v3460 = vtanh.pop %v3334
  %v3461 = vtanh.pop %v3339
  %v3462 = vtanh.pop %v3344
  %v3463 = vtanh.pop %v3349
  %v3464 = vtanh.pop %v3354
  %v3465 = vtanh.pop %v3359
  %v3466 = vtanh.pop %v3364
  %v3467 = vtanh.pop %v3369
  %v3468 = vtanh.pop %v3374
  %v3469 = vtanh.pop %v3379
  %v3470 = vtanh.pop %v3384
  %v3471 = vtanh.pop %v3389
  %v3472 = vtanh.pop %v3394
  %v3473 = vtanh.pop %v3399
  %v3474 = vtanh.pop %v3404
  %v3475 = vtanh.pop %v3409
  %v3476 = vtanh.pop %v3414
  %v3477 = vtanh.pop %v3419
  %v3478 = vtanh.pop %v3424
  %v3479 = vtanh.pop %v3429
  %v3480 = vtanh.pop %v3434
  %v3481 = vtanh.pop %v3439
  %v3482 = vtanh.pop %v3444
  %v3483 = vtanh.pop %v3449
  %v3484 = vadd.f32 %v3452, %v2864
  %v3485 = vadd.f32 %v3453, %v2865
  %v3486 = vadd.f32 %v3454, %v2866
  %v3487 = vadd.f32 %v3455, %v2867
  %v3488 = vadd.f32 %v3456, %v2868
  %v3489 = vadd.f32 %v3457, %v2869
  %v3490 = vadd.f32 %v3458, %v2870
  %v3491 = vadd.f32 %v3459, %v2871
  %v3492 = vadd.f32 %v3460, %v2872
  %v3493 = vadd.f32 %v3461, %v2873
  %v3494 = vadd.f32 %v3462, %v2874
  %v3495 = vadd.f32 %v3463, %v2875
  %v3496 = vadd.f32 %v3464, %v2876
  %v3497 = vadd.f32 %v3465, %v2877
  %v3498 = vadd.f32 %v3466, %v2878
  %v3499 = vadd.f32 %v3467, %v2879
  %v3500 = vadd.f32 %v3468, %v2880
  %v3501 = vadd.f32 %v3469, %v2881
  %v3502 = vadd.f32 %v3470, %v2882
  %v3503 = vadd.f32 %v3471, %v2883
  %v3504 = vadd.f32 %v3472, %v2884
  %v3505 = vadd.f32 %v3473, %v2885
  %v3506 = vadd.f32 %v3474, %v2886
  %v3507 = vadd.f32 %v3475, %v2887
  %v3508 = vadd.f32 %v3476, %v2888
  %v3509 = vadd.f32 %v3477, %v2889
  %v3510 = vadd.f32 %v3478, %v2890
  %v3511 = vadd.f32 %v3479, %v2891
  %v3512 = vadd.f32 %v3480, %v2892
  %v3513 = vadd.f32 %v3481, %v2893
  %v3514 = vadd.f32 %v3482, %v2894
  %v3515 = vadd.f32 %v3483, %v2895
  %v3517 = vsel %vm116, %v3484, 0
  %v3520 = vsel %vm116, %v3485, 0
  %v3523 = vsel %vm116, %v3486, 0
  %v3526 = vsel %vm116, %v3487, 0
  %v3529 = vsel %vm116, %v3488, 0
  %v3532 = vsel %vm116, %v3489, 0
  %v3535 = vsel %vm116, %v3490, 0
  %v3538 = vsel %vm116, %v3491, 0
  %v3541 = vsel %vm116, %v3492, 0
  %v3544 = vsel %vm116, %v3493, 0
  %v3547 = vsel %vm116, %v3494, 0
  %v3550 = vsel %vm116, %v3495, 0
  %v3553 = vsel %vm116, %v3496, 0
  %v3556 = vsel %vm116, %v3497, 0
  %v3559 = vsel %vm116, %v3498, 0
  %v3562 = vsel %vm116, %v3499, 0
  %v3565 = vsel %vm116, %v3500, 0
  %v3568 = vsel %vm116, %v3501, 0
  %v3571 = vsel %vm116, %v3502, 0
  %v3574 = vsel %vm116, %v3503, 0
  %v3577 = vsel %vm116, %v3504, 0
  %v3580 = vsel %vm116, %v3505, 0
  %v3583 = vsel %vm116, %v3506, 0
  %v3586 = vsel %vm116, %v3507, 0
  %v3589 = vsel %vm116, %v3508, 0
  %v3592 = vsel %vm116, %v3509, 0
  %v3595 = vsel %vm116, %v3510, 0
  %v3598 = vsel %vm116, %v3511, 0
  %v3601 = vsel %vm116, %v3512, 0
  %v3604 = vsel %vm116, %v3513, 0
  %v3607 = vsel %vm116, %v3514, 0
  %v3610 = vsel %vm116, %v3515, 0
  %3612 = vmatprep.subr.mxu0 0.0
  %3613 = vmatpush1.msra.mxu0 %v112
  %3614 = vmatprep.subr.mxu0 0.0
  %3615 = vmatpush1.msra.mxu0 %v113
  %3616 = vmatprep.subr.mxu0 0.0
  %3617 = vmatpush1.msra.mxu0 %v114
  %3618 = vmatprep.subr.mxu0 0.0
  %3619 = vmatpush1.msra.mxu0 %v115
  %3620 = vmatprep.subr.mxu0 0.0
  %3621 = vmatpush1.msra.mxu0 0.0
  %3622 = vmatprep.subr.mxu0 0.0
  %3623 = vmatpush1.msra.mxu0 0.0
  %3624 = vmatprep.subr.mxu0 0.0
  %3625 = vmatpush1.msra.mxu0 0.0
  %3626 = vmatprep.subr.mxu0 0.0
  %3627 = vmatpush1.msra.mxu0 0.0
  %3628 = vmatprep.subr.mxu0 0.0
  %3629 = vmatpush1.msra.mxu0 0.0
  %3630 = vmatprep.subr.mxu0 0.0
  %3631 = vmatpush1.msra.mxu0 0.0
  %3632 = vmatprep.subr.mxu0 0.0
  %3633 = vmatpush1.msra.mxu0 0.0
  %3634 = vmatprep.subr.mxu0 0.0
  %3635 = vmatpush1.msra.mxu0 0.0
  %3636 = vmatprep.subr.mxu0 0.0
  %3637 = vmatpush1.msra.mxu0 0.0
  %3638 = vmatprep.subr.mxu0 0.0
  %3639 = vmatpush1.msra.mxu0 0.0
  %3640 = vmatprep.subr.mxu0 0.0
  %3641 = vmatpush1.msra.mxu0 0.0
  %3642 = vmatprep.subr.mxu0 0.0
  %3643 = vmatpush1.msra.mxu0 0.0
  %3644 = vmatprep.subr.mxu0 0.0
  %3645 = vmatpush1.msra.mxu0 0.0
  %3646 = vmatprep.subr.mxu0 0.0
  %3647 = vmatpush1.msra.mxu0 0.0
  %3648 = vmatprep.subr.mxu0 0.0
  %3649 = vmatpush1.msra.mxu0 0.0
  %3650 = vmatprep.subr.mxu0 0.0
  %3651 = vmatpush1.msra.mxu0 0.0
  %3652 = vmatprep.subr.mxu0 0.0
  %3653 = vmatpush1.msra.mxu0 0.0
  %3654 = vmatprep.subr.mxu0 0.0
  %3655 = vmatpush1.msra.mxu0 0.0
  %3656 = vmatprep.subr.mxu0 0.0
  %3657 = vmatpush1.msra.mxu0 0.0
  %3658 = vmatprep.subr.mxu0 0.0
  %3659 = vmatpush1.msra.mxu0 0.0
  %3660 = vmatprep.subr.mxu0 0.0
  %3661 = vmatpush1.msra.mxu0 0.0
  %3662 = vmatprep.subr.mxu0 0.0
  %3663 = vmatpush1.msra.mxu0 0.0
  %3664 = vmatprep.subr.mxu0 0.0
  %3665 = vmatpush1.msra.mxu0 0.0
  %3666 = vmatprep.subr.mxu0 0.0
  %3667 = vmatpush1.msra.mxu0 0.0
  %3668 = vmatprep.subr.mxu0 0.0
  %3669 = vmatpush1.msra.mxu0 0.0
  %3670 = vmatprep.subr.mxu0 0.0
  %3671 = vmatpush1.msra.mxu0 0.0
  %3672 = vmatprep.subr.mxu0 0.0
  %3673 = vmatpush1.msra.mxu0 0.0
  %3674 = vmatprep.subr.mxu0 0.0
  %3675 = vmatpush1.msra.mxu0 0.0
  %3676 = vmatprep.mubr.f32.mxu0 0.0
  %3677 = vmatmul.mubr.f32.gmra.mrb[0].mxu0 %v3517
  %v3678 = vpop.f32.mrb[0].mxu0
  %v3679 = vadd.f32 0.0, %v3678
  %v3680 = vpop.f32.mrb[0].mxu0
  %3681 = vmatprep.mubr.f32.mxu0 0.0
  %3682 = vmatmul.mubr.f32.gmra.mrb[0].mxu0 %v3520
  %v3683 = vpop.f32.mrb[0].mxu0
  %v3684 = vadd.f32 0.0, %v3683
  %v3685 = vpop.f32.mrb[0].mxu0
  %3686 = vmatprep.mubr.f32.mxu0 0.0
  %3687 = vmatmul.mubr.f32.gmra.mrb[0].mxu0 %v3523
  %v3688 = vpop.f32.mrb[0].mxu0
  %v3689 = vadd.f32 0.0, %v3688
  %v3690 = vpop.f32.mrb[0].mxu0
  %3691 = vmatprep.mubr.f32.mxu0 0.0
  %3692 = vmatmul.mubr.f32.gmra.mrb[0].mxu0 %v3526
  %v3693 = vpop.f32.mrb[0].mxu0
  %v3694 = vadd.f32 0.0, %v3693
  %v3695 = vpop.f32.mrb[0].mxu0
  %3696 = vmatprep.mubr.f32.mxu0 0.0
  %3697 = vmatmul.mubr.f32.gmra.mrb[0].mxu0 %v3529
  %v3698 = vpop.f32.mrb[0].mxu0
  %v3699 = vadd.f32 0.0, %v3698
  %v3700 = vpop.f32.mrb[0].mxu0
  %3701 = vmatprep.mubr.f32.mxu0 0.0
  %3702 = vmatmul.mubr.f32.gmra.mrb[0].mxu0 %v3532
  %v3703 = vpop.f32.mrb[0].mxu0
  %v3704 = vadd.f32 0.0, %v3703
  %v3705 = vpop.f32.mrb[0].mxu0
  %3706 = vmatprep.mubr.f32.mxu0 0.0
  %3707 = vmatmul.mubr.f32.gmra.mrb[0].mxu0 %v3535
  %v3708 = vpop.f32.mrb[0].mxu0
  %v3709 = vadd.f32 0.0, %v3708
  %v3710 = vpop.f32.mrb[0].mxu0
  %3711 = vmatprep.mubr.f32.mxu0 0.0
  %3712 = vmatmul.mubr.f32.gmra.mrb[0].mxu0 %v3538
  %v3713 = vpop.f32.mrb[0].mxu0
  %v3714 = vadd.f32 0.0, %v3713
  %v3715 = vpop.f32.mrb[0].mxu0
  %3716 = vmatprep.mubr.f32.mxu0 0.0
  %3717 = vmatmul.mubr.f32.gmra.mrb[0].mxu0 %v3541
  %v3718 = vpop.f32.mrb[0].mxu0
  %v3719 = vadd.f32 0.0, %v3718
  %v3720 = vpop.f32.mrb[0].mxu0
  %3721 = vmatprep.mubr.f32.mxu0 0.0
  %3722 = vmatmul.mubr.f32.gmra.mrb[0].mxu0 %v3544
  %v3723 = vpop.f32.mrb[0].mxu0
  %v3724 = vadd.f32 0.0, %v3723
  %v3725 = vpop.f32.mrb[0].mxu0
  %3726 = vmatprep.mubr.f32.mxu0 0.0
  %3727 = vmatmul.mubr.f32.gmra.mrb[0].mxu0 %v3547
  %v3728 = vpop.f32.mrb[0].mxu0
  %v3729 = vadd.f32 0.0, %v3728
  %v3730 = vpop.f32.mrb[0].mxu0
  %3731 = vmatprep.mubr.f32.mxu0 0.0
  %3732 = vmatmul.mubr.f32.gmra.mrb[0].mxu0 %v3550
  %v3733 = vpop.f32.mrb[0].mxu0
  %v3734 = vadd.f32 0.0, %v3733
  %v3735 = vpop.f32.mrb[0].mxu0
  %3736 = vmatprep.mubr.f32.mxu0 0.0
  %3737 = vmatmul.mubr.f32.gmra.mrb[0].mxu0 %v3553
  %v3738 = vpop.f32.mrb[0].mxu0
  %v3739 = vadd.f32 0.0, %v3738
  %v3740 = vpop.f32.mrb[0].mxu0
  %3741 = vmatprep.mubr.f32.mxu0 0.0
  %3742 = vmatmul.mubr.f32.gmra.mrb[0].mxu0 %v3556
  %v3743 = vpop.f32.mrb[0].mxu0
  %v3744 = vadd.f32 0.0, %v3743
  %v3745 = vpop.f32.mrb[0].mxu0
  %3746 = vmatprep.mubr.f32.mxu0 0.0
  %3747 = vmatmul.mubr.f32.gmra.mrb[0].mxu0 %v3559
  %v3748 = vpop.f32.mrb[0].mxu0
  %v3749 = vadd.f32 0.0, %v3748
  %v3750 = vpop.f32.mrb[0].mxu0
  %3751 = vmatprep.mubr.f32.mxu0 0.0
  %3752 = vmatmul.mubr.f32.gmra.mrb[0].mxu0 %v3562
  %v3753 = vpop.f32.mrb[0].mxu0
  %v3754 = vadd.f32 0.0, %v3753
  %v3755 = vpop.f32.mrb[0].mxu0
  %3756 = vmatprep.mubr.f32.mxu0 0.0
  %3757 = vmatmul.mubr.f32.gmra.mrb[0].mxu0 %v3565
  %v3758 = vpop.f32.mrb[0].mxu0
  %v3759 = vadd.f32 0.0, %v3758
  %v3760 = vpop.f32.mrb[0].mxu0
  %3761 = vmatprep.mubr.f32.mxu0 0.0
  %3762 = vmatmul.mubr.f32.gmra.mrb[0].mxu0 %v3568
  %v3763 = vpop.f32.mrb[0].mxu0
  %v3764 = vadd.f32 0.0, %v3763
  %v3765 = vpop.f32.mrb[0].mxu0
  %3766 = vmatprep.mubr.f32.mxu0 0.0
  %3767 = vmatmul.mubr.f32.gmra.mrb[0].mxu0 %v3571
  %v3768 = vpop.f32.mrb[0].mxu0
  %v3769 = vadd.f32 0.0, %v3768
  %v3770 = vpop.f32.mrb[0].mxu0
  %3771 = vmatprep.mubr.f32.mxu0 0.0
  %3772 = vmatmul.mubr.f32.gmra.mrb[0].mxu0 %v3574
  %v3773 = vpop.f32.mrb[0].mxu0
  %v3774 = vadd.f32 0.0, %v3773
  %v3775 = vpop.f32.mrb[0].mxu0
  %3776 = vmatprep.mubr.f32.mxu0 0.0
  %3777 = vmatmul.mubr.f32.gmra.mrb[0].mxu0 %v3577
  %v3778 = vpop.f32.mrb[0].mxu0
  %v3779 = vadd.f32 0.0, %v3778
  %v3780 = vpop.f32.mrb[0].mxu0
  %3781 = vmatprep.mubr.f32.mxu0 0.0
  %3782 = vmatmul.mubr.f32.gmra.mrb[0].mxu0 %v3580
  %v3783 = vpop.f32.mrb[0].mxu0
  %v3784 = vadd.f32 0.0, %v3783
  %v3785 = vpop.f32.mrb[0].mxu0
  %3786 = vmatprep.mubr.f32.mxu0 0.0
  %3787 = vmatmul.mubr.f32.gmra.mrb[0].mxu0 %v3583
  %v3788 = vpop.f32.mrb[0].mxu0
  %v3789 = vadd.f32 0.0, %v3788
  %v3790 = vpop.f32.mrb[0].mxu0
  %3791 = vmatprep.mubr.f32.mxu0 0.0
  %3792 = vmatmul.mubr.f32.gmra.mrb[0].mxu0 %v3586
  %v3793 = vpop.f32.mrb[0].mxu0
  %v3794 = vadd.f32 0.0, %v3793
  %v3795 = vpop.f32.mrb[0].mxu0
  %3796 = vmatprep.mubr.f32.mxu0 0.0
  %3797 = vmatmul.mubr.f32.gmra.mrb[0].mxu0 %v3589
  %v3798 = vpop.f32.mrb[0].mxu0
  %v3799 = vadd.f32 0.0, %v3798
  %v3800 = vpop.f32.mrb[0].mxu0
  %3801 = vmatprep.mubr.f32.mxu0 0.0
  %3802 = vmatmul.mubr.f32.gmra.mrb[0].mxu0 %v3592
  %v3803 = vpop.f32.mrb[0].mxu0
  %v3804 = vadd.f32 0.0, %v3803
  %v3805 = vpop.f32.mrb[0].mxu0
  %3806 = vmatprep.mubr.f32.mxu0 0.0
  %3807 = vmatmul.mubr.f32.gmra.mrb[0].mxu0 %v3595
  %v3808 = vpop.f32.mrb[0].mxu0
  %v3809 = vadd.f32 0.0, %v3808
  %v3810 = vpop.f32.mrb[0].mxu0
  %3811 = vmatprep.mubr.f32.mxu0 0.0
  %3812 = vmatmul.mubr.f32.gmra.mrb[0].mxu0 %v3598
  %v3813 = vpop.f32.mrb[0].mxu0
  %v3814 = vadd.f32 0.0, %v3813
  %v3815 = vpop.f32.mrb[0].mxu0
  %3816 = vmatprep.mubr.f32.mxu0 0.0
  %3817 = vmatmul.mubr.f32.gmra.mrb[0].mxu0 %v3601
  %v3818 = vpop.f32.mrb[0].mxu0
  %v3819 = vadd.f32 0.0, %v3818
  %v3820 = vpop.f32.mrb[0].mxu0
  %3821 = vmatprep.mubr.f32.mxu0 0.0
  %3822 = vmatmul.mubr.f32.gmra.mrb[0].mxu0 %v3604
  %v3823 = vpop.f32.mrb[0].mxu0
  %v3824 = vadd.f32 0.0, %v3823
  %v3825 = vpop.f32.mrb[0].mxu0
  %3826 = vmatprep.mubr.f32.mxu0 0.0
  %3827 = vmatmul.mubr.f32.gmra.mrb[0].mxu0 %v3607
  %v3828 = vpop.f32.mrb[0].mxu0
  %v3829 = vadd.f32 0.0, %v3828
  %v3830 = vpop.f32.mrb[0].mxu0
  %3831 = vmatprep.mubr.f32.mxu0 0.0
  %3832 = vmatmul.mubr.f32.gmra.mrb[0].mxu0 %v3610
  %v3833 = vpop.f32.mrb[0].mxu0
  %v3834 = vadd.f32 0.0, %v3833
  %v3835 = vpop.f32.mrb[0].mxu0
  %3836 = vdwg.mxu0
  %v3837 = vld [vmem:[%s2 + $0x2] sm:$0x1]
  %v3838 = vlaneseq
  %v3839 = vshrl.u32 %v3838, 7
  %v3840 = vsub.s32 0, %v3839
  %v3841 = vrot.slane %v3837, %v3840
  %3842 = vmatprep.subr.mxu0 0.0
  %3843 = vmatpush1.msra.mxu0 %v3679
  %3844 = vmatprep.subr.mxu0 0.0
  %3845 = vmatpush1.msra.mxu0 %v3684
  %3846 = vmatprep.subr.mxu0 0.0
  %3847 = vmatpush1.msra.mxu0 %v3689
  %3848 = vmatprep.subr.mxu0 0.0
  %3849 = vmatpush1.msra.mxu0 %v3694
  %3850 = vmatprep.subr.mxu0 0.0
  %3851 = vmatpush1.msra.mxu0 %v3699
  %3852 = vmatprep.subr.mxu0 0.0
  %3853 = vmatpush1.msra.mxu0 %v3704
  %3854 = vmatprep.subr.mxu0 0.0
  %3855 = vmatpush1.msra.mxu0 %v3709
  %3856 = vmatprep.subr.mxu0 0.0
  %3857 = vmatpush1.msra.mxu0 %v3714
  %3858 = vmatprep.subr.mxu0 0.0
  %3859 = vmatpush1.msra.mxu0 %v3719
  %3860 = vmatprep.subr.mxu0 0.0
  %3861 = vmatpush1.msra.mxu0 %v3724
  %3862 = vmatprep.subr.mxu0 0.0
  %3863 = vmatpush1.msra.mxu0 %v3729
  %3864 = vmatprep.subr.mxu0 0.0
  %3865 = vmatpush1.msra.mxu0 %v3734
  %3866 = vmatprep.subr.mxu0 0.0
  %3867 = vmatpush1.msra.mxu0 %v3739
  %3868 = vmatprep.subr.mxu0 0.0
  %3869 = vmatpush1.msra.mxu0 %v3744
  %3870 = vmatprep.subr.mxu0 0.0
  %3871 = vmatpush1.msra.mxu0 %v3749
  %3872 = vmatprep.subr.mxu0 0.0
  %3873 = vmatpush1.msra.mxu0 %v3754
  %3874 = vmatprep.subr.mxu0 0.0
  %3875 = vmatpush1.msra.mxu0 %v3759
  %3876 = vmatprep.subr.mxu0 0.0
  %3877 = vmatpush1.msra.mxu0 %v3764
  %3878 = vmatprep.subr.mxu0 0.0
  %3879 = vmatpush1.msra.mxu0 %v3769
  %3880 = vmatprep.subr.mxu0 0.0
  %3881 = vmatpush1.msra.mxu0 %v3774
  %3882 = vmatprep.subr.mxu0 0.0
  %3883 = vmatpush1.msra.mxu0 %v3779
  %3884 = vmatprep.subr.mxu0 0.0
  %3885 = vmatpush1.msra.mxu0 %v3784
  %3886 = vmatprep.subr.mxu0 0.0
  %3887 = vmatpush1.msra.mxu0 %v3789
  %3888 = vmatprep.subr.mxu0 0.0
  %3889 = vmatpush1.msra.mxu0 %v3794
  %3890 = vmatprep.subr.mxu0 0.0
  %3891 = vmatpush1.msra.mxu0 %v3799
  %3892 = vmatprep.subr.mxu0 0.0
  %3893 = vmatpush1.msra.mxu0 %v3804
  %3894 = vmatprep.subr.mxu0 0.0
  %3895 = vmatpush1.msra.mxu0 %v3809
  %3896 = vmatprep.subr.mxu0 0.0
  %3897 = vmatpush1.msra.mxu0 %v3814
  %3898 = vmatprep.subr.mxu0 0.0
  %3899 = vmatpush1.msra.mxu0 %v3819
  %3900 = vmatprep.subr.mxu0 0.0
  %3901 = vmatpush1.msra.mxu0 %v3824
  %3902 = vmatprep.subr.mxu0 0.0
  %3903 = vmatpush1.msra.mxu0 %v3829
  %3904 = vmatprep.subr.mxu0 0.0
  %3905 = vmatpush1.msra.mxu0 %v3834
  %3906 = vmatprep.mubr.f32.mxu0 %v2480
  %3907 = vmatmul.mubr.f32.gmra.mrb[0].mxu0 %v2479
  %v3908 = vpop.f32.mrb[0].mxu0
  %v3909 = vadd.f32 %v3841, %v3908
  %v3910 = vpop.f32.mrb[0].mxu0
  %3911 = vmatprep.mubr.f32.mxu0 %v2482
  %3912 = vmatmul.mubr.f32.gmra.mrb[0].mxu0 %v2481
  %v3913 = vpop.f32.mrb[0].mxu0
  %v3914 = vadd.f32 %v3841, %v3913
  %v3915 = vpop.f32.mrb[0].mxu0
  %3916 = vmatprep.mubr.f32.mxu0 %v2484
  %3917 = vmatmul.mubr.f32.gmra.mrb[0].mxu0 %v2483
  %v3918 = vpop.f32.mrb[0].mxu0
  %v3919 = vadd.f32 %v3841, %v3918
  %v3920 = vpop.f32.mrb[0].mxu0
  %3921 = vmatprep.mubr.f32.mxu0 %v2486
  %3922 = vmatmul.mubr.f32.gmra.mrb[0].mxu0 %v2485
  %v3923 = vpop.f32.mrb[0].mxu0
  %v3924 = vadd.f32 %v3841, %v3923
  %v3925 = vpop.f32.mrb[0].mxu0
  %3926 = vmatprep.mubr.f32.mxu0 %v2488
  %3927 = vmatmul.mubr.f32.gmra.mrb[0].mxu0 %v2487
  %v3928 = vpop.f32.mrb[0].mxu0
  %v3929 = vadd.f32 %v3841, %v3928
  %v3930 = vpop.f32.mrb[0].mxu0
  %3931 = vmatprep.mubr.f32.mxu0 %v2490
  %3932 = vmatmul.mubr.f32.gmra.mrb[0].mxu0 %v2489
  %v3933 = vpop.f32.mrb[0].mxu0
  %v3934 = vadd.f32 %v3841, %v3933
  %v3935 = vpop.f32.mrb[0].mxu0
  %3936 = vmatprep.mubr.f32.mxu0 %v2492
  %3937 = vmatmul.mubr.f32.gmra.mrb[0].mxu0 %v2491
  %v3938 = vpop.f32.mrb[0].mxu0
  %v3939 = vadd.f32 %v3841, %v3938
  %v3940 = vpop.f32.mrb[0].mxu0
  %3941 = vmatprep.mubr.f32.mxu0 %v2494
  %3942 = vmatmul.mubr.f32.gmra.mrb[0].mxu0 %v2493
  %v3943 = vpop.f32.mrb[0].mxu0
  %v3944 = vadd.f32 %v3841, %v3943
  %v3945 = vpop.f32.mrb[0].mxu0
  %3946 = vmatprep.mubr.f32.mxu0 %v2496
  %3947 = vmatmul.mubr.f32.gmra.mrb[0].mxu0 %v2495
  %v3948 = vpop.f32.mrb[0].mxu0
  %v3949 = vadd.f32 %v3841, %v3948
  %v3950 = vpop.f32.mrb[0].mxu0
  %3951 = vmatprep.mubr.f32.mxu0 %v2498
  %3952 = vmatmul.mubr.f32.gmra.mrb[0].mxu0 %v2497
  %v3953 = vpop.f32.mrb[0].mxu0
  %v3954 = vadd.f32 %v3841, %v3953
  %v3955 = vpop.f32.mrb[0].mxu0
  %3956 = vmatprep.mubr.f32.mxu0 %v2500
  %3957 = vmatmul.mubr.f32.gmra.mrb[0].mxu0 %v2499
  %v3958 = vpop.f32.mrb[0].mxu0
  %v3959 = vadd.f32 %v3841, %v3958
  %v3960 = vpop.f32.mrb[0].mxu0
  %3961 = vmatprep.mubr.f32.mxu0 %v2502
  %3962 = vmatmul.mubr.f32.gmra.mrb[0].mxu0 %v2501
  %v3963 = vpop.f32.mrb[0].mxu0
  %v3964 = vadd.f32 %v3841, %v3963
  %v3965 = vpop.f32.mrb[0].mxu0
  %3966 = vmatprep.mubr.f32.mxu0 %v2504
  %3967 = vmatmul.mubr.f32.gmra.mrb[0].mxu0 %v2503
  %v3968 = vpop.f32.mrb[0].mxu0
  %v3969 = vadd.f32 %v3841, %v3968
  %v3970 = vpop.f32.mrb[0].mxu0
  %3971 = vmatprep.mubr.f32.mxu0 %v2506
  %3972 = vmatmul.mubr.f32.gmra.mrb[0].mxu0 %v2505
  %v3973 = vpop.f32.mrb[0].mxu0
  %v3974 = vadd.f32 %v3841, %v3973
  %v3975 = vpop.f32.mrb[0].mxu0
  %3976 = vmatprep.mubr.f32.mxu0 %v2508
  %3977 = vmatmul.mubr.f32.gmra.mrb[0].mxu0 %v2507
  %v3978 = vpop.f32.mrb[0].mxu0
  %v3979 = vadd.f32 %v3841, %v3978
  %v3980 = vpop.f32.mrb[0].mxu0
  %3981 = vmatprep.mubr.f32.mxu0 %v2510
  %3982 = vmatmul.mubr.f32.gmra.mrb[0].mxu0 %v2509
  %v3983 = vpop.f32.mrb[0].mxu0
  %v3984 = vadd.f32 %v3841, %v3983
  %v3985 = vpop.f32.mrb[0].mxu0
  %3986 = vmatprep.mubr.f32.mxu0 %v2512
  %3987 = vmatmul.mubr.f32.gmra.mrb[0].mxu0 %v2511
  %v3988 = vpop.f32.mrb[0].mxu0
  %v3989 = vadd.f32 %v3841, %v3988
  %v3990 = vpop.f32.mrb[0].mxu0
  %3991 = vmatprep.mubr.f32.mxu0 %v2514
  %3992 = vmatmul.mubr.f32.gmra.mrb[0].mxu0 %v2513
  %v3993 = vpop.f32.mrb[0].mxu0
  %v3994 = vadd.f32 %v3841, %v3993
  %v3995 = vpop.f32.mrb[0].mxu0
  %3996 = vmatprep.mubr.f32.mxu0 %v2516
  %3997 = vmatmul.mubr.f32.gmra.mrb[0].mxu0 %v2515
  %v3998 = vpop.f32.mrb[0].mxu0
  %v3999 = vadd.f32 %v3841, %v3998
  %v4000 = vpop.f32.mrb[0].mxu0
  %4001 = vmatprep.mubr.f32.mxu0 %v2518
  %4002 = vmatmul.mubr.f32.gmra.mrb[0].mxu0 %v2517
  %v4003 = vpop.f32.mrb[0].mxu0
  %v4004 = vadd.f32 %v3841, %v4003
  %v4005 = vpop.f32.mrb[0].mxu0
  %4006 = vmatprep.mubr.f32.mxu0 %v2520
  %4007 = vmatmul.mubr.f32.gmra.mrb[0].mxu0 %v2519
  %v4008 = vpop.f32.mrb[0].mxu0
  %v4009 = vadd.f32 %v3841, %v4008
  %v4010 = vpop.f32.mrb[0].mxu0
  %4011 = vmatprep.mubr.f32.mxu0 %v2522
  %4012 = vmatmul.mubr.f32.gmra.mrb[0].mxu0 %v2521
  %v4013 = vpop.f32.mrb[0].mxu0
  %v4014 = vadd.f32 %v3841, %v4013
  %v4015 = vpop.f32.mrb[0].mxu0
  %4016 = vmatprep.mubr.f32.mxu0 %v2524
  %4017 = vmatmul.mubr.f32.gmra.mrb[0].mxu0 %v2523
  %v4018 = vpop.f32.mrb[0].mxu0
  %v4019 = vadd.f32 %v3841, %v4018
  %v4020 = vpop.f32.mrb[0].mxu0
  %4021 = vmatprep.mubr.f32.mxu0 %v2526
  %4022 = vmatmul.mubr.f32.gmra.mrb[0].mxu0 %v2525
  %v4023 = vpop.f32.mrb[0].mxu0
  %v4024 = vadd.f32 %v3841, %v4023
  %v4025 = vpop.f32.mrb[0].mxu0
  %4026 = vmatprep.mubr.f32.mxu0 %v2528
  %4027 = vmatmul.mubr.f32.gmra.mrb[0].mxu0 %v2527
  %v4028 = vpop.f32.mrb[0].mxu0
  %v4029 = vadd.f32 %v3841, %v4028
  %v4030 = vpop.f32.mrb[0].mxu0
  %4031 = vmatprep.mubr.f32.mxu0 %v2530
  %4032 = vmatmul.mubr.f32.gmra.mrb[0].mxu0 %v2529
  %v4033 = vpop.f32.mrb[0].mxu0
  %v4034 = vadd.f32 %v3841, %v4033
  %v4035 = vpop.f32.mrb[0].mxu0
  %4036 = vmatprep.mubr.f32.mxu0 %v2532
  %4037 = vmatmul.mubr.f32.gmra.mrb[0].mxu0 %v2531
  %v4038 = vpop.f32.mrb[0].mxu0
  %v4039 = vadd.f32 %v3841, %v4038
  %v4040 = vpop.f32.mrb[0].mxu0
  %4041 = vmatprep.mubr.f32.mxu0 %v2534
  %4042 = vmatmul.mubr.f32.gmra.mrb[0].mxu0 %v2533
  %v4043 = vpop.f32.mrb[0].mxu0
  %v4044 = vadd.f32 %v3841, %v4043
  %v4045 = vpop.f32.mrb[0].mxu0
  %4046 = vmatprep.mubr.f32.mxu0 %v2536
  %4047 = vmatmul.mubr.f32.gmra.mrb[0].mxu0 %v2535
  %v4048 = vpop.f32.mrb[0].mxu0
  %v4049 = vadd.f32 %v3841, %v4048
  %v4050 = vpop.f32.mrb[0].mxu0
  %4051 = vmatprep.mubr.f32.mxu0 %v2538
  %4052 = vmatmul.mubr.f32.gmra.mrb[0].mxu0 %v2537
  %v4053 = vpop.f32.mrb[0].mxu0
  %v4054 = vadd.f32 %v3841, %v4053
  %v4055 = vpop.f32.mrb[0].mxu0
  %4056 = vmatprep.mubr.f32.mxu0 %v2540
  %4057 = vmatmul.mubr.f32.gmra.mrb[0].mxu0 %v2539
  %v4058 = vpop.f32.mrb[0].mxu0
  %v4059 = vadd.f32 %v3841, %v4058
  %v4060 = vpop.f32.mrb[0].mxu0
  %4061 = vmatprep.mubr.f32.mxu0 %v2542
  %4062 = vmatmul.mubr.f32.gmra.mrb[0].mxu0 %v2541
  %v4063 = vpop.f32.mrb[0].mxu0
  %v4064 = vadd.f32 %v3841, %v4063
  %v4065 = vpop.f32.mrb[0].mxu0
  %4066 = vdwg.mxu0
  %v4067 = vtanh.pop %v3909
  %v4068 = vtanh.pop %v3914
  %v4069 = vtanh.pop %v3919
  %v4070 = vtanh.pop %v3924
  %v4071 = vtanh.pop %v3929
  %v4072 = vtanh.pop %v3934
  %v4073 = vtanh.pop %v3939
  %v4074 = vtanh.pop %v3944
  %v4075 = vtanh.pop %v3949
  %v4076 = vtanh.pop %v3954
  %v4077 = vtanh.pop %v3959
  %v4078 = vtanh.pop %v3964
  %v4079 = vtanh.pop %v3969
  %v4080 = vtanh.pop %v3974
  %v4081 = vtanh.pop %v3979
  %v4082 = vtanh.pop %v3984
  %v4083 = vtanh.pop %v3989
  %v4084 = vtanh.pop %v3994
  %v4085 = vtanh.pop %v3999
  %v4086 = vtanh.pop %v4004
  %v4087 = vtanh.pop %v4009
  %v4088 = vtanh.pop %v4014
  %v4089 = vtanh.pop %v4019
  %v4090 = vtanh.pop %v4024
  %v4091 = vtanh.pop %v4029
  %v4092 = vtanh.pop %v4034
  %v4093 = vtanh.pop %v4039
  %v4094 = vtanh.pop %v4044
  %v4095 = vtanh.pop %v4049
  %v4096 = vtanh.pop %v4054
  %v4097 = vtanh.pop %v4059
  %v4098 = vtanh.pop %v4064
  %4100 = vset.pattern.permute.xlu0 18
  %4101 = vperm.xlu0 %4100, %v4067
  %v4102 = vpop.permute.xlu0 %4101
  %4105 = vset.pattern.permute.xlu0 18
  %4106 = vperm.xlu0 %4105, %v4068
  %v4107 = vpop.permute.xlu0 %4106
  %4110 = vset.pattern.permute.xlu0 18
  %4111 = vperm.xlu0 %4110, %v4069
  %v4112 = vpop.permute.xlu0 %4111
  %4115 = vset.pattern.permute.xlu0 18
  %4116 = vperm.xlu0 %4115, %v4070
  %v4117 = vpop.permute.xlu0 %4116
  %4120 = vset.pattern.permute.xlu0 18
  %4121 = vperm.xlu0 %4120, %v4071
  %v4122 = vpop.permute.xlu0 %4121
  %4125 = vset.pattern.permute.xlu0 18
  %4126 = vperm.xlu0 %4125, %v4072
  %v4127 = vpop.permute.xlu0 %4126
  %4130 = vset.pattern.permute.xlu0 18
  %4131 = vperm.xlu0 %4130, %v4073
  %v4132 = vpop.permute.xlu0 %4131
  %4135 = vset.pattern.permute.xlu0 18
  %4136 = vperm.xlu0 %4135, %v4074
  %v4137 = vpop.permute.xlu0 %4136
  %4140 = vset.pattern.permute.xlu0 18
  %4141 = vperm.xlu0 %4140, %v4075
  %v4142 = vpop.permute.xlu0 %4141
  %4145 = vset.pattern.permute.xlu0 18
  %4146 = vperm.xlu0 %4145, %v4076
  %v4147 = vpop.permute.xlu0 %4146
  %4150 = vset.pattern.permute.xlu0 18
  %4151 = vperm.xlu0 %4150, %v4077
  %v4152 = vpop.permute.xlu0 %4151
  %4155 = vset.pattern.permute.xlu0 18
  %4156 = vperm.xlu0 %4155, %v4078
  %v4157 = vpop.permute.xlu0 %4156
  %4160 = vset.pattern.permute.xlu0 18
  %4161 = vperm.xlu0 %4160, %v4079
  %v4162 = vpop.permute.xlu0 %4161
  %4165 = vset.pattern.permute.xlu0 18
  %4166 = vperm.xlu0 %4165, %v4080
  %v4167 = vpop.permute.xlu0 %4166
  %4170 = vset.pattern.permute.xlu0 18
  %4171 = vperm.xlu0 %4170, %v4081
  %v4172 = vpop.permute.xlu0 %4171
  %4175 = vset.pattern.permute.xlu0 18
  %4176 = vperm.xlu0 %4175, %v4082
  %v4177 = vpop.permute.xlu0 %4176
  %4180 = vset.pattern.permute.xlu0 18
  %4181 = vperm.xlu0 %4180, %v4083
  %v4182 = vpop.permute.xlu0 %4181
  %4185 = vset.pattern.permute.xlu0 18
  %4186 = vperm.xlu0 %4185, %v4084
  %v4187 = vpop.permute.xlu0 %4186
  %4190 = vset.pattern.permute.xlu0 18
  %4191 = vperm.xlu0 %4190, %v4085
  %v4192 = vpop.permute.xlu0 %4191
  %4195 = vset.pattern.permute.xlu0 18
  %4196 = vperm.xlu0 %4195, %v4086
  %v4197 = vpop.permute.xlu0 %4196
  %4200 = vset.pattern.permute.xlu0 18
  %4201 = vperm.xlu0 %4200, %v4087
  %v4202 = vpop.permute.xlu0 %4201
  %4205 = vset.pattern.permute.xlu0 18
  %4206 = vperm.xlu0 %4205, %v4088
  %v4207 = vpop.permute.xlu0 %4206
  %4210 = vset.pattern.permute.xlu0 18
  %4211 = vperm.xlu0 %4210, %v4089
  %v4212 = vpop.permute.xlu0 %4211
  %4215 = vset.pattern.permute.xlu0 18
  %4216 = vperm.xlu0 %4215, %v4090
  %v4217 = vpop.permute.xlu0 %4216
  %4220 = vset.pattern.permute.xlu0 18
  %4221 = vperm.xlu0 %4220, %v4091
  %v4222 = vpop.permute.xlu0 %4221
  %4225 = vset.pattern.permute.xlu0 18
  %4226 = vperm.xlu0 %4225, %v4092
  %v4227 = vpop.permute.xlu0 %4226
  %4230 = vset.pattern.permute.xlu0 18
  %4231 = vperm.xlu0 %4230, %v4093
  %v4232 = vpop.permute.xlu0 %4231
  %4235 = vset.pattern.permute.xlu0 18
  %4236 = vperm.xlu0 %4235, %v4094
  %v4237 = vpop.permute.xlu0 %4236
  %4240 = vset.pattern.permute.xlu0 18
  %4241 = vperm.xlu0 %4240, %v4095
  %v4242 = vpop.permute.xlu0 %4241
  %4245 = vset.pattern.permute.xlu0 18
  %4246 = vperm.xlu0 %4245, %v4096
  %v4247 = vpop.permute.xlu0 %4246
  %4250 = vset.pattern.permute.xlu0 18
  %4251 = vperm.xlu0 %4250, %v4097
  %v4252 = vpop.permute.xlu0 %4251
  %4255 = vset.pattern.permute.xlu0 18
  %4256 = vperm.xlu0 %4255, %v4098
  %v4257 = vpop.permute.xlu0 %4256
  %v4259 = vmul.f32 %v4102, %v3909
  %v4260 = vmul.f32 %v4107, %v3914
  %v4261 = vmul.f32 %v4112, %v3919
  %v4262 = vmul.f32 %v4117, %v3924
  %v4263 = vmul.f32 %v4122, %v3929
  %v4264 = vmul.f32 %v4127, %v3934
  %v4265 = vmul.f32 %v4132, %v3939
  %v4266 = vmul.f32 %v4137, %v3944
  %v4267 = vmul.f32 %v4142, %v3949
  %v4268 = vmul.f32 %v4147, %v3954
  %v4269 = vmul.f32 %v4152, %v3959
  %v4270 = vmul.f32 %v4157, %v3964
  %v4271 = vmul.f32 %v4162, %v3969
  %v4272 = vmul.f32 %v4167, %v3974
  %v4273 = vmul.f32 %v4172, %v3979
  %v4274 = vmul.f32 %v4177, %v3984
  %v4275 = vmul.f32 %v4182, %v3989
  %v4276 = vmul.f32 %v4187, %v3994
  %v4277 = vmul.f32 %v4192, %v3999
  %v4278 = vmul.f32 %v4197, %v4004
  %v4279 = vmul.f32 %v4202, %v4009
  %v4280 = vmul.f32 %v4207, %v4014
  %v4281 = vmul.f32 %v4212, %v4019
  %v4282 = vmul.f32 %v4217, %v4024
  %v4283 = vmul.f32 %v4222, %v4029
  %v4284 = vmul.f32 %v4227, %v4034
  %v4285 = vmul.f32 %v4232, %v4039
  %v4286 = vmul.f32 %v4237, %v4044
  %v4287 = vmul.f32 %v4242, %v4049
  %v4288 = vmul.f32 %v4247, %v4054
  %v4289 = vmul.f32 %v4252, %v4059
  %v4290 = vmul.f32 %v4257, %v4064
  %vm4291 = vcmask 146448
  %v4292 = vsel %vm4291, %v4259, 0.0
  %v4293 = vrot.slane %v4292, 4
  %v4294 = vadd.f32 %v4292, %v4293
  %v4295 = vrot.slane %v4294, 2
  %v4296 = vadd.f32 %v4294, %v4295
  %v4297 = vrot.slane %v4296, 1
  %v4298 = vadd.f32 %v4296, %v4297
  %v4299 = vsel %vm4291, %v4260, 0.0
  %v4300 = vrot.slane %v4299, 4
  %v4301 = vadd.f32 %v4299, %v4300
  %v4302 = vrot.slane %v4301, 2
  %v4303 = vadd.f32 %v4301, %v4302
  %v4304 = vrot.slane %v4303, 1
  %v4305 = vadd.f32 %v4303, %v4304
  %v4306 = vsel %vm4291, %v4261, 0.0
  %v4307 = vrot.slane %v4306, 4
  %v4308 = vadd.f32 %v4306, %v4307
  %v4309 = vrot.slane %v4308, 2
  %v4310 = vadd.f32 %v4308, %v4309
  %v4311 = vrot.slane %v4310, 1
  %v4312 = vadd.f32 %v4310, %v4311
  %v4313 = vsel %vm4291, %v4262, 0.0
  %v4314 = vrot.slane %v4313, 4
  %v4315 = vadd.f32 %v4313, %v4314
  %v4316 = vrot.slane %v4315, 2
  %v4317 = vadd.f32 %v4315, %v4316
  %v4318 = vrot.slane %v4317, 1
  %v4319 = vadd.f32 %v4317, %v4318
  %v4320 = vsel %vm4291, %v4263, 0.0
  %v4321 = vrot.slane %v4320, 4
  %v4322 = vadd.f32 %v4320, %v4321
  %v4323 = vrot.slane %v4322, 2
  %v4324 = vadd.f32 %v4322, %v4323
  %v4325 = vrot.slane %v4324, 1
  %v4326 = vadd.f32 %v4324, %v4325
  %v4327 = vsel %vm4291, %v4264, 0.0
  %v4328 = vrot.slane %v4327, 4
  %v4329 = vadd.f32 %v4327, %v4328
  %v4330 = vrot.slane %v4329, 2
  %v4331 = vadd.f32 %v4329, %v4330
  %v4332 = vrot.slane %v4331, 1
  %v4333 = vadd.f32 %v4331, %v4332
  %v4334 = vsel %vm4291, %v4265, 0.0
  %v4335 = vrot.slane %v4334, 4
  %v4336 = vadd.f32 %v4334, %v4335
  %v4337 = vrot.slane %v4336, 2
  %v4338 = vadd.f32 %v4336, %v4337
  %v4339 = vrot.slane %v4338, 1
  %v4340 = vadd.f32 %v4338, %v4339
  %v4341 = vsel %vm4291, %v4266, 0.0
  %v4342 = vrot.slane %v4341, 4
  %v4343 = vadd.f32 %v4341, %v4342
  %v4344 = vrot.slane %v4343, 2
  %v4345 = vadd.f32 %v4343, %v4344
  %v4346 = vrot.slane %v4345, 1
  %v4347 = vadd.f32 %v4345, %v4346
  %v4348 = vsel %vm4291, %v4267, 0.0
  %v4349 = vrot.slane %v4348, 4
  %v4350 = vadd.f32 %v4348, %v4349
  %v4351 = vrot.slane %v4350, 2
  %v4352 = vadd.f32 %v4350, %v4351
  %v4353 = vrot.slane %v4352, 1
  %v4354 = vadd.f32 %v4352, %v4353
  %v4355 = vsel %vm4291, %v4268, 0.0
  %v4356 = vrot.slane %v4355, 4
  %v4357 = vadd.f32 %v4355, %v4356
  %v4358 = vrot.slane %v4357, 2
  %v4359 = vadd.f32 %v4357, %v4358
  %v4360 = vrot.slane %v4359, 1
  %v4361 = vadd.f32 %v4359, %v4360
  %v4362 = vsel %vm4291, %v4269, 0.0
  %v4363 = vrot.slane %v4362, 4
  %v4364 = vadd.f32 %v4362, %v4363
  %v4365 = vrot.slane %v4364, 2
  %v4366 = vadd.f32 %v4364, %v4365
  %v4367 = vrot.slane %v4366, 1
  %v4368 = vadd.f32 %v4366, %v4367
  %v4369 = vsel %vm4291, %v4270, 0.0
  %v4370 = vrot.slane %v4369, 4
  %v4371 = vadd.f32 %v4369, %v4370
  %v4372 = vrot.slane %v4371, 2
  %v4373 = vadd.f32 %v4371, %v4372
  %v4374 = vrot.slane %v4373, 1
  %v4375 = vadd.f32 %v4373, %v4374
  %v4376 = vsel %vm4291, %v4271, 0.0
  %v4377 = vrot.slane %v4376, 4
  %v4378 = vadd.f32 %v4376, %v4377
  %v4379 = vrot.slane %v4378, 2
  %v4380 = vadd.f32 %v4378, %v4379
  %v4381 = vrot.slane %v4380, 1
  %v4382 = vadd.f32 %v4380, %v4381
  %v4383 = vsel %vm4291, %v4272, 0.0
  %v4384 = vrot.slane %v4383, 4
  %v4385 = vadd.f32 %v4383, %v4384
  %v4386 = vrot.slane %v4385, 2
  %v4387 = vadd.f32 %v4385, %v4386
  %v4388 = vrot.slane %v4387, 1
  %v4389 = vadd.f32 %v4387, %v4388
  %v4390 = vsel %vm4291, %v4273, 0.0
  %v4391 = vrot.slane %v4390, 4
  %v4392 = vadd.f32 %v4390, %v4391
  %v4393 = vrot.slane %v4392, 2
  %v4394 = vadd.f32 %v4392, %v4393
  %v4395 = vrot.slane %v4394, 1
  %v4396 = vadd.f32 %v4394, %v4395
  %v4397 = vsel %vm4291, %v4274, 0.0
  %v4398 = vrot.slane %v4397, 4
  %v4399 = vadd.f32 %v4397, %v4398
  %v4400 = vrot.slane %v4399, 2
  %v4401 = vadd.f32 %v4399, %v4400
  %v4402 = vrot.slane %v4401, 1
  %v4403 = vadd.f32 %v4401, %v4402
  %v4404 = vsel %vm4291, %v4275, 0.0
  %v4405 = vrot.slane %v4404, 4
  %v4406 = vadd.f32 %v4404, %v4405
  %v4407 = vrot.slane %v4406, 2
  %v4408 = vadd.f32 %v4406, %v4407
  %v4409 = vrot.slane %v4408, 1
  %v4410 = vadd.f32 %v4408, %v4409
  %v4411 = vsel %vm4291, %v4276, 0.0
  %v4412 = vrot.slane %v4411, 4
  %v4413 = vadd.f32 %v4411, %v4412
  %v4414 = vrot.slane %v4413, 2
  %v4415 = vadd.f32 %v4413, %v4414
  %v4416 = vrot.slane %v4415, 1
  %v4417 = vadd.f32 %v4415, %v4416
  %v4418 = vsel %vm4291, %v4277, 0.0
  %v4419 = vrot.slane %v4418, 4
  %v4420 = vadd.f32 %v4418, %v4419
  %v4421 = vrot.slane %v4420, 2
  %v4422 = vadd.f32 %v4420, %v4421
  %v4423 = vrot.slane %v4422, 1
  %v4424 = vadd.f32 %v4422, %v4423
  %v4425 = vsel %vm4291, %v4278, 0.0
  %v4426 = vrot.slane %v4425, 4
  %v4427 = vadd.f32 %v4425, %v4426
  %v4428 = vrot.slane %v4427, 2
  %v4429 = vadd.f32 %v4427, %v4428
  %v4430 = vrot.slane %v4429, 1
  %v4431 = vadd.f32 %v4429, %v4430
  %v4432 = vsel %vm4291, %v4279, 0.0
  %v4433 = vrot.slane %v4432, 4
  %v4434 = vadd.f32 %v4432, %v4433
  %v4435 = vrot.slane %v4434, 2
  %v4436 = vadd.f32 %v4434, %v4435
  %v4437 = vrot.slane %v4436, 1
  %v4438 = vadd.f32 %v4436, %v4437
  %v4439 = vsel %vm4291, %v4280, 0.0
  %v4440 = vrot.slane %v4439, 4
  %v4441 = vadd.f32 %v4439, %v4440
  %v4442 = vrot.slane %v4441, 2
  %v4443 = vadd.f32 %v4441, %v4442
  %v4444 = vrot.slane %v4443, 1
  %v4445 = vadd.f32 %v4443, %v4444
  %v4446 = vsel %vm4291, %v4281, 0.0
  %v4447 = vrot.slane %v4446, 4
  %v4448 = vadd.f32 %v4446, %v4447
  %v4449 = vrot.slane %v4448, 2
  %v4450 = vadd.f32 %v4448, %v4449
  %v4451 = vrot.slane %v4450, 1
  %v4452 = vadd.f32 %v4450, %v4451
  %v4453 = vsel %vm4291, %v4282, 0.0
  %v4454 = vrot.slane %v4453, 4
  %v4455 = vadd.f32 %v4453, %v4454
  %v4456 = vrot.slane %v4455, 2
  %v4457 = vadd.f32 %v4455, %v4456
  %v4458 = vrot.slane %v4457, 1
  %v4459 = vadd.f32 %v4457, %v4458
  %v4460 = vsel %vm4291, %v4283, 0.0
  %v4461 = vrot.slane %v4460, 4
  %v4462 = vadd.f32 %v4460, %v4461
  %v4463 = vrot.slane %v4462, 2
  %v4464 = vadd.f32 %v4462, %v4463
  %v4465 = vrot.slane %v4464, 1
  %v4466 = vadd.f32 %v4464, %v4465
  %v4467 = vsel %vm4291, %v4284, 0.0
  %v4468 = vrot.slane %v4467, 4
  %v4469 = vadd.f32 %v4467, %v4468
  %v4470 = vrot.slane %v4469, 2
  %v4471 = vadd.f32 %v4469, %v4470
  %v4472 = vrot.slane %v4471, 1
  %v4473 = vadd.f32 %v4471, %v4472
  %v4474 = vsel %vm4291, %v4285, 0.0
  %v4475 = vrot.slane %v4474, 4
  %v4476 = vadd.f32 %v4474, %v4475
  %v4477 = vrot.slane %v4476, 2
  %v4478 = vadd.f32 %v4476, %v4477
  %v4479 = vrot.slane %v4478, 1
  %v4480 = vadd.f32 %v4478, %v4479
  %v4481 = vsel %vm4291, %v4286, 0.0
  %v4482 = vrot.slane %v4481, 4
  %v4483 = vadd.f32 %v4481, %v4482
  %v4484 = vrot.slane %v4483, 2
  %v4485 = vadd.f32 %v4483, %v4484
  %v4486 = vrot.slane %v4485, 1
  %v4487 = vadd.f32 %v4485, %v4486
  %v4488 = vsel %vm4291, %v4287, 0.0
  %v4489 = vrot.slane %v4488, 4
  %v4490 = vadd.f32 %v4488, %v4489
  %v4491 = vrot.slane %v4490, 2
  %v4492 = vadd.f32 %v4490, %v4491
  %v4493 = vrot.slane %v4492, 1
  %v4494 = vadd.f32 %v4492, %v4493
  %v4495 = vsel %vm4291, %v4288, 0.0
  %v4496 = vrot.slane %v4495, 4
  %v4497 = vadd.f32 %v4495, %v4496
  %v4498 = vrot.slane %v4497, 2
  %v4499 = vadd.f32 %v4497, %v4498
  %v4500 = vrot.slane %v4499, 1
  %v4501 = vadd.f32 %v4499, %v4500
  %v4502 = vsel %vm4291, %v4289, 0.0
  %v4503 = vrot.slane %v4502, 4
  %v4504 = vadd.f32 %v4502, %v4503
  %v4505 = vrot.slane %v4504, 2
  %v4506 = vadd.f32 %v4504, %v4505
  %v4507 = vrot.slane %v4506, 1
  %v4508 = vadd.f32 %v4506, %v4507
  %v4509 = vsel %vm4291, %v4290, 0.0
  %v4510 = vrot.slane %v4509, 4
  %v4511 = vadd.f32 %v4509, %v4510
  %v4512 = vrot.slane %v4511, 2
  %v4513 = vadd.f32 %v4511, %v4512
  %v4514 = vrot.slane %v4513, 1
  %v4515 = vadd.f32 %v4513, %v4514
  %v4548 = vsel %vm732, %v4305, %v4298
  %v4549 = vsel %vm734, %v4312, %v4548
  %v4550 = vsel %vm736, %v4319, %v4549
  %v4551 = vsel %vm738, %v4326, %v4550
  %v4552 = vsel %vm740, %v4333, %v4551
  %v4553 = vsel %vm742, %v4340, %v4552
  %v4554 = vsel %vm744, %v4347, %v4553
  %v4555 = vsel %vm732, %v4361, %v4354
  %v4556 = vsel %vm734, %v4368, %v4555
  %v4557 = vsel %vm736, %v4375, %v4556
  %v4558 = vsel %vm738, %v4382, %v4557
  %v4559 = vsel %vm740, %v4389, %v4558
  %v4560 = vsel %vm742, %v4396, %v4559
  %v4561 = vsel %vm744, %v4403, %v4560
  %v4562 = vsel %vm732, %v4417, %v4410
  %v4563 = vsel %vm734, %v4424, %v4562
  %v4564 = vsel %vm736, %v4431, %v4563
  %v4565 = vsel %vm738, %v4438, %v4564
  %v4566 = vsel %vm740, %v4445, %v4565
  %v4567 = vsel %vm742, %v4452, %v4566
  %v4568 = vsel %vm744, %v4459, %v4567
  %v4569 = vsel %vm732, %v4473, %v4466
  %v4570 = vsel %vm734, %v4480, %v4569
  %v4571 = vsel %vm736, %v4487, %v4570
  %v4572 = vsel %vm738, %v4494, %v4571
  %v4573 = vsel %vm740, %v4501, %v4572
  %v4574 = vsel %vm742, %v4508, %v4573
  %v4575 = vsel %vm744, %v4515, %v4574
  %4576 = vrot.lane.b32.xlu0 %v4554, 126
  %v4577 = vpop.permute.xlu0 %4576
  %4578 = vrot.lane.b32.xlu0 %v4561, 126
  %v4579 = vpop.permute.xlu0 %4578
  %4580 = vrot.lane.b32.xlu0 %v4568, 126
  %v4581 = vpop.permute.xlu0 %4580
  %4582 = vrot.lane.b32.xlu0 %v4575, 126
  %v4583 = vpop.permute.xlu0 %4582
  %vm4588 = vcmask 130048
  %v4589 = vsel %vm4588, %v4577, 0.0
  %4590 = vadd.xlane.f32.xlu0 %v4589
  %v4591 = vpop.xlane.xlu0 %4590
  %v4592 = vsel %vm4588, %v4579, 0.0
  %4593 = vadd.xlane.f32.xlu0 %v4592
  %v4594 = vpop.xlane.xlu0 %4593
  %v4595 = vsel %vm4588, %v4581, 0.0
  %4596 = vadd.xlane.f32.xlu0 %v4595
  %v4597 = vpop.xlane.xlu0 %4596
  %v4598 = vsel %vm4588, %v4583, 0.0
  %4599 = vadd.xlane.f32.xlu0 %v4598
  %v4600 = vpop.xlane.xlu0 %4599
  %v4601 = vrcp.pop 16.0
  %v4602 = vmul.f32 %v4591, %v4601
  %v4603 = vmul.f32 %v4594, %v4601
  %v4604 = vmul.f32 %v4597, %v4601
  %v4605 = vmul.f32 %v4600, %v4601
  %v4610 = vrot.slane %v4602, 1
  %v4611 = vrot.slane %v4602, 2
  %v4612 = vrot.slane %v4602, 3
  %v4613 = vrot.slane %v4602, 4
  %v4614 = vrot.slane %v4602, 5
  %v4615 = vrot.slane %v4602, 6
  %v4616 = vrot.slane %v4602, 7
  %v4617 = vrot.slane %v4603, 1
  %v4618 = vrot.slane %v4603, 2
  %v4619 = vrot.slane %v4603, 3
  %v4620 = vrot.slane %v4603, 4
  %v4621 = vrot.slane %v4603, 5
  %v4622 = vrot.slane %v4603, 6
  %v4623 = vrot.slane %v4603, 7
  %v4624 = vrot.slane %v4604, 1
  %v4625 = vrot.slane %v4604, 2
  %v4626 = vrot.slane %v4604, 3
  %v4627 = vrot.slane %v4604, 4
  %v4628 = vrot.slane %v4604, 5
  %v4629 = vrot.slane %v4604, 6
  %v4630 = vrot.slane %v4604, 7
  %v4631 = vrot.slane %v4605, 1
  %v4632 = vrot.slane %v4605, 2
  %v4633 = vrot.slane %v4605, 3
  %v4634 = vrot.slane %v4605, 4
  %v4635 = vrot.slane %v4605, 5
  %v4636 = vrot.slane %v4605, 6
  %v4637 = vrot.slane %v4605, 7
  %v4670 = vsub.f32 %v4298, %v4602
  %v4671 = vsub.f32 %v4305, %v4610
  %v4672 = vsub.f32 %v4312, %v4611
  %v4673 = vsub.f32 %v4319, %v4612
  %v4674 = vsub.f32 %v4326, %v4613
  %v4675 = vsub.f32 %v4333, %v4614
  %v4676 = vsub.f32 %v4340, %v4615
  %v4677 = vsub.f32 %v4347, %v4616
  %v4678 = vsub.f32 %v4354, %v4603
  %v4679 = vsub.f32 %v4361, %v4617
  %v4680 = vsub.f32 %v4368, %v4618
  %v4681 = vsub.f32 %v4375, %v4619
  %v4682 = vsub.f32 %v4382, %v4620
  %v4683 = vsub.f32 %v4389, %v4621
  %v4684 = vsub.f32 %v4396, %v4622
  %v4685 = vsub.f32 %v4403, %v4623
  %v4686 = vsub.f32 %v4410, %v4604
  %v4687 = vsub.f32 %v4417, %v4624
  %v4688 = vsub.f32 %v4424, %v4625
  %v4689 = vsub.f32 %v4431, %v4626
  %v4690 = vsub.f32 %v4438, %v4627
  %v4691 = vsub.f32 %v4445, %v4628
  %v4692 = vsub.f32 %v4452, %v4629
  %v4693 = vsub.f32 %v4459, %v4630
  %v4694 = vsub.f32 %v4466, %v4605
  %v4695 = vsub.f32 %v4473, %v4631
  %v4696 = vsub.f32 %v4480, %v4632
  %v4697 = vsub.f32 %v4487, %v4633
  %v4698 = vsub.f32 %v4494, %v4634
  %v4699 = vsub.f32 %v4501, %v4635
  %v4700 = vsub.f32 %v4508, %v4636
  %v4701 = vsub.f32 %v4515, %v4637
  %v4702 = vmul.f32 %v4670, %v4670
  %v4703 = vmul.f32 %v4671, %v4671
  %v4704 = vmul.f32 %v4672, %v4672
  %v4705 = vmul.f32 %v4673, %v4673
  %v4706 = vmul.f32 %v4674, %v4674
  %v4707 = vmul.f32 %v4675, %v4675
  %v4708 = vmul.f32 %v4676, %v4676
  %v4709 = vmul.f32 %v4677, %v4677
  %v4710 = vmul.f32 %v4678, %v4678
  %v4711 = vmul.f32 %v4679, %v4679
  %v4712 = vmul.f32 %v4680, %v4680
  %v4713 = vmul.f32 %v4681, %v4681
  %v4714 = vmul.f32 %v4682, %v4682
  %v4715 = vmul.f32 %v4683, %v4683
  %v4716 = vmul.f32 %v4684, %v4684
  %v4717 = vmul.f32 %v4685, %v4685
  %v4718 = vmul.f32 %v4686, %v4686
  %v4719 = vmul.f32 %v4687, %v4687
  %v4720 = vmul.f32 %v4688, %v4688
  %v4721 = vmul.f32 %v4689, %v4689
  %v4722 = vmul.f32 %v4690, %v4690
  %v4723 = vmul.f32 %v4691, %v4691
  %v4724 = vmul.f32 %v4692, %v4692
  %v4725 = vmul.f32 %v4693, %v4693
  %v4726 = vmul.f32 %v4694, %v4694
  %v4727 = vmul.f32 %v4695, %v4695
  %v4728 = vmul.f32 %v4696, %v4696
  %v4729 = vmul.f32 %v4697, %v4697
  %v4730 = vmul.f32 %v4698, %v4698
  %v4731 = vmul.f32 %v4699, %v4699
  %v4732 = vmul.f32 %v4700, %v4700
  %v4733 = vmul.f32 %v4701, %v4701
  %v4766 = vrot.slane %v4703, 7
  %v4767 = vsel %vm732, %v4766, %v4702
  %v4768 = vrot.slane %v4704, 6
  %v4769 = vsel %vm734, %v4768, %v4767
  %v4770 = vrot.slane %v4705, 5
  %v4771 = vsel %vm736, %v4770, %v4769
  %v4772 = vrot.slane %v4706, 4
  %v4773 = vsel %vm738, %v4772, %v4771
  %v4774 = vrot.slane %v4707, 3
  %v4775 = vsel %vm740, %v4774, %v4773
  %v4776 = vrot.slane %v4708, 2
  %v4777 = vsel %vm742, %v4776, %v4775
  %v4778 = vrot.slane %v4709, 1
  %v4779 = vsel %vm744, %v4778, %v4777
  %v4780 = vrot.slane %v4711, 7
  %v4781 = vsel %vm732, %v4780, %v4710
  %v4782 = vrot.slane %v4712, 6
  %v4783 = vsel %vm734, %v4782, %v4781
  %v4784 = vrot.slane %v4713, 5
  %v4785 = vsel %vm736, %v4784, %v4783
  %v4786 = vrot.slane %v4714, 4
  %v4787 = vsel %vm738, %v4786, %v4785
  %v4788 = vrot.slane %v4715, 3
  %v4789 = vsel %vm740, %v4788, %v4787
  %v4790 = vrot.slane %v4716, 2
  %v4791 = vsel %vm742, %v4790, %v4789
  %v4792 = vrot.slane %v4717, 1
  %v4793 = vsel %vm744, %v4792, %v4791
  %v4794 = vrot.slane %v4719, 7
  %v4795 = vsel %vm732, %v4794, %v4718
  %v4796 = vrot.slane %v4720, 6
  %v4797 = vsel %vm734, %v4796, %v4795
  %v4798 = vrot.slane %v4721, 5
  %v4799 = vsel %vm736, %v4798, %v4797
  %v4800 = vrot.slane %v4722, 4
  %v4801 = vsel %vm738, %v4800, %v4799
  %v4802 = vrot.slane %v4723, 3
  %v4803 = vsel %vm740, %v4802, %v4801
  %v4804 = vrot.slane %v4724, 2
  %v4805 = vsel %vm742, %v4804, %v4803
  %v4806 = vrot.slane %v4725, 1
  %v4807 = vsel %vm744, %v4806, %v4805
  %v4808 = vrot.slane %v4727, 7
  %v4809 = vsel %vm732, %v4808, %v4726
  %v4810 = vrot.slane %v4728, 6
  %v4811 = vsel %vm734, %v4810, %v4809
  %v4812 = vrot.slane %v4729, 5
  %v4813 = vsel %vm736, %v4812, %v4811
  %v4814 = vrot.slane %v4730, 4
  %v4815 = vsel %vm738, %v4814, %v4813
  %v4816 = vrot.slane %v4731, 3
  %v4817 = vsel %vm740, %v4816, %v4815
  %v4818 = vrot.slane %v4732, 2
  %v4819 = vsel %vm742, %v4818, %v4817
  %v4820 = vrot.slane %v4733, 1
  %v4821 = vsel %vm744, %v4820, %v4819
  %4822 = vrot.lane.b32.xlu0 %v4779, 126
  %v4823 = vpop.permute.xlu0 %4822
  %4824 = vrot.lane.b32.xlu0 %v4793, 126
  %v4825 = vpop.permute.xlu0 %4824
  %4826 = vrot.lane.b32.xlu0 %v4807, 126
  %v4827 = vpop.permute.xlu0 %4826
  %4828 = vrot.lane.b32.xlu0 %v4821, 126
  %v4829 = vpop.permute.xlu0 %4828
  %v4834 = vsel %vm4588, %v4823, 0.0
  %4835 = vadd.xlane.f32.xlu0 %v4834
  %v4836 = vpop.xlane.xlu0 %4835
  %v4837 = vsel %vm4588, %v4825, 0.0
  %4838 = vadd.xlane.f32.xlu0 %v4837
  %v4839 = vpop.xlane.xlu0 %4838
  %v4840 = vsel %vm4588, %v4827, 0.0
  %4841 = vadd.xlane.f32.xlu0 %v4840
  %v4842 = vpop.xlane.xlu0 %4841
  %v4843 = vsel %vm4588, %v4829, 0.0
  %4844 = vadd.xlane.f32.xlu0 %v4843
  %v4845 = vpop.xlane.xlu0 %4844
  %v4846 = vmul.f32 %v4836, %v4601
  %v4847 = vmul.f32 %v4839, %v4601
  %v4848 = vmul.f32 %v4842, %v4601
  %v4849 = vmul.f32 %v4845, %v4601
  %v4850 = vadd.f32 %v4846, 0.001
  %v4851 = vadd.f32 %v4847, 0.001
  %v4852 = vadd.f32 %v4848, 0.001
  %v4853 = vadd.f32 %v4849, 0.001
  %v4854 = vrsqrt.pop %v4850
  %v4855 = vrsqrt.pop %v4851
  %v4856 = vrsqrt.pop %v4852
  %v4857 = vrsqrt.pop %v4853
  %v4862 = vrot.slane %v4854, 1
  %v4863 = vrot.slane %v4854, 2
  %v4864 = vrot.slane %v4854, 3
  %v4865 = vrot.slane %v4854, 4
  %v4866 = vrot.slane %v4854, 5
  %v4867 = vrot.slane %v4854, 6
  %v4868 = vrot.slane %v4854, 7
  %v4869 = vrot.slane %v4855, 1
  %v4870 = vrot.slane %v4855, 2
  %v4871 = vrot.slane %v4855, 3
  %v4872 = vrot.slane %v4855, 4
  %v4873 = vrot.slane %v4855, 5
  %v4874 = vrot.slane %v4855, 6
  %v4875 = vrot.slane %v4855, 7
  %v4876 = vrot.slane %v4856, 1
  %v4877 = vrot.slane %v4856, 2
  %v4878 = vrot.slane %v4856, 3
  %v4879 = vrot.slane %v4856, 4
  %v4880 = vrot.slane %v4856, 5
  %v4881 = vrot.slane %v4856, 6
  %v4882 = vrot.slane %v4856, 7
  %v4883 = vrot.slane %v4857, 1
  %v4884 = vrot.slane %v4857, 2
  %v4885 = vrot.slane %v4857, 3
  %v4886 = vrot.slane %v4857, 4
  %v4887 = vrot.slane %v4857, 5
  %v4888 = vrot.slane %v4857, 6
  %v4889 = vrot.slane %v4857, 7
  %v4922 = vmul.f32 %v4670, %v4854
  %v4923 = vmul.f32 %v4671, %v4862
  %v4924 = vmul.f32 %v4672, %v4863
  %v4925 = vmul.f32 %v4673, %v4864
  %v4926 = vmul.f32 %v4674, %v4865
  %v4927 = vmul.f32 %v4675, %v4866
  %v4928 = vmul.f32 %v4676, %v4867
  %v4929 = vmul.f32 %v4677, %v4868
  %v4930 = vmul.f32 %v4678, %v4855
  %v4931 = vmul.f32 %v4679, %v4869
  %v4932 = vmul.f32 %v4680, %v4870
  %v4933 = vmul.f32 %v4681, %v4871
  %v4934 = vmul.f32 %v4682, %v4872
  %v4935 = vmul.f32 %v4683, %v4873
  %v4936 = vmul.f32 %v4684, %v4874
  %v4937 = vmul.f32 %v4685, %v4875
  %v4938 = vmul.f32 %v4686, %v4856
  %v4939 = vmul.f32 %v4687, %v4876
  %v4940 = vmul.f32 %v4688, %v4877
  %v4941 = vmul.f32 %v4689, %v4878
  %v4942 = vmul.f32 %v4690, %v4879
  %v4943 = vmul.f32 %v4691, %v4880
  %v4944 = vmul.f32 %v4692, %v4881
  %v4945 = vmul.f32 %v4693, %v4882
  %v4946 = vmul.f32 %v4694, %v4857
  %v4947 = vmul.f32 %v4695, %v4883
  %v4948 = vmul.f32 %v4696, %v4884
  %v4949 = vmul.f32 %v4697, %v4885
  %v4950 = vmul.f32 %v4698, %v4886
  %v4951 = vmul.f32 %v4699, %v4887
  %v4952 = vmul.f32 %v4700, %v4888
  %v4953 = vmul.f32 %v4701, %v4889
  %v4954 = vtanh.pop %v4922
  %v4955 = vtanh.pop %v4923
  %v4956 = vtanh.pop %v4924
  %v4957 = vtanh.pop %v4925
  %v4958 = vtanh.pop %v4926
  %v4959 = vtanh.pop %v4927
  %v4960 = vtanh.pop %v4928
  %v4961 = vtanh.pop %v4929
  %v4962 = vtanh.pop %v4930
  %v4963 = vtanh.pop %v4931
  %v4964 = vtanh.pop %v4932
  %v4965 = vtanh.pop %v4933
  %v4966 = vtanh.pop %v4934
  %v4967 = vtanh.pop %v4935
  %v4968 = vtanh.pop %v4936
  %v4969 = vtanh.pop %v4937
  %v4970 = vtanh.pop %v4938
  %v4971 = vtanh.pop %v4939
  %v4972 = vtanh.pop %v4940
  %v4973 = vtanh.pop %v4941
  %v4974 = vtanh.pop %v4942
  %v4975 = vtanh.pop %v4943
  %v4976 = vtanh.pop %v4944
  %v4977 = vtanh.pop %v4945
  %v4978 = vtanh.pop %v4946
  %v4979 = vtanh.pop %v4947
  %v4980 = vtanh.pop %v4948
  %v4981 = vtanh.pop %v4949
  %v4982 = vtanh.pop %v4950
  %v4983 = vtanh.pop %v4951
  %v4984 = vtanh.pop %v4952
  %v4985 = vtanh.pop %v4953
  %4986 = vrot.lane.b32.xlu0 %v4067, 110
  %v4987 = vpop.permute.xlu0 %4986
  %4988 = vrot.lane.b32.xlu0 %v4068, 110
  %v4989 = vpop.permute.xlu0 %4988
  %4990 = vrot.lane.b32.xlu0 %v4069, 110
  %v4991 = vpop.permute.xlu0 %4990
  %4992 = vrot.lane.b32.xlu0 %v4070, 110
  %v4993 = vpop.permute.xlu0 %4992
  %4994 = vrot.lane.b32.xlu0 %v4071, 110
  %v4995 = vpop.permute.xlu0 %4994
  %4996 = vrot.lane.b32.xlu0 %v4072, 110
  %v4997 = vpop.permute.xlu0 %4996
  %4998 = vrot.lane.b32.xlu0 %v4073, 110
  %v4999 = vpop.permute.xlu0 %4998
  %5000 = vrot.lane.b32.xlu0 %v4074, 110
  %v5001 = vpop.permute.xlu0 %5000
  %5002 = vrot.lane.b32.xlu0 %v4075, 110
  %v5003 = vpop.permute.xlu0 %5002
  %5004 = vrot.lane.b32.xlu0 %v4076, 110
  %v5005 = vpop.permute.xlu0 %5004
  %5006 = vrot.lane.b32.xlu0 %v4077, 110
  %v5007 = vpop.permute.xlu0 %5006
  %5008 = vrot.lane.b32.xlu0 %v4078, 110
  %v5009 = vpop.permute.xlu0 %5008
  %5010 = vrot.lane.b32.xlu0 %v4079, 110
  %v5011 = vpop.permute.xlu0 %5010
  %5012 = vrot.lane.b32.xlu0 %v4080, 110
  %v5013 = vpop.permute.xlu0 %5012
  %5014 = vrot.lane.b32.xlu0 %v4081, 110
  %v5015 = vpop.permute.xlu0 %5014
  %5016 = vrot.lane.b32.xlu0 %v4082, 110
  %v5017 = vpop.permute.xlu0 %5016
  %5018 = vrot.lane.b32.xlu0 %v4083, 110
  %v5019 = vpop.permute.xlu0 %5018
  %5020 = vrot.lane.b32.xlu0 %v4084, 110
  %v5021 = vpop.permute.xlu0 %5020
  %5022 = vrot.lane.b32.xlu0 %v4085, 110
  %v5023 = vpop.permute.xlu0 %5022
  %5024 = vrot.lane.b32.xlu0 %v4086, 110
  %v5025 = vpop.permute.xlu0 %5024
  %5026 = vrot.lane.b32.xlu0 %v4087, 110
  %v5027 = vpop.permute.xlu0 %5026
  %5028 = vrot.lane.b32.xlu0 %v4088, 110
  %v5029 = vpop.permute.xlu0 %5028
  %5030 = vrot.lane.b32.xlu0 %v4089, 110
  %v5031 = vpop.permute.xlu0 %5030
  %5032 = vrot.lane.b32.xlu0 %v4090, 110
  %v5033 = vpop.permute.xlu0 %5032
  %5034 = vrot.lane.b32.xlu0 %v4091, 110
  %v5035 = vpop.permute.xlu0 %5034
  %5036 = vrot.lane.b32.xlu0 %v4092, 110
  %v5037 = vpop.permute.xlu0 %5036
  %5038 = vrot.lane.b32.xlu0 %v4093, 110
  %v5039 = vpop.permute.xlu0 %5038
  %5040 = vrot.lane.b32.xlu0 %v4094, 110
  %v5041 = vpop.permute.xlu0 %5040
  %5042 = vrot.lane.b32.xlu0 %v4095, 110
  %v5043 = vpop.permute.xlu0 %5042
  %5044 = vrot.lane.b32.xlu0 %v4096, 110
  %v5045 = vpop.permute.xlu0 %5044
  %5046 = vrot.lane.b32.xlu0 %v4097, 110
  %v5047 = vpop.permute.xlu0 %5046
  %5048 = vrot.lane.b32.xlu0 %v4098, 110
  %v5049 = vpop.permute.xlu0 %5048
  %5082 = vmatprep.subr.mxu0 0.0
  %5083 = vmatpush1.msra.mxu0 %v4987
  %5084 = vmatprep.subr.mxu0 0.0
  %5085 = vmatpush1.msra.mxu0 %v4989
  %5086 = vmatprep.subr.mxu0 0.0
  %5087 = vmatpush1.msra.mxu0 %v4991
  %5088 = vmatprep.subr.mxu0 0.0
  %5089 = vmatpush1.msra.mxu0 %v4993
  %5090 = vmatprep.subr.mxu0 0.0
  %5091 = vmatpush1.msra.mxu0 %v4995
  %5092 = vmatprep.subr.mxu0 0.0
  %5093 = vmatpush1.msra.mxu0 %v4997
  %5094 = vmatprep.subr.mxu0 0.0
  %5095 = vmatpush1.msra.mxu0 %v4999
  %5096 = vmatprep.subr.mxu0 0.0
  %5097 = vmatpush1.msra.mxu0 %v5001
  %5098 = vmatprep.subr.mxu0 0.0
  %5099 = vmatpush1.msra.mxu0 %v5003
  %5100 = vmatprep.subr.mxu0 0.0
  %5101 = vmatpush1.msra.mxu0 %v5005
  %5102 = vmatprep.subr.mxu0 0.0
  %5103 = vmatpush1.msra.mxu0 %v5007
  %5104 = vmatprep.subr.mxu0 0.0
  %5105 = vmatpush1.msra.mxu0 %v5009
  %5106 = vmatprep.subr.mxu0 0.0
  %5107 = vmatpush1.msra.mxu0 %v5011
  %5108 = vmatprep.subr.mxu0 0.0
  %5109 = vmatpush1.msra.mxu0 %v5013
  %5110 = vmatprep.subr.mxu0 0.0
  %5111 = vmatpush1.msra.mxu0 %v5015
  %5112 = vmatprep.subr.mxu0 0.0
  %5113 = vmatpush1.msra.mxu0 %v5017
  %5114 = vmatprep.subr.mxu0 0.0
  %5115 = vmatpush1.msra.mxu0 %v5019
  %5116 = vmatprep.subr.mxu0 0.0
  %5117 = vmatpush1.msra.mxu0 %v5021
  %5118 = vmatprep.subr.mxu0 0.0
  %5119 = vmatpush1.msra.mxu0 %v5023
  %5120 = vmatprep.subr.mxu0 0.0
  %5121 = vmatpush1.msra.mxu0 %v5025
  %5122 = vmatprep.subr.mxu0 0.0
  %5123 = vmatpush1.msra.mxu0 %v5027
  %5124 = vmatprep.subr.mxu0 0.0
  %5125 = vmatpush1.msra.mxu0 %v5029
  %5126 = vmatprep.subr.mxu0 0.0
  %5127 = vmatpush1.msra.mxu0 %v5031
  %5128 = vmatprep.subr.mxu0 0.0
  %5129 = vmatpush1.msra.mxu0 %v5033
  %5130 = vmatprep.subr.mxu0 0.0
  %5131 = vmatpush1.msra.mxu0 %v5035
  %5132 = vmatprep.subr.mxu0 0.0
  %5133 = vmatpush1.msra.mxu0 %v5037
  %5134 = vmatprep.subr.mxu0 0.0
  %5135 = vmatpush1.msra.mxu0 %v5039
  %5136 = vmatprep.subr.mxu0 0.0
  %5137 = vmatpush1.msra.mxu0 %v5041
  %5138 = vmatprep.subr.mxu0 0.0
  %5139 = vmatpush1.msra.mxu0 %v5043
  %5140 = vmatprep.subr.mxu0 0.0
  %5141 = vmatpush1.msra.mxu0 %v5045
  %5142 = vmatprep.subr.mxu0 0.0
  %5143 = vmatpush1.msra.mxu0 %v5047
  %5144 = vmatprep.subr.mxu0 0.0
  %5145 = vmatpush1.msra.mxu0 %v5049
  %5146 = vmatprep.mubr.f32.mxu0 %v2480
  %5147 = vmatmul.mubr.f32.gmra.mrb[0].mxu0 %v2479
  %v5148 = vpop.f32.mrb[0].mxu0
  %v5149 = vadd.f32 0.0, %v5148
  %v5150 = vpop.f32.mrb[0].mxu0
  %5151 = vmatprep.mubr.f32.mxu0 %v2482
  %5152 = vmatmul.mubr.f32.gmra.mrb[0].mxu0 %v2481
  %v5153 = vpop.f32.mrb[0].mxu0
  %v5154 = vadd.f32 0.0, %v5153
  %v5155 = vpop.f32.mrb[0].mxu0
  %5156 = vmatprep.mubr.f32.mxu0 %v2484
  %5157 = vmatmul.mubr.f32.gmra.mrb[0].mxu0 %v2483
  %v5158 = vpop.f32.mrb[0].mxu0
  %v5159 = vadd.f32 0.0, %v5158
  %v5160 = vpop.f32.mrb[0].mxu0
  %5161 = vmatprep.mubr.f32.mxu0 %v2486
  %5162 = vmatmul.mubr.f32.gmra.mrb[0].mxu0 %v2485
  %v5163 = vpop.f32.mrb[0].mxu0
  %v5164 = vadd.f32 0.0, %v5163
  %v5165 = vpop.f32.mrb[0].mxu0
  %5166 = vmatprep.mubr.f32.mxu0 %v2488
  %5167 = vmatmul.mubr.f32.gmra.mrb[0].mxu0 %v2487
  %v5168 = vpop.f32.mrb[0].mxu0
  %v5169 = vadd.f32 0.0, %v5168
  %v5170 = vpop.f32.mrb[0].mxu0
  %5171 = vmatprep.mubr.f32.mxu0 %v2490
  %5172 = vmatmul.mubr.f32.gmra.mrb[0].mxu0 %v2489
  %v5173 = vpop.f32.mrb[0].mxu0
  %v5174 = vadd.f32 0.0, %v5173
  %v5175 = vpop.f32.mrb[0].mxu0
  %5176 = vmatprep.mubr.f32.mxu0 %v2492
  %5177 = vmatmul.mubr.f32.gmra.mrb[0].mxu0 %v2491
  %v5178 = vpop.f32.mrb[0].mxu0
  %v5179 = vadd.f32 0.0, %v5178
  %v5180 = vpop.f32.mrb[0].mxu0
  %5181 = vmatprep.mubr.f32.mxu0 %v2494
  %5182 = vmatmul.mubr.f32.gmra.mrb[0].mxu0 %v2493
  %v5183 = vpop.f32.mrb[0].mxu0
  %v5184 = vadd.f32 0.0, %v5183
  %v5185 = vpop.f32.mrb[0].mxu0
  %5186 = vmatprep.mubr.f32.mxu0 %v2496
  %5187 = vmatmul.mubr.f32.gmra.mrb[0].mxu0 %v2495
  %v5188 = vpop.f32.mrb[0].mxu0
  %v5189 = vadd.f32 0.0, %v5188
  %v5190 = vpop.f32.mrb[0].mxu0
  %5191 = vmatprep.mubr.f32.mxu0 %v2498
  %5192 = vmatmul.mubr.f32.gmra.mrb[0].mxu0 %v2497
  %v5193 = vpop.f32.mrb[0].mxu0
  %v5194 = vadd.f32 0.0, %v5193
  %v5195 = vpop.f32.mrb[0].mxu0
  %5196 = vmatprep.mubr.f32.mxu0 %v2500
  %5197 = vmatmul.mubr.f32.gmra.mrb[0].mxu0 %v2499
  %v5198 = vpop.f32.mrb[0].mxu0
  %v5199 = vadd.f32 0.0, %v5198
  %v5200 = vpop.f32.mrb[0].mxu0
  %5201 = vmatprep.mubr.f32.mxu0 %v2502
  %5202 = vmatmul.mubr.f32.gmra.mrb[0].mxu0 %v2501
  %v5203 = vpop.f32.mrb[0].mxu0
  %v5204 = vadd.f32 0.0, %v5203
  %v5205 = vpop.f32.mrb[0].mxu0
  %5206 = vmatprep.mubr.f32.mxu0 %v2504
  %5207 = vmatmul.mubr.f32.gmra.mrb[0].mxu0 %v2503
  %v5208 = vpop.f32.mrb[0].mxu0
  %v5209 = vadd.f32 0.0, %v5208
  %v5210 = vpop.f32.mrb[0].mxu0
  %5211 = vmatprep.mubr.f32.mxu0 %v2506
  %5212 = vmatmul.mubr.f32.gmra.mrb[0].mxu0 %v2505
  %v5213 = vpop.f32.mrb[0].mxu0
  %v5214 = vadd.f32 0.0, %v5213
  %v5215 = vpop.f32.mrb[0].mxu0
  %5216 = vmatprep.mubr.f32.mxu0 %v2508
  %5217 = vmatmul.mubr.f32.gmra.mrb[0].mxu0 %v2507
  %v5218 = vpop.f32.mrb[0].mxu0
  %v5219 = vadd.f32 0.0, %v5218
  %v5220 = vpop.f32.mrb[0].mxu0
  %5221 = vmatprep.mubr.f32.mxu0 %v2510
  %5222 = vmatmul.mubr.f32.gmra.mrb[0].mxu0 %v2509
  %v5223 = vpop.f32.mrb[0].mxu0
  %v5224 = vadd.f32 0.0, %v5223
  %v5225 = vpop.f32.mrb[0].mxu0
  %5226 = vmatprep.mubr.f32.mxu0 %v2512
  %5227 = vmatmul.mubr.f32.gmra.mrb[0].mxu0 %v2511
  %v5228 = vpop.f32.mrb[0].mxu0
  %v5229 = vadd.f32 0.0, %v5228
  %v5230 = vpop.f32.mrb[0].mxu0
  %5231 = vmatprep.mubr.f32.mxu0 %v2514
  %5232 = vmatmul.mubr.f32.gmra.mrb[0].mxu0 %v2513
  %v5233 = vpop.f32.mrb[0].mxu0
  %v5234 = vadd.f32 0.0, %v5233
  %v5235 = vpop.f32.mrb[0].mxu0
  %5236 = vmatprep.mubr.f32.mxu0 %v2516
  %5237 = vmatmul.mubr.f32.gmra.mrb[0].mxu0 %v2515
  %v5238 = vpop.f32.mrb[0].mxu0
  %v5239 = vadd.f32 0.0, %v5238
  %v5240 = vpop.f32.mrb[0].mxu0
  %5241 = vmatprep.mubr.f32.mxu0 %v2518
  %5242 = vmatmul.mubr.f32.gmra.mrb[0].mxu0 %v2517
  %v5243 = vpop.f32.mrb[0].mxu0
  %v5244 = vadd.f32 0.0, %v5243
  %v5245 = vpop.f32.mrb[0].mxu0
  %5246 = vmatprep.mubr.f32.mxu0 %v2520
  %5247 = vmatmul.mubr.f32.gmra.mrb[0].mxu0 %v2519
  %v5248 = vpop.f32.mrb[0].mxu0
  %v5249 = vadd.f32 0.0, %v5248
  %v5250 = vpop.f32.mrb[0].mxu0
  %5251 = vmatprep.mubr.f32.mxu0 %v2522
  %5252 = vmatmul.mubr.f32.gmra.mrb[0].mxu0 %v2521
  %v5253 = vpop.f32.mrb[0].mxu0
  %v5254 = vadd.f32 0.0, %v5253
  %v5255 = vpop.f32.mrb[0].mxu0
  %5256 = vmatprep.mubr.f32.mxu0 %v2524
  %5257 = vmatmul.mubr.f32.gmra.mrb[0].mxu0 %v2523
  %v5258 = vpop.f32.mrb[0].mxu0
  %v5259 = vadd.f32 0.0, %v5258
  %v5260 = vpop.f32.mrb[0].mxu0
  %5261 = vmatprep.mubr.f32.mxu0 %v2526
  %5262 = vmatmul.mubr.f32.gmra.mrb[0].mxu0 %v2525
  %v5263 = vpop.f32.mrb[0].mxu0
  %v5264 = vadd.f32 0.0, %v5263
  %v5265 = vpop.f32.mrb[0].mxu0
  %5266 = vmatprep.mubr.f32.mxu0 %v2528
  %5267 = vmatmul.mubr.f32.gmra.mrb[0].mxu0 %v2527
  %v5268 = vpop.f32.mrb[0].mxu0
  %v5269 = vadd.f32 0.0, %v5268
  %v5270 = vpop.f32.mrb[0].mxu0
  %5271 = vmatprep.mubr.f32.mxu0 %v2530
  %5272 = vmatmul.mubr.f32.gmra.mrb[0].mxu0 %v2529
  %v5273 = vpop.f32.mrb[0].mxu0
  %v5274 = vadd.f32 0.0, %v5273
  %v5275 = vpop.f32.mrb[0].mxu0
  %5276 = vmatprep.mubr.f32.mxu0 %v2532
  %5277 = vmatmul.mubr.f32.gmra.mrb[0].mxu0 %v2531
  %v5278 = vpop.f32.mrb[0].mxu0
  %v5279 = vadd.f32 0.0, %v5278
  %v5280 = vpop.f32.mrb[0].mxu0
  %5281 = vmatprep.mubr.f32.mxu0 %v2534
  %5282 = vmatmul.mubr.f32.gmra.mrb[0].mxu0 %v2533
  %v5283 = vpop.f32.mrb[0].mxu0
  %v5284 = vadd.f32 0.0, %v5283
  %v5285 = vpop.f32.mrb[0].mxu0
  %5286 = vmatprep.mubr.f32.mxu0 %v2536
  %5287 = vmatmul.mubr.f32.gmra.mrb[0].mxu0 %v2535
  %v5288 = vpop.f32.mrb[0].mxu0
  %v5289 = vadd.f32 0.0, %v5288
  %v5290 = vpop.f32.mrb[0].mxu0
  %5291 = vmatprep.mubr.f32.mxu0 %v2538
  %5292 = vmatmul.mubr.f32.gmra.mrb[0].mxu0 %v2537
  %v5293 = vpop.f32.mrb[0].mxu0
  %v5294 = vadd.f32 0.0, %v5293
  %v5295 = vpop.f32.mrb[0].mxu0
  %5296 = vmatprep.mubr.f32.mxu0 %v2540
  %5297 = vmatmul.mubr.f32.gmra.mrb[0].mxu0 %v2539
  %v5298 = vpop.f32.mrb[0].mxu0
  %v5299 = vadd.f32 0.0, %v5298
  %v5300 = vpop.f32.mrb[0].mxu0
  %5301 = vmatprep.mubr.f32.mxu0 %v2542
  %5302 = vmatmul.mubr.f32.gmra.mrb[0].mxu0 %v2541
  %v5303 = vpop.f32.mrb[0].mxu0
  %v5304 = vadd.f32 0.0, %v5303
  %v5305 = vpop.f32.mrb[0].mxu0
  %5306 = vdwg.mxu0
  %5339 = vrot.lane.b32.xlu0 %v5149, 18
  %v5340 = vpop.permute.xlu0 %5339
  %5341 = vrot.lane.b32.xlu0 %v5154, 18
  %v5342 = vpop.permute.xlu0 %5341
  %5343 = vrot.lane.b32.xlu0 %v5159, 18
  %v5344 = vpop.permute.xlu0 %5343
  %5345 = vrot.lane.b32.xlu0 %v5164, 18
  %v5346 = vpop.permute.xlu0 %5345
  %5347 = vrot.lane.b32.xlu0 %v5169, 18
  %v5348 = vpop.permute.xlu0 %5347
  %5349 = vrot.lane.b32.xlu0 %v5174, 18
  %v5350 = vpop.permute.xlu0 %5349
  %5351 = vrot.lane.b32.xlu0 %v5179, 18
  %v5352 = vpop.permute.xlu0 %5351
  %5353 = vrot.lane.b32.xlu0 %v5184, 18
  %v5354 = vpop.permute.xlu0 %5353
  %5355 = vrot.lane.b32.xlu0 %v5189, 18
  %v5356 = vpop.permute.xlu0 %5355
  %5357 = vrot.lane.b32.xlu0 %v5194, 18
  %v5358 = vpop.permute.xlu0 %5357
  %5359 = vrot.lane.b32.xlu0 %v5199, 18
  %v5360 = vpop.permute.xlu0 %5359
  %5361 = vrot.lane.b32.xlu0 %v5204, 18
  %v5362 = vpop.permute.xlu0 %5361
  %5363 = vrot.lane.b32.xlu0 %v5209, 18
  %v5364 = vpop.permute.xlu0 %5363
  %5365 = vrot.lane.b32.xlu0 %v5214, 18
  %v5366 = vpop.permute.xlu0 %5365
  %5367 = vrot.lane.b32.xlu0 %v5219, 18
  %v5368 = vpop.permute.xlu0 %5367
  %5369 = vrot.lane.b32.xlu0 %v5224, 18
  %v5370 = vpop.permute.xlu0 %5369
  %5371 = vrot.lane.b32.xlu0 %v5229, 18
  %v5372 = vpop.permute.xlu0 %5371
  %5373 = vrot.lane.b32.xlu0 %v5234, 18
  %v5374 = vpop.permute.xlu0 %5373
  %5375 = vrot.lane.b32.xlu0 %v5239, 18
  %v5376 = vpop.permute.xlu0 %5375
  %5377 = vrot.lane.b32.xlu0 %v5244, 18
  %v5378 = vpop.permute.xlu0 %5377
  %5379 = vrot.lane.b32.xlu0 %v5249, 18
  %v5380 = vpop.permute.xlu0 %5379
  %5381 = vrot.lane.b32.xlu0 %v5254, 18
  %v5382 = vpop.permute.xlu0 %5381
  %5383 = vrot.lane.b32.xlu0 %v5259, 18
  %v5384 = vpop.permute.xlu0 %5383
  %5385 = vrot.lane.b32.xlu0 %v5264, 18
  %v5386 = vpop.permute.xlu0 %5385
  %5387 = vrot.lane.b32.xlu0 %v5269, 18
  %v5388 = vpop.permute.xlu0 %5387
  %5389 = vrot.lane.b32.xlu0 %v5274, 18
  %v5390 = vpop.permute.xlu0 %5389
  %5391 = vrot.lane.b32.xlu0 %v5279, 18
  %v5392 = vpop.permute.xlu0 %5391
  %5393 = vrot.lane.b32.xlu0 %v5284, 18
  %v5394 = vpop.permute.xlu0 %5393
  %5395 = vrot.lane.b32.xlu0 %v5289, 18
  %v5396 = vpop.permute.xlu0 %5395
  %5397 = vrot.lane.b32.xlu0 %v5294, 18
  %v5398 = vpop.permute.xlu0 %5397
  %5399 = vrot.lane.b32.xlu0 %v5299, 18
  %v5400 = vpop.permute.xlu0 %5399
  %5401 = vrot.lane.b32.xlu0 %v5304, 18
  %v5402 = vpop.permute.xlu0 %5401
  %v5435 = vmul.f32 %v4067, %v5340
  %v5436 = vmul.f32 %v4068, %v5342
  %v5437 = vmul.f32 %v4069, %v5344
  %v5438 = vmul.f32 %v4070, %v5346
  %v5439 = vmul.f32 %v4071, %v5348
  %v5440 = vmul.f32 %v4072, %v5350
  %v5441 = vmul.f32 %v4073, %v5352
  %v5442 = vmul.f32 %v4074, %v5354
  %v5443 = vmul.f32 %v4075, %v5356
  %v5444 = vmul.f32 %v4076, %v5358
  %v5445 = vmul.f32 %v4077, %v5360
  %v5446 = vmul.f32 %v4078, %v5362
  %v5447 = vmul.f32 %v4079, %v5364
  %v5448 = vmul.f32 %v4080, %v5366
  %v5449 = vmul.f32 %v4081, %v5368
  %v5450 = vmul.f32 %v4082, %v5370
  %v5451 = vmul.f32 %v4083, %v5372
  %v5452 = vmul.f32 %v4084, %v5374
  %v5453 = vmul.f32 %v4085, %v5376
  %v5454 = vmul.f32 %v4086, %v5378
  %v5455 = vmul.f32 %v4087, %v5380
  %v5456 = vmul.f32 %v4088, %v5382
  %v5457 = vmul.f32 %v4089, %v5384
  %v5458 = vmul.f32 %v4090, %v5386
  %v5459 = vmul.f32 %v4091, %v5388
  %v5460 = vmul.f32 %v4092, %v5390
  %v5461 = vmul.f32 %v4093, %v5392
  %v5462 = vmul.f32 %v4094, %v5394
  %v5463 = vmul.f32 %v4095, %v5396
  %v5464 = vmul.f32 %v4096, %v5398
  %v5465 = vmul.f32 %v4097, %v5400
  %v5466 = vmul.f32 %v4098, %v5402
  %5499 = vset.pattern.permute.xlu0 18
  %5500 = vperm.xlu0 %5499, %v5435
  %v5501 = vpop.permute.xlu0 %5500
  %5502 = vset.pattern.permute.xlu0 18
  %5503 = vperm.xlu0 %5502, %v5436
  %v5504 = vpop.permute.xlu0 %5503
  %5505 = vset.pattern.permute.xlu0 18
  %5506 = vperm.xlu0 %5505, %v5437
  %v5507 = vpop.permute.xlu0 %5506
  %5508 = vset.pattern.permute.xlu0 18
  %5509 = vperm.xlu0 %5508, %v5438
  %v5510 = vpop.permute.xlu0 %5509
  %5511 = vset.pattern.permute.xlu0 18
  %5512 = vperm.xlu0 %5511, %v5439
  %v5513 = vpop.permute.xlu0 %5512
  %5514 = vset.pattern.permute.xlu0 18
  %5515 = vperm.xlu0 %5514, %v5440
  %v5516 = vpop.permute.xlu0 %5515
  %5517 = vset.pattern.permute.xlu0 18
  %5518 = vperm.xlu0 %5517, %v5441
  %v5519 = vpop.permute.xlu0 %5518
  %5520 = vset.pattern.permute.xlu0 18
  %5521 = vperm.xlu0 %5520, %v5442
  %v5522 = vpop.permute.xlu0 %5521
  %5523 = vset.pattern.permute.xlu0 18
  %5524 = vperm.xlu0 %5523, %v5443
  %v5525 = vpop.permute.xlu0 %5524
  %5526 = vset.pattern.permute.xlu0 18
  %5527 = vperm.xlu0 %5526, %v5444
  %v5528 = vpop.permute.xlu0 %5527
  %5529 = vset.pattern.permute.xlu0 18
  %5530 = vperm.xlu0 %5529, %v5445
  %v5531 = vpop.permute.xlu0 %5530
  %5532 = vset.pattern.permute.xlu0 18
  %5533 = vperm.xlu0 %5532, %v5446
  %v5534 = vpop.permute.xlu0 %5533
  %5535 = vset.pattern.permute.xlu0 18
  %5536 = vperm.xlu0 %5535, %v5447
  %v5537 = vpop.permute.xlu0 %5536
  %5538 = vset.pattern.permute.xlu0 18
  %5539 = vperm.xlu0 %5538, %v5448
  %v5540 = vpop.permute.xlu0 %5539
  %5541 = vset.pattern.permute.xlu0 18
  %5542 = vperm.xlu0 %5541, %v5449
  %v5543 = vpop.permute.xlu0 %5542
  %5544 = vset.pattern.permute.xlu0 18
  %5545 = vperm.xlu0 %5544, %v5450
  %v5546 = vpop.permute.xlu0 %5545
  %5547 = vset.pattern.permute.xlu0 18
  %5548 = vperm.xlu0 %5547, %v5451
  %v5549 = vpop.permute.xlu0 %5548
  %5550 = vset.pattern.permute.xlu0 18
  %5551 = vperm.xlu0 %5550, %v5452
  %v5552 = vpop.permute.xlu0 %5551
  %5553 = vset.pattern.permute.xlu0 18
  %5554 = vperm.xlu0 %5553, %v5453
  %v5555 = vpop.permute.xlu0 %5554
  %5556 = vset.pattern.permute.xlu0 18
  %5557 = vperm.xlu0 %5556, %v5454
  %v5558 = vpop.permute.xlu0 %5557
  %5559 = vset.pattern.permute.xlu0 18
  %5560 = vperm.xlu0 %5559, %v5455
  %v5561 = vpop.permute.xlu0 %5560
  %5562 = vset.pattern.permute.xlu0 18
  %5563 = vperm.xlu0 %5562, %v5456
  %v5564 = vpop.permute.xlu0 %5563
  %5565 = vset.pattern.permute.xlu0 18
  %5566 = vperm.xlu0 %5565, %v5457
  %v5567 = vpop.permute.xlu0 %5566
  %5568 = vset.pattern.permute.xlu0 18
  %5569 = vperm.xlu0 %5568, %v5458
  %v5570 = vpop.permute.xlu0 %5569
  %5571 = vset.pattern.permute.xlu0 18
  %5572 = vperm.xlu0 %5571, %v5459
  %v5573 = vpop.permute.xlu0 %5572
  %5574 = vset.pattern.permute.xlu0 18
  %5575 = vperm.xlu0 %5574, %v5460
  %v5576 = vpop.permute.xlu0 %5575
  %5577 = vset.pattern.permute.xlu0 18
  %5578 = vperm.xlu0 %5577, %v5461
  %v5579 = vpop.permute.xlu0 %5578
  %5580 = vset.pattern.permute.xlu0 18
  %5581 = vperm.xlu0 %5580, %v5462
  %v5582 = vpop.permute.xlu0 %5581
  %5583 = vset.pattern.permute.xlu0 18
  %5584 = vperm.xlu0 %5583, %v5463
  %v5585 = vpop.permute.xlu0 %5584
  %5586 = vset.pattern.permute.xlu0 18
  %5587 = vperm.xlu0 %5586, %v5464
  %v5588 = vpop.permute.xlu0 %5587
  %5589 = vset.pattern.permute.xlu0 18
  %5590 = vperm.xlu0 %5589, %v5465
  %v5591 = vpop.permute.xlu0 %5590
  %5592 = vset.pattern.permute.xlu0 18
  %5593 = vperm.xlu0 %5592, %v5466
  %v5594 = vpop.permute.xlu0 %5593
  %v5595 = vlaneseq
  %v5596 = vshrl.u32 %v5595, 7
  %v5597 = vsub.s32 %v603, %v5596
  %v5598 = vrot.slane %v5501, %v5597
  %v5599 = vlaneseq
  %v5600 = vshrl.u32 %v5599, 7
  %v5601 = vsub.s32 %v603, %v5600
  %v5602 = vrot.slane %v5504, %v5601
  %v5603 = vlaneseq
  %v5604 = vshrl.u32 %v5603, 7
  %v5605 = vsub.s32 %v603, %v5604
  %v5606 = vrot.slane %v5507, %v5605
  %v5607 = vlaneseq
  %v5608 = vshrl.u32 %v5607, 7
  %v5609 = vsub.s32 %v603, %v5608
  %v5610 = vrot.slane %v5510, %v5609
  %v5611 = vlaneseq
  %v5612 = vshrl.u32 %v5611, 7
  %v5613 = vsub.s32 %v603, %v5612
  %v5614 = vrot.slane %v5513, %v5613
  %v5615 = vlaneseq
  %v5616 = vshrl.u32 %v5615, 7
  %v5617 = vsub.s32 %v603, %v5616
  %v5618 = vrot.slane %v5516, %v5617
  %v5619 = vlaneseq
  %v5620 = vshrl.u32 %v5619, 7
  %v5621 = vsub.s32 %v603, %v5620
  %v5622 = vrot.slane %v5519, %v5621
  %v5623 = vlaneseq
  %v5624 = vshrl.u32 %v5623, 7
  %v5625 = vsub.s32 %v603, %v5624
  %v5626 = vrot.slane %v5522, %v5625
  %v5627 = vlaneseq
  %v5628 = vshrl.u32 %v5627, 7
  %v5629 = vsub.s32 %v603, %v5628
  %v5630 = vrot.slane %v5525, %v5629
  %v5631 = vlaneseq
  %v5632 = vshrl.u32 %v5631, 7
  %v5633 = vsub.s32 %v603, %v5632
  %v5634 = vrot.slane %v5528, %v5633
  %v5635 = vlaneseq
  %v5636 = vshrl.u32 %v5635, 7
  %v5637 = vsub.s32 %v603, %v5636
  %v5638 = vrot.slane %v5531, %v5637
  %v5639 = vlaneseq
  %v5640 = vshrl.u32 %v5639, 7
  %v5641 = vsub.s32 %v603, %v5640
  %v5642 = vrot.slane %v5534, %v5641
  %v5643 = vlaneseq
  %v5644 = vshrl.u32 %v5643, 7
  %v5645 = vsub.s32 %v603, %v5644
  %v5646 = vrot.slane %v5537, %v5645
  %v5647 = vlaneseq
  %v5648 = vshrl.u32 %v5647, 7
  %v5649 = vsub.s32 %v603, %v5648
  %v5650 = vrot.slane %v5540, %v5649
  %v5651 = vlaneseq
  %v5652 = vshrl.u32 %v5651, 7
  %v5653 = vsub.s32 %v603, %v5652
  %v5654 = vrot.slane %v5543, %v5653
  %v5655 = vlaneseq
  %v5656 = vshrl.u32 %v5655, 7
  %v5657 = vsub.s32 %v603, %v5656
  %v5658 = vrot.slane %v5546, %v5657
  %v5659 = vlaneseq
  %v5660 = vshrl.u32 %v5659, 7
  %v5661 = vsub.s32 %v603, %v5660
  %v5662 = vrot.slane %v5549, %v5661
  %v5663 = vlaneseq
  %v5664 = vshrl.u32 %v5663, 7
  %v5665 = vsub.s32 %v603, %v5664
  %v5666 = vrot.slane %v5552, %v5665
  %v5667 = vlaneseq
  %v5668 = vshrl.u32 %v5667, 7
  %v5669 = vsub.s32 %v603, %v5668
  %v5670 = vrot.slane %v5555, %v5669
  %v5671 = vlaneseq
  %v5672 = vshrl.u32 %v5671, 7
  %v5673 = vsub.s32 %v603, %v5672
  %v5674 = vrot.slane %v5558, %v5673
  %v5675 = vlaneseq
  %v5676 = vshrl.u32 %v5675, 7
  %v5677 = vsub.s32 %v603, %v5676
  %v5678 = vrot.slane %v5561, %v5677
  %v5679 = vlaneseq
  %v5680 = vshrl.u32 %v5679, 7
  %v5681 = vsub.s32 %v603, %v5680
  %v5682 = vrot.slane %v5564, %v5681
  %v5683 = vlaneseq
  %v5684 = vshrl.u32 %v5683, 7
  %v5685 = vsub.s32 %v603, %v5684
  %v5686 = vrot.slane %v5567, %v5685
  %v5687 = vlaneseq
  %v5688 = vshrl.u32 %v5687, 7
  %v5689 = vsub.s32 %v603, %v5688
  %v5690 = vrot.slane %v5570, %v5689
  %v5691 = vlaneseq
  %v5692 = vshrl.u32 %v5691, 7
  %v5693 = vsub.s32 %v603, %v5692
  %v5694 = vrot.slane %v5573, %v5693
  %v5695 = vlaneseq
  %v5696 = vshrl.u32 %v5695, 7
  %v5697 = vsub.s32 %v603, %v5696
  %v5698 = vrot.slane %v5576, %v5697
  %v5699 = vlaneseq
  %v5700 = vshrl.u32 %v5699, 7
  %v5701 = vsub.s32 %v603, %v5700
  %v5702 = vrot.slane %v5579, %v5701
  %v5703 = vlaneseq
  %v5704 = vshrl.u32 %v5703, 7
  %v5705 = vsub.s32 %v603, %v5704
  %v5706 = vrot.slane %v5582, %v5705
  %v5707 = vlaneseq
  %v5708 = vshrl.u32 %v5707, 7
  %v5709 = vsub.s32 %v603, %v5708
  %v5710 = vrot.slane %v5585, %v5709
  %v5711 = vlaneseq
  %v5712 = vshrl.u32 %v5711, 7
  %v5713 = vsub.s32 %v603, %v5712
  %v5714 = vrot.slane %v5588, %v5713
  %v5715 = vlaneseq
  %v5716 = vshrl.u32 %v5715, 7
  %v5717 = vsub.s32 %v603, %v5716
  %v5718 = vrot.slane %v5591, %v5717
  %v5719 = vlaneseq
  %v5720 = vshrl.u32 %v5719, 7
  %v5721 = vsub.s32 %v603, %v5720
  %v5722 = vrot.slane %v5594, %v5721
  %v5723 = vsel %vm732, %v5602, %v5598
  %v5724 = vsel %vm734, %v5606, %v5723
  %v5725 = vsel %vm736, %v5610, %v5724
  %v5726 = vsel %vm738, %v5614, %v5725
  %v5727 = vsel %vm740, %v5618, %v5726
  %v5728 = vsel %vm742, %v5622, %v5727
  %v5729 = vsel %vm744, %v5626, %v5728
  %v5730 = vsel %vm732, %v5634, %v5630
  %v5731 = vsel %vm734, %v5638, %v5730
  %v5732 = vsel %vm736, %v5642, %v5731
  %v5733 = vsel %vm738, %v5646, %v5732
  %v5734 = vsel %vm740, %v5650, %v5733
  %v5735 = vsel %vm742, %v5654, %v5734
  %v5736 = vsel %vm744, %v5658, %v5735
  %v5737 = vsel %vm732, %v5666, %v5662
  %v5738 = vsel %vm734, %v5670, %v5737
  %v5739 = vsel %vm736, %v5674, %v5738
  %v5740 = vsel %vm738, %v5678, %v5739
  %v5741 = vsel %vm740, %v5682, %v5740
  %v5742 = vsel %vm742, %v5686, %v5741
  %v5743 = vsel %vm744, %v5690, %v5742
  %v5744 = vsel %vm732, %v5698, %v5694
  %v5745 = vsel %vm734, %v5702, %v5744
  %v5746 = vsel %vm736, %v5706, %v5745
  %v5747 = vsel %vm738, %v5710, %v5746
  %v5748 = vsel %vm740, %v5714, %v5747
  %v5749 = vsel %vm742, %v5718, %v5748
  %v5750 = vsel %vm744, %v5722, %v5749
  %v5755 = vsel %vm771, %v5729, 0.0
  %5756 = vadd.xlane.f32.xlu0 %v5755
  %v5757 = vpop.xlane.xlu0 %5756
  %v5758 = vsel %vm771, %v5736, 0.0
  %5759 = vadd.xlane.f32.xlu0 %v5758
  %v5760 = vpop.xlane.xlu0 %5759
  %v5761 = vsel %vm771, %v5743, 0.0
  %5762 = vadd.xlane.f32.xlu0 %v5761
  %v5763 = vpop.xlane.xlu0 %5762
  %v5764 = vsel %vm771, %v5750, 0.0
  %5765 = vadd.xlane.f32.xlu0 %v5764
  %v5766 = vpop.xlane.xlu0 %5765
  %v5767 = vtanh.pop %v5757
  %v5768 = vtanh.pop %v5760
  %v5769 = vtanh.pop %v5763
  %v5770 = vtanh.pop %v5766
  %v5771 = vld [vmem:[%s2 + $0x4] sm:$0x1]
  %v5772 = vlaneseq
  %v5773 = vshrl.u32 %v5772, 7
  %v5774 = vsub.s32 0, %v5773
  %v5775 = vrot.slane %v5771, %v5774
  %5777 = vrot.lane.b32.xlu0 %v5775, 2
  %v5778 = vpop.permute.xlu0 %5777
  %v5780 = vmul.f32 %v4954, %v5778
  %v5781 = vmul.f32 %v4955, %v5778
  %v5782 = vmul.f32 %v4956, %v5778
  %v5783 = vmul.f32 %v4957, %v5778
  %v5784 = vmul.f32 %v4958, %v5778
  %v5785 = vmul.f32 %v4959, %v5778
  %v5786 = vmul.f32 %v4960, %v5778
  %v5787 = vmul.f32 %v4961, %v5778
  %v5788 = vmul.f32 %v4962, %v5778
  %v5789 = vmul.f32 %v4963, %v5778
  %v5790 = vmul.f32 %v4964, %v5778
  %v5791 = vmul.f32 %v4965, %v5778
  %v5792 = vmul.f32 %v4966, %v5778
  %v5793 = vmul.f32 %v4967, %v5778
  %v5794 = vmul.f32 %v4968, %v5778
  %v5795 = vmul.f32 %v4969, %v5778
  %v5796 = vmul.f32 %v4970, %v5778
  %v5797 = vmul.f32 %v4971, %v5778
  %v5798 = vmul.f32 %v4972, %v5778
  %v5799 = vmul.f32 %v4973, %v5778
  %v5800 = vmul.f32 %v4974, %v5778
  %v5801 = vmul.f32 %v4975, %v5778
  %v5802 = vmul.f32 %v4976, %v5778
  %v5803 = vmul.f32 %v4977, %v5778
  %v5804 = vmul.f32 %v4978, %v5778
  %v5805 = vmul.f32 %v4979, %v5778
  %v5806 = vmul.f32 %v4980, %v5778
  %v5807 = vmul.f32 %v4981, %v5778
  %v5808 = vmul.f32 %v4982, %v5778
  %v5809 = vmul.f32 %v4983, %v5778
  %v5810 = vmul.f32 %v4984, %v5778
  %v5811 = vmul.f32 %v4985, %v5778
  %v5844 = vrot.slane %v5781, 7
  %v5845 = vsel %vm732, %v5844, %v5780
  %v5846 = vrot.slane %v5782, 6
  %v5847 = vsel %vm734, %v5846, %v5845
  %v5848 = vrot.slane %v5783, 5
  %v5849 = vsel %vm736, %v5848, %v5847
  %v5850 = vrot.slane %v5784, 4
  %v5851 = vsel %vm738, %v5850, %v5849
  %v5852 = vrot.slane %v5785, 3
  %v5853 = vsel %vm740, %v5852, %v5851
  %v5854 = vrot.slane %v5786, 2
  %v5855 = vsel %vm742, %v5854, %v5853
  %v5856 = vrot.slane %v5787, 1
  %v5857 = vsel %vm744, %v5856, %v5855
  %v5858 = vrot.slane %v5789, 7
  %v5859 = vsel %vm732, %v5858, %v5788
  %v5860 = vrot.slane %v5790, 6
  %v5861 = vsel %vm734, %v5860, %v5859
  %v5862 = vrot.slane %v5791, 5
  %v5863 = vsel %vm736, %v5862, %v5861
  %v5864 = vrot.slane %v5792, 4
  %v5865 = vsel %vm738, %v5864, %v5863
  %v5866 = vrot.slane %v5793, 3
  %v5867 = vsel %vm740, %v5866, %v5865
  %v5868 = vrot.slane %v5794, 2
  %v5869 = vsel %vm742, %v5868, %v5867
  %v5870 = vrot.slane %v5795, 1
  %v5871 = vsel %vm744, %v5870, %v5869
  %v5872 = vrot.slane %v5797, 7
  %v5873 = vsel %vm732, %v5872, %v5796
  %v5874 = vrot.slane %v5798, 6
  %v5875 = vsel %vm734, %v5874, %v5873
  %v5876 = vrot.slane %v5799, 5
  %v5877 = vsel %vm736, %v5876, %v5875
  %v5878 = vrot.slane %v5800, 4
  %v5879 = vsel %vm738, %v5878, %v5877
  %v5880 = vrot.slane %v5801, 3
  %v5881 = vsel %vm740, %v5880, %v5879
  %v5882 = vrot.slane %v5802, 2
  %v5883 = vsel %vm742, %v5882, %v5881
  %v5884 = vrot.slane %v5803, 1
  %v5885 = vsel %vm744, %v5884, %v5883
  %v5886 = vrot.slane %v5805, 7
  %v5887 = vsel %vm732, %v5886, %v5804
  %v5888 = vrot.slane %v5806, 6
  %v5889 = vsel %vm734, %v5888, %v5887
  %v5890 = vrot.slane %v5807, 5
  %v5891 = vsel %vm736, %v5890, %v5889
  %v5892 = vrot.slane %v5808, 4
  %v5893 = vsel %vm738, %v5892, %v5891
  %v5894 = vrot.slane %v5809, 3
  %v5895 = vsel %vm740, %v5894, %v5893
  %v5896 = vrot.slane %v5810, 2
  %v5897 = vsel %vm742, %v5896, %v5895
  %v5898 = vrot.slane %v5811, 1
  %v5899 = vsel %vm744, %v5898, %v5897
  %5900 = vrot.lane.b32.xlu0 %v5857, 126
  %v5901 = vpop.permute.xlu0 %5900
  %5902 = vrot.lane.b32.xlu0 %v5871, 126
  %v5903 = vpop.permute.xlu0 %5902
  %5904 = vrot.lane.b32.xlu0 %v5885, 126
  %v5905 = vpop.permute.xlu0 %5904
  %5906 = vrot.lane.b32.xlu0 %v5899, 126
  %v5907 = vpop.permute.xlu0 %5906
  %v5912 = vsel %vm4588, %v5901, 0.0
  %5913 = vadd.xlane.f32.xlu0 %v5912
  %v5914 = vpop.xlane.xlu0 %5913
  %v5915 = vsel %vm4588, %v5903, 0.0
  %5916 = vadd.xlane.f32.xlu0 %v5915
  %v5917 = vpop.xlane.xlu0 %5916
  %v5918 = vsel %vm4588, %v5905, 0.0
  %5919 = vadd.xlane.f32.xlu0 %v5918
  %v5920 = vpop.xlane.xlu0 %5919
  %v5921 = vsel %vm4588, %v5907, 0.0
  %5922 = vadd.xlane.f32.xlu0 %v5921
  %v5923 = vpop.xlane.xlu0 %5922
  %v5924 = vmul.f32 %v5767, %v5914
  %v5925 = vmul.f32 %v5768, %v5917
  %v5926 = vmul.f32 %v5769, %v5920
  %v5927 = vmul.f32 %v5770, %v5923
  %v5928 = vadd.f32 %v5924, %v441
  %v5929 = vadd.f32 %v5925, %v441
  %v5930 = vadd.f32 %v5926, %v441
  %v5931 = vadd.f32 %v5927, %v441
  %5936 = vrot.lane.b32.xlu0 %v5928, 126
  %v5937 = vpop.permute.xlu0 %5936
  %5938 = vrot.lane.b32.xlu0 %v5929, 126
  %v5939 = vpop.permute.xlu0 %5938
  %5940 = vrot.lane.b32.xlu0 %v5930, 126
  %v5941 = vpop.permute.xlu0 %5940
  %5942 = vrot.lane.b32.xlu0 %v5931, 126
  %v5943 = vpop.permute.xlu0 %5942
  %vm5948 = vcmask 7168
  %5949 = vst.msk [vmem:[%s3] sm:$0xff] %vm5948, %v5937
  %5950 = vst.msk [vmem:[%s3 + $0x8] sm:$0xff] %vm5948, %v5939
  %5951 = vst.msk [vmem:[%s3 + $0x10] sm:$0xff] %vm5948, %v5941
  %5952 = vst.msk [vmem:[%s3 + $0x18] sm:$0xff] %vm5948, %v5943
  %5985 = vset.pattern.permute.xlu0 0
  %5986 = vperm.xlu0 %5985, %v1509
  %v5987 = vpop.permute.xlu0 %5986
  %5988 = vset.pattern.permute.xlu0 0
  %5989 = vperm.xlu0 %5988, %v1511
  %v5990 = vpop.permute.xlu0 %5989
  %5991 = vset.pattern.permute.xlu0 0
  %5992 = vperm.xlu0 %5991, %v1513
  %v5993 = vpop.permute.xlu0 %5992
  %5994 = vset.pattern.permute.xlu0 0
  %5995 = vperm.xlu0 %5994, %v1515
  %v5996 = vpop.permute.xlu0 %5995
  %5997 = vset.pattern.permute.xlu0 0
  %5998 = vperm.xlu0 %5997, %v1517
  %v5999 = vpop.permute.xlu0 %5998
  %6000 = vset.pattern.permute.xlu0 0
  %6001 = vperm.xlu0 %6000, %v1519
  %v6002 = vpop.permute.xlu0 %6001
  %6003 = vset.pattern.permute.xlu0 0
  %6004 = vperm.xlu0 %6003, %v1521
  %v6005 = vpop.permute.xlu0 %6004
  %6006 = vset.pattern.permute.xlu0 0
  %6007 = vperm.xlu0 %6006, %v1523
  %v6008 = vpop.permute.xlu0 %6007
  %6009 = vset.pattern.permute.xlu0 0
  %6010 = vperm.xlu0 %6009, %v1525
  %v6011 = vpop.permute.xlu0 %6010
  %6012 = vset.pattern.permute.xlu0 0
  %6013 = vperm.xlu0 %6012, %v1527
  %v6014 = vpop.permute.xlu0 %6013
  %6015 = vset.pattern.permute.xlu0 0
  %6016 = vperm.xlu0 %6015, %v1529
  %v6017 = vpop.permute.xlu0 %6016
  %6018 = vset.pattern.permute.xlu0 0
  %6019 = vperm.xlu0 %6018, %v1531
  %v6020 = vpop.permute.xlu0 %6019
  %6021 = vset.pattern.permute.xlu0 0
  %6022 = vperm.xlu0 %6021, %v1533
  %v6023 = vpop.permute.xlu0 %6022
  %6024 = vset.pattern.permute.xlu0 0
  %6025 = vperm.xlu0 %6024, %v1535
  %v6026 = vpop.permute.xlu0 %6025
  %6027 = vset.pattern.permute.xlu0 0
  %6028 = vperm.xlu0 %6027, %v1537
  %v6029 = vpop.permute.xlu0 %6028
  %6030 = vset.pattern.permute.xlu0 0
  %6031 = vperm.xlu0 %6030, %v1539
  %v6032 = vpop.permute.xlu0 %6031
  %6033 = vset.pattern.permute.xlu0 0
  %6034 = vperm.xlu0 %6033, %v1541
  %v6035 = vpop.permute.xlu0 %6034
  %6036 = vset.pattern.permute.xlu0 0
  %6037 = vperm.xlu0 %6036, %v1543
  %v6038 = vpop.permute.xlu0 %6037
  %6039 = vset.pattern.permute.xlu0 0
  %6040 = vperm.xlu0 %6039, %v1545
  %v6041 = vpop.permute.xlu0 %6040
  %6042 = vset.pattern.permute.xlu0 0
  %6043 = vperm.xlu0 %6042, %v1547
  %v6044 = vpop.permute.xlu0 %6043
  %6045 = vset.pattern.permute.xlu0 0
  %6046 = vperm.xlu0 %6045, %v1549
  %v6047 = vpop.permute.xlu0 %6046
  %6048 = vset.pattern.permute.xlu0 0
  %6049 = vperm.xlu0 %6048, %v1551
  %v6050 = vpop.permute.xlu0 %6049
  %6051 = vset.pattern.permute.xlu0 0
  %6052 = vperm.xlu0 %6051, %v1553
  %v6053 = vpop.permute.xlu0 %6052
  %6054 = vset.pattern.permute.xlu0 0
  %6055 = vperm.xlu0 %6054, %v1555
  %v6056 = vpop.permute.xlu0 %6055
  %6057 = vset.pattern.permute.xlu0 0
  %6058 = vperm.xlu0 %6057, %v1557
  %v6059 = vpop.permute.xlu0 %6058
  %6060 = vset.pattern.permute.xlu0 0
  %6061 = vperm.xlu0 %6060, %v1559
  %v6062 = vpop.permute.xlu0 %6061
  %6063 = vset.pattern.permute.xlu0 0
  %6064 = vperm.xlu0 %6063, %v1561
  %v6065 = vpop.permute.xlu0 %6064
  %6066 = vset.pattern.permute.xlu0 0
  %6067 = vperm.xlu0 %6066, %v1563
  %v6068 = vpop.permute.xlu0 %6067
  %6069 = vset.pattern.permute.xlu0 0
  %6070 = vperm.xlu0 %6069, %v1565
  %v6071 = vpop.permute.xlu0 %6070
  %6072 = vset.pattern.permute.xlu0 0
  %6073 = vperm.xlu0 %6072, %v1567
  %v6074 = vpop.permute.xlu0 %6073
  %6075 = vset.pattern.permute.xlu0 0
  %6076 = vperm.xlu0 %6075, %v1569
  %v6077 = vpop.permute.xlu0 %6076
  %6078 = vset.pattern.permute.xlu0 0
  %6079 = vperm.xlu0 %6078, %v1571
  %v6080 = vpop.permute.xlu0 %6079
  %v6081 = vadd.s32 %v603, 4294967295
  %v6082 = vlaneseq
  %v6083 = vshrl.u32 %v6082, 7
  %v6084 = vsub.s32 %v6081, %v6083
  %v6085 = vrot.slane %v5987, %v6084
  %v6086 = vlaneseq
  %v6087 = vshrl.u32 %v6086, 7
  %v6088 = vsub.s32 %v6081, %v6087
  %v6089 = vrot.slane %v5990, %v6088
  %v6090 = vlaneseq
  %v6091 = vshrl.u32 %v6090, 7
  %v6092 = vsub.s32 %v6081, %v6091
  %v6093 = vrot.slane %v5993, %v6092
  %v6094 = vlaneseq
  %v6095 = vshrl.u32 %v6094, 7
  %v6096 = vsub.s32 %v6081, %v6095
  %v6097 = vrot.slane %v5996, %v6096
  %v6098 = vlaneseq
  %v6099 = vshrl.u32 %v6098, 7
  %v6100 = vsub.s32 %v6081, %v6099
  %v6101 = vrot.slane %v5999, %v6100
  %v6102 = vlaneseq
  %v6103 = vshrl.u32 %v6102, 7
  %v6104 = vsub.s32 %v6081, %v6103
  %v6105 = vrot.slane %v6002, %v6104
  %v6106 = vlaneseq
  %v6107 = vshrl.u32 %v6106, 7
  %v6108 = vsub.s32 %v6081, %v6107
  %v6109 = vrot.slane %v6005, %v6108
  %v6110 = vlaneseq
  %v6111 = vshrl.u32 %v6110, 7
  %v6112 = vsub.s32 %v6081, %v6111
  %v6113 = vrot.slane %v6008, %v6112
  %v6114 = vlaneseq
  %v6115 = vshrl.u32 %v6114, 7
  %v6116 = vsub.s32 %v6081, %v6115
  %v6117 = vrot.slane %v6011, %v6116
  %v6118 = vlaneseq
  %v6119 = vshrl.u32 %v6118, 7
  %v6120 = vsub.s32 %v6081, %v6119
  %v6121 = vrot.slane %v6014, %v6120
  %v6122 = vlaneseq
  %v6123 = vshrl.u32 %v6122, 7
  %v6124 = vsub.s32 %v6081, %v6123
  %v6125 = vrot.slane %v6017, %v6124
  %v6126 = vlaneseq
  %v6127 = vshrl.u32 %v6126, 7
  %v6128 = vsub.s32 %v6081, %v6127
  %v6129 = vrot.slane %v6020, %v6128
  %v6130 = vlaneseq
  %v6131 = vshrl.u32 %v6130, 7
  %v6132 = vsub.s32 %v6081, %v6131
  %v6133 = vrot.slane %v6023, %v6132
  %v6134 = vlaneseq
  %v6135 = vshrl.u32 %v6134, 7
  %v6136 = vsub.s32 %v6081, %v6135
  %v6137 = vrot.slane %v6026, %v6136
  %v6138 = vlaneseq
  %v6139 = vshrl.u32 %v6138, 7
  %v6140 = vsub.s32 %v6081, %v6139
  %v6141 = vrot.slane %v6029, %v6140
  %v6142 = vlaneseq
  %v6143 = vshrl.u32 %v6142, 7
  %v6144 = vsub.s32 %v6081, %v6143
  %v6145 = vrot.slane %v6032, %v6144
  %v6146 = vlaneseq
  %v6147 = vshrl.u32 %v6146, 7
  %v6148 = vsub.s32 %v6081, %v6147
  %v6149 = vrot.slane %v6035, %v6148
  %v6150 = vlaneseq
  %v6151 = vshrl.u32 %v6150, 7
  %v6152 = vsub.s32 %v6081, %v6151
  %v6153 = vrot.slane %v6038, %v6152
  %v6154 = vlaneseq
  %v6155 = vshrl.u32 %v6154, 7
  %v6156 = vsub.s32 %v6081, %v6155
  %v6157 = vrot.slane %v6041, %v6156
  %v6158 = vlaneseq
  %v6159 = vshrl.u32 %v6158, 7
  %v6160 = vsub.s32 %v6081, %v6159
  %v6161 = vrot.slane %v6044, %v6160
  %v6162 = vlaneseq
  %v6163 = vshrl.u32 %v6162, 7
  %v6164 = vsub.s32 %v6081, %v6163
  %v6165 = vrot.slane %v6047, %v6164
  %v6166 = vlaneseq
  %v6167 = vshrl.u32 %v6166, 7
  %v6168 = vsub.s32 %v6081, %v6167
  %v6169 = vrot.slane %v6050, %v6168
  %v6170 = vlaneseq
  %v6171 = vshrl.u32 %v6170, 7
  %v6172 = vsub.s32 %v6081, %v6171
  %v6173 = vrot.slane %v6053, %v6172
  %v6174 = vlaneseq
  %v6175 = vshrl.u32 %v6174, 7
  %v6176 = vsub.s32 %v6081, %v6175
  %v6177 = vrot.slane %v6056, %v6176
  %v6178 = vlaneseq
  %v6179 = vshrl.u32 %v6178, 7
  %v6180 = vsub.s32 %v6081, %v6179
  %v6181 = vrot.slane %v6059, %v6180
  %v6182 = vlaneseq
  %v6183 = vshrl.u32 %v6182, 7
  %v6184 = vsub.s32 %v6081, %v6183
  %v6185 = vrot.slane %v6062, %v6184
  %v6186 = vlaneseq
  %v6187 = vshrl.u32 %v6186, 7
  %v6188 = vsub.s32 %v6081, %v6187
  %v6189 = vrot.slane %v6065, %v6188
  %v6190 = vlaneseq
  %v6191 = vshrl.u32 %v6190, 7
  %v6192 = vsub.s32 %v6081, %v6191
  %v6193 = vrot.slane %v6068, %v6192
  %v6194 = vlaneseq
  %v6195 = vshrl.u32 %v6194, 7
  %v6196 = vsub.s32 %v6081, %v6195
  %v6197 = vrot.slane %v6071, %v6196
  %v6198 = vlaneseq
  %v6199 = vshrl.u32 %v6198, 7
  %v6200 = vsub.s32 %v6081, %v6199
  %v6201 = vrot.slane %v6074, %v6200
  %v6202 = vlaneseq
  %v6203 = vshrl.u32 %v6202, 7
  %v6204 = vsub.s32 %v6081, %v6203
  %v6205 = vrot.slane %v6077, %v6204
  %v6206 = vlaneseq
  %v6207 = vshrl.u32 %v6206, 7
  %v6208 = vsub.s32 %v6081, %v6207
  %v6209 = vrot.slane %v6080, %v6208
  %v6210 = vsel %vm732, %v6089, %v6085
  %v6211 = vsel %vm734, %v6093, %v6210
  %v6212 = vsel %vm736, %v6097, %v6211
  %v6213 = vsel %vm738, %v6101, %v6212
  %v6214 = vsel %vm740, %v6105, %v6213
  %v6215 = vsel %vm742, %v6109, %v6214
  %v6216 = vsel %vm744, %v6113, %v6215
  %v6217 = vsel %vm732, %v6121, %v6117
  %v6218 = vsel %vm734, %v6125, %v6217
  %v6219 = vsel %vm736, %v6129, %v6218
  %v6220 = vsel %vm738, %v6133, %v6219
  %v6221 = vsel %vm740, %v6137, %v6220
  %v6222 = vsel %vm742, %v6141, %v6221
  %v6223 = vsel %vm744, %v6145, %v6222
  %v6224 = vsel %vm732, %v6153, %v6149
  %v6225 = vsel %vm734, %v6157, %v6224
  %v6226 = vsel %vm736, %v6161, %v6225
  %v6227 = vsel %vm738, %v6165, %v6226
  %v6228 = vsel %vm740, %v6169, %v6227
  %v6229 = vsel %vm742, %v6173, %v6228
  %v6230 = vsel %vm744, %v6177, %v6229
  %v6231 = vsel %vm732, %v6185, %v6181
  %v6232 = vsel %vm734, %v6189, %v6231
  %v6233 = vsel %vm736, %v6193, %v6232
  %v6234 = vsel %vm738, %v6197, %v6233
  %v6235 = vsel %vm740, %v6201, %v6234
  %v6236 = vsel %vm742, %v6205, %v6235
  %v6237 = vsel %vm744, %v6209, %v6236
  %vm6242 = vcmask 72712
  %6243 = vst.msk [vmem:[%s3] sm:$0xff] %vm6242, %v6216
  %6244 = vst.msk [vmem:[%s3 + $0x8] sm:$0xff] %vm6242, %v6223
  %6245 = vst.msk [vmem:[%s3 + $0x10] sm:$0xff] %vm6242, %v6230
  %6246 = vst.msk [vmem:[%s3 + $0x18] sm:$0xff] %vm6242, %v6237
  // Predicated region
  $region14: #{tpu_custom_call.1} parent=0 // pred_check
    _
  $region15: #{tpu_custom_call.1} parent=0 // pred_check_branch
    %6248 = sbr.rel (0) target = $region17
  $region16: #{tpu_custom_call.1} parent=0 // pred_region
    _
  $region17: #{tpu_custom_call.1} parent=0 // pred_fallthru
    _
  // Predicated region
  $region18: #{tpu_custom_call.1} parent=0 // pred_check
    _
  $region19: #{tpu_custom_call.1} parent=0 // pred_check_branch
    %6250 = sbr.rel (0) target = $region21
  $region20: #{tpu_custom_call.1} parent=0 // pred_region
    _
  $region21: #{tpu_custom_call.1} parent=0 // pred_fallthru
    _

</llo_original>
